<compile_context>
chip_gen: v7x
topology: tpu7x:2x2x1
jax: 0.10.0
libtpu: 0.0.40
codegen_flags: <defaults>
</compile_context>

<pallas_src>
import functools

import jax
import jax.numpy as jnp
from jax.experimental import pallas as pl
from jax.experimental.pallas import tpu as pltpu


def _round_up(x, m):
    return (x + m - 1) // m * m


# ----------------------------------------------------------------------------
# Pallas conv-as-GEMM kernel
# ----------------------------------------------------------------------------
def _conv_gemm_kernel(w_ref, p_ref, b_ref, o_ref, *, relu):
    # w_ref: (OC, Kp)    bf16  resident flattened conv weight
    # p_ref: (Kp, tm)    bf16  im2col patches tile (K x M layout)
    # b_ref: (OC, 1)     f32   bias
    # o_ref: (OC, tm)    bf16  lane-dense output tile (M on the lane axis)
    acc = jnp.dot(w_ref[...], p_ref[...], preferred_element_type=jnp.float32)
    acc = acc + b_ref[...]
    if relu:
        acc = jnp.maximum(acc, 0.0)
    o_ref[...] = acc.astype(o_ref.dtype)


def _im2col_T(x_cbhw, KH, KW, stride, k_pad):
    """im2col directly in transposed [Kp, M] layout (K pad folded in).

    x_cbhw: [C, B, H, W].  Returns (patches_T [K + k_pad, M], OH, OW) with K
    ordered (kh, kw, c) and M ordered (b, oh, ow).  The single concatenate is
    the only full-size write of the inflated array.
    """
    C, B, H, W = x_cbhw.shape
    OH = (H - KH) // stride + 1
    OW = (W - KW) // stride + 1
    rows = []
    for kh in range(KH):
        for kw in range(KW):
            sl = x_cbhw[:, :,
                        kh:kh + stride * (OH - 1) + 1:stride,
                        kw:kw + stride * (OW - 1) + 1:stride]   # [C, B, OH, OW]
            rows.append(sl.reshape(C, B * OH * OW))
    if k_pad:
        rows.append(jnp.zeros((k_pad, B * OH * OW), x_cbhw.dtype))
    return jnp.concatenate(rows, axis=0), OH, OW


def conv2d_pallas(x_cbhw, weight, bias, *, stride=1, relu=True, tm=1024):
    """Conv2d (VALID padding, square kernel) + optional ReLU via Pallas GEMM.

    x_cbhw: [C, B, H, W] channel-first input (any float dtype).
    weight: [OC, C, KH, KW] (PyTorch Conv2d layout), bias: [OC].
    Returns out: [OC, B, OH, OW] in bf16 (channel-first, ready for next conv).
    """
    C, B, H, W = x_cbhw.shape
    OC, _, KH, KW = weight.shape
    K = C * KH * KW
    Kp = _round_up(K, 128)

    # bf16 before im2col: the cast touches x once, not the inflated patches.
    x_bf = x_cbhw.astype(jnp.bfloat16)
    patches_T, OH, OW = _im2col_T(x_bf, KH, KW, stride, Kp - K)      # [Kp, M]
    M = B * OH * OW

    # Balanced M tiling: even tile count (>= 2 once M > 128) so both v7x
    # TensorCores get real work; no dead padding tile; the final tile may
    # overhang M and is handled by Pallas' masked boundary reads/writes.
    ntiles = pl.cdiv(M, tm)
    if M > 128:
        ntiles = max(2, ntiles + (ntiles % 2))
    tm_eff = _round_up(pl.cdiv(M, ntiles), 128)
    ntiles = pl.cdiv(M, tm_eff)

    w2 = jnp.transpose(weight, (0, 2, 3, 1)).reshape(OC, K)          # (kh, kw, c)
    w_pad = jnp.pad(w2.astype(jnp.bfloat16), ((0, 0), (0, Kp - K)))  # tiny array
    b2 = bias.astype(jnp.float32).reshape(OC, 1)

    # Streamed patches operand: deeper buffering once the grid is long enough
    # to benefit (the per-tile MXU work is tiny vs. the HBM read).
    if ntiles >= 3:
        patch_spec = pl.BlockSpec((Kp, tm_eff), lambda i: (0, i),
                                  pipeline_mode=pl.Buffered(3))
    else:
        patch_spec = pl.BlockSpec((Kp, tm_eff), lambda i: (0, i))

    # Explicit VMEM budget: 3x-buffered patches tile + resident weight/bias +
    # double-buffered output tile, clamped under v7x's 64 MiB physical VMEM.
    vmem_bytes = (3 * Kp * tm_eff * 2 + 2 * OC * Kp * 2
                  + 4 * OC * tm_eff * 2 + (4 << 20))
    vmem_limit = int(max(32 << 20, min(_round_up(vmem_bytes, 1 << 20), 48 << 20)))

    cost = pl.CostEstimate(
        flops=2 * OC * Kp * M,
        transcendentals=0,
        bytes_accessed=Kp * M * 2 + OC * Kp * 2 + OC * M * 2 + OC * 4)

    out = pl.pallas_call(
        functools.partial(_conv_gemm_kernel, relu=relu),
        out_shape=jax.ShapeDtypeStruct((OC, M), jnp.bfloat16),
        grid_spec=pltpu.PrefetchScalarGridSpec(
            num_scalar_prefetch=0,
            grid=(ntiles,),
            in_specs=[
                pl.BlockSpec((OC, Kp), lambda i: (0, 0)),    # resident weight
                patch_spec,                                   # streamed patches
                pl.BlockSpec((OC, 1), lambda i: (0, 0)),      # resident bias
            ],
            out_specs=pl.BlockSpec((OC, tm_eff), lambda i: (0, i)),
        ),
        compiler_params=pltpu.CompilerParams(
            dimension_semantics=("parallel",),
            vmem_limit_bytes=vmem_limit),
        cost_estimate=cost,
    )(w_pad, patches_T, b2)

    return out.reshape(OC, B, OH, OW)


# ----------------------------------------------------------------------------
# CapsNet forward (glue in plain JAX, convs through the Pallas kernel)
# ----------------------------------------------------------------------------
def _squash(u, axis):
    sq = jnp.sum(u * u, axis=axis, keepdims=True)
    return sq * u / ((1.0 + sq) * (jnp.sqrt(sq) + 1e-8))


def capsnet_forward(params, x_nchw):
    B = x_nchw.shape[0]

    # --- ConvLayer: Conv2d(3 -> 32, k=9, s=1) + ReLU  (Pallas GEMM) ---------
    x_cbhw = jnp.transpose(x_nchw, (1, 0, 2, 3))                 # [C, B, H, W]
    conv = conv2d_pallas(x_cbhw, params["conv_w"], params["conv_b"],
                         stride=1, relu=True)                    # [32, B, H1, W1] bf16

    # --- PrimaryCaps: 8 x Conv2d(32 -> 8, k=9, s=2) fused -> 64 channels ----
    prim = conv2d_pallas(conv, params["prim_w"], params["prim_b"],
                         stride=2, relu=False)                   # [64, B, H2, W2] bf16
    prim = prim.astype(jnp.float32)
    _, _, H2, W2 = prim.shape
    u = prim.reshape(8, 8, B, H2, W2)                            # [caps, ch, B, h, w]
    u = jnp.transpose(u, (2, 0, 1, 3, 4)).reshape(B, 8, 8 * H2 * W2)
    u = _squash(u, axis=2)                                       # [B, 8, D]

    # --- DigitCaps with 3 routing iterations (plain JAX glue) ---------------
    x_r = jnp.transpose(u, (0, 2, 1))                            # [B, R, 8]
    R = x_r.shape[1]
    W = params["digit_W"][0]                                     # [R, 10, 16, 8]
    u_hat = jnp.einsum("rjoc,brc->brjo", W, x_r)                 # [B, R, 10, 16]

    b_ij = jnp.zeros((1, R, 10, 1), jnp.float32)
    v_j = None
    for it in range(3):
        c_ij = jax.nn.softmax(b_ij, axis=2)                      # [1, R, 10, 1]
        s_j = jnp.sum(c_ij * u_hat, axis=1, keepdims=True)       # [B, 1, 10, 16]
        v_j = _squash(s_j, axis=3)
        if it < 2:
            a_ij = jnp.sum(u_hat * v_j, axis=3, keepdims=True)   # [B, R, 10, 1]
            b_ij = b_ij + jnp.mean(a_ij, axis=0, keepdims=True)  # batch-mean (as in ref)
    output = v_j[:, 0, :, :, None]                               # [B, 10, 16, 1]

    # --- 10 independent classifier heads: Linear(16,100)+Tanh+Linear(100,1)+Sigmoid
    cls = []
    for i in range(10):
        h = jnp.tanh(output[:, i, :, 0] @ params["cls_w1"][i] + params["cls_b1"][i])
        cls.append(jax.nn.sigmoid(h @ params["cls_w2"][i] + params["cls_b2"][i]))
    return (output, *cls)


# ----------------------------------------------------------------------------
# Test
# ----------------------------------------------------------------------------
if __name__ == "__main__":
    key = jax.random.PRNGKey(0)
    ks = jax.random.split(key, 12)

    # Small shapes consistent with the module: 3 input channels, two 9x9 convs.
    B, C, H, W = 2, 3, 33, 33
    H1, W1 = H - 8, W - 8                            # ConvLayer output spatial
    H2, W2 = (H1 - 9) // 2 + 1, (W1 - 9) // 2 + 1    # PrimaryCaps output spatial
    R = 8 * H2 * W2                                  # num_routes

    def uinit(k, shape, fan_in):
        bound = 1.0 / (fan_in ** 0.5)
        return jax.random.uniform(k, shape, jnp.float32, -bound, bound)

    params = {
        "conv_w": uinit(ks[1], (32, C, 9, 9), C * 81),
        "conv_b": uinit(ks[2], (32,), C * 81),
        "prim_w": uinit(ks[3], (64, 32, 9, 9), 32 * 81),   # 8 capsules x 8 ch fused
        "prim_b": uinit(ks[4], (64,), 32 * 81),
        "digit_W": jax.random.normal(ks[5], (1, R, 10, 16, 8), jnp.float32),
        "cls_w1": uinit(ks[6], (10, 16, 100), 16),
        "cls_b1": uinit(ks[7], (10, 100), 16),
        "cls_w2": uinit(ks[8], (10, 100, 1), 100),
        "cls_b2": uinit(ks[9], (10, 1), 100),
    }
    x = jax.random.normal(ks[10], (B, C, H, W), jnp.float32)

    fwd = jax.jit(capsnet_forward)
    outs = jax.block_until_ready(fwd(params, x))
    output, *cls = outs

    assert output.shape == (B, 10, 16, 1)
    assert len(cls) == 10 and all(c.shape == (B, 1) for c in cls)
    assert bool(jnp.all(jnp.isfinite(output)))

    # Validate the Pallas conv kernels against XLA's conv (bf16 operands and
    # bf16 output -> relaxed tolerance; accumulation is f32 inside the kernel).
    x_cbhw = jnp.transpose(x, (1, 0, 2, 3))
    conv1 = conv2d_pallas(x_cbhw, params["conv_w"], params["conv_b"],
                          stride=1, relu=True)
    ref1 = jax.lax.conv_general_dilated(
        x, params["conv_w"], (1, 1), "VALID",
        dimension_numbers=("NCHW", "OIHW", "NCHW"))
    ref1 = jnp.maximum(ref1 + params["conv_b"].reshape(1, -1, 1, 1), 0.0)
    assert jnp.allclose(jnp.transpose(conv1, (1, 0, 2, 3)).astype(jnp.float32),
                        ref1, rtol=5e-2, atol=5e-2), "conv1 mismatch vs reference"

    conv2 = conv2d_pallas(conv1, params["prim_w"], params["prim_b"],
                          stride=2, relu=False)
    ref2 = jax.lax.conv_general_dilated(
        jnp.transpose(conv1, (1, 0, 2, 3)).astype(jnp.float32),
        params["prim_w"], (2, 2), "VALID",
        dimension_numbers=("NCHW", "OIHW", "NCHW"))
    ref2 = ref2 + params["prim_b"].reshape(1, -1, 1, 1)
    assert jnp.allclose(jnp.transpose(conv2, (1, 0, 2, 3)).astype(jnp.float32),
                        ref2, rtol=5e-2, atol=5e-2), "primary conv mismatch vs reference"

    print("KERNEL_OK")
</pallas_src>

<mosaic_0001>
module attributes {stable_mosaic.version = 11 : i64} {
  func.func @_conv_gemm_kernel(%arg0: i32, %arg1: memref<32x256xbf16, #tpu.memory_space<vmem>>, %arg2: memref<256x640xbf16, #tpu.memory_space<vmem>>, %arg3: memref<32x1xf32, #tpu.memory_space<vmem>>, %arg4: memref<32x640xbf16, #tpu.memory_space<vmem>>) attributes {dimension_semantics = [#tpu.dimension_semantics<parallel>], iteration_bounds = array<i64: 2>, scalar_prefetch = 0 : i64, scratch_operands = 0 : i64, tpu.core_type = #tpu.core_type<tc>, window_params = [{pipeline_mode = #tpu.pipeline_mode<synchronous>, transform_indices = @transform_0, window_bounds = array<i64: 32, 256>}, {transform_indices = @transform_1, window_bounds = array<i64: 256, 640>}, {pipeline_mode = #tpu.pipeline_mode<synchronous>, transform_indices = @transform_2, window_bounds = array<i64: 32, 1>}, {transform_indices = @transform_3, window_bounds = array<i64: 32, 640>}]} {
    %c0 = arith.constant 0 : index
    %c0_0 = arith.constant 0 : index
    %0 = vector.load %arg1[%c0, %c0_0] : memref<32x256xbf16, #tpu.memory_space<vmem>>, vector<32x256xbf16>
    %c0_1 = arith.constant 0 : index
    %c0_2 = arith.constant 0 : index
    %1 = vector.load %arg2[%c0_1, %c0_2] : memref<256x640xbf16, #tpu.memory_space<vmem>>, vector<256x640xbf16>
    %cst = arith.constant dense<0.000000e+00> : vector<32x640xf32>
    %2 = tpu.matmul %0, %1, %cst {dimension_numbers = #tpu.dot_dimension_numbers<[1], [0], [0], [1], [0, 0, 1, 1], [], []>} : vector<32x256xbf16>, vector<256x640xbf16>, vector<32x640xf32> -> vector<32x640xf32>
    %c0_3 = arith.constant 0 : index
    %c0_4 = arith.constant 0 : index
    %3 = vector.load %arg3[%c0_3, %c0_4] : memref<32x1xf32, #tpu.memory_space<vmem>>, vector<32x1xf32>
    %4 = vector.broadcast %3 : vector<32x1xf32> to vector<32x640xf32>
    %5 = arith.addf %2, %4 : vector<32x640xf32>
    %cst_5 = arith.constant 0.000000e+00 : f32
    %6 = vector.broadcast %cst_5 : f32 to vector<32x640xf32>
    %7 = arith.maximumf %5, %6 : vector<32x640xf32>
    %8 = arith.truncf %7 : vector<32x640xf32> to vector<32x640xbf16>
    %c0_6 = arith.constant 0 : index
    %c0_7 = arith.constant 0 : index
    %9 = vector.load %arg4[%c0_6, %c0_7] : memref<32x640xbf16, #tpu.memory_space<vmem>>, vector<32x640xbf16>
    tpu.vector_store %arg4[%c0_6, %c0_7], %8 {strides = array<i32>} : memref<32x640xbf16, #tpu.memory_space<vmem>>, vector<32x640xbf16>,
    return
  }
  func.func @transform_0(%arg0: i32) -> (i32, i32) {
    %c0_i32 = arith.constant 0 : i32
    %c0_i32_0 = arith.constant 0 : i32
    %c0_i32_1 = arith.constant 0 : i32
    return %c0_i32, %c0_i32_0 : i32, i32
  }
  func.func @transform_1(%arg0: i32) -> (i32, i32) {
    %c0_i32 = arith.constant 0 : i32
    %c0_i32_0 = arith.constant 0 : i32
    return %c0_i32, %arg0 : i32, i32
  }
  func.func @transform_2(%arg0: i32) -> (i32, i32) {
    %c0_i32 = arith.constant 0 : i32
    %c0_i32_0 = arith.constant 0 : i32
    %c0_i32_1 = arith.constant 0 : i32
    return %c0_i32, %c0_i32_0 : i32, i32
  }
  func.func @transform_3(%arg0: i32) -> (i32, i32) {
    %c0_i32 = arith.constant 0 : i32
    %c0_i32_0 = arith.constant 0 : i32
    return %c0_i32, %arg0 : i32, i32
  }
}

module attributes {stable_mosaic.version = 11 : i64} {
  func.func @_conv_gemm_kernel(%arg0: i32, %arg1: memref<64x2688xbf16, #tpu.memory_space<vmem>>, %arg2: memref<2688x128xbf16, #tpu.memory_space<vmem>>, %arg3: memref<64x1xf32, #tpu.memory_space<vmem>>, %arg4: memref<64x128xbf16, #tpu.memory_space<vmem>>) attributes {dimension_semantics = [#tpu.dimension_semantics<parallel>], iteration_bounds = array<i64: 2>, scalar_prefetch = 0 : i64, scratch_operands = 0 : i64, tpu.core_type = #tpu.core_type<tc>, window_params = [{pipeline_mode = #tpu.pipeline_mode<synchronous>, transform_indices = @transform_0, window_bounds = array<i64: 64, 2688>}, {transform_indices = @transform_1, window_bounds = array<i64: 2688, 128>}, {pipeline_mode = #tpu.pipeline_mode<synchronous>, transform_indices = @transform_2, window_bounds = array<i64: 64, 1>}, {transform_indices = @transform_3, window_bounds = array<i64: 64, 128>}]} {
    %c0 = arith.constant 0 : index
    %c0_0 = arith.constant 0 : index
    %0 = vector.load %arg1[%c0, %c0_0] : memref<64x2688xbf16, #tpu.memory_space<vmem>>, vector<64x2688xbf16>
    %c0_1 = arith.constant 0 : index
    %c0_2 = arith.constant 0 : index
    %1 = vector.load %arg2[%c0_1, %c0_2] : memref<2688x128xbf16, #tpu.memory_space<vmem>>, vector<2688x128xbf16>
    %cst = arith.constant dense<0.000000e+00> : vector<64x128xf32>
    %2 = tpu.matmul %0, %1, %cst {dimension_numbers = #tpu.dot_dimension_numbers<[1], [0], [0], [1], [0, 0, 1, 1], [], []>} : vector<64x2688xbf16>, vector<2688x128xbf16>, vector<64x128xf32> -> vector<64x128xf32>
    %c0_3 = arith.constant 0 : index
    %c0_4 = arith.constant 0 : index
    %3 = vector.load %arg3[%c0_3, %c0_4] : memref<64x1xf32, #tpu.memory_space<vmem>>, vector<64x1xf32>
    %4 = vector.broadcast %3 : vector<64x1xf32> to vector<64x128xf32>
    %5 = arith.addf %2, %4 : vector<64x128xf32>
    %6 = arith.truncf %5 : vector<64x128xf32> to vector<64x128xbf16>
    %c0_5 = arith.constant 0 : index
    %c0_6 = arith.constant 0 : index
    %7 = vector.load %arg4[%c0_5, %c0_6] : memref<64x128xbf16, #tpu.memory_space<vmem>>, vector<64x128xbf16>
    tpu.vector_store %arg4[%c0_5, %c0_6], %6 {strides = array<i32>} : memref<64x128xbf16, #tpu.memory_space<vmem>>, vector<64x128xbf16>,
    return
  }
  func.func @transform_0(%arg0: i32) -> (i32, i32) {
    %c0_i32 = arith.constant 0 : i32
    %c0_i32_0 = arith.constant 0 : i32
    %c0_i32_1 = arith.constant 0 : i32
    return %c0_i32, %c0_i32_0 : i32, i32
  }
  func.func @transform_1(%arg0: i32) -> (i32, i32) {
    %c0_i32 = arith.constant 0 : i32
    %c0_i32_0 = arith.constant 0 : i32
    return %c0_i32, %arg0 : i32, i32
  }
  func.func @transform_2(%arg0: i32) -> (i32, i32) {
    %c0_i32 = arith.constant 0 : i32
    %c0_i32_0 = arith.constant 0 : i32
    %c0_i32_1 = arith.constant 0 : i32
    return %c0_i32, %c0_i32_0 : i32, i32
  }
  func.func @transform_3(%arg0: i32) -> (i32, i32) {
    %c0_i32 = arith.constant 0 : i32
    %c0_i32_0 = arith.constant 0 : i32
    return %c0_i32, %arg0 : i32, i32
  }
}

</mosaic_0001>

<llo_original>
// kernel: capsnet_forward.2
$region0: #{capsnet_forward.2}
  #allocation0 [shape = 'u32[]', space=smem, size = 0x4, offset = 0x4, fixed_abs, tag = 'smem constant byte address 0x4 - core index']
  #allocation1 [shape = 'u32[144,128]{1,0:T(1,128)}', space=vmem, size = 0x12000, scoped, tag = 'internal scratch']
  %s0 = inlined_call_operand.vmem [shape: bf16[32,256], index: 0, kind: input, shape index: {}]
  %s1 = inlined_call_operand.vmem [shape: bf16[256,1250], index: 1, kind: input, shape index: {}]
  %s2 = inlined_call_operand.vmem [shape: f32[32,1], index: 2, kind: input, shape index: {}]
  %s3 = inlined_call_operand.vmem [shape: bf16[32,1250], index: 3, kind: output, shape index: {}]
  %s4 = sld [smem:[#allocation0]]
  $region93: #{capsnet_forward.2} parent=0
    _
  %s6 = ssub.s32 1, %s4
  %s7 = scalar_select 0, %s6, %s4
  $region1: #{capsnet_forward.2} parent=0
    #allocation2 [shape = 'u8[655360]{0}', space=vmem, size = 0xa0000, scoped, tag = 'input window, operand 1']
    #allocation3 [shape = 'u8[81920]{0}', space=vmem, size = 0x14000, scoped, tag = 'output window, operand 0']
    loop: start=0, step=1, limit=4
    $region2: #{capsnet_forward.2} parent=1 // loop_pre_header
      _
    $region3: #{capsnet_forward.2} parent=1 // loop_header
      %s9 = sphi 0, %s13
      %p10 = scmp.ge.s32.totalorder %s9, 4
      %s17 = sphi 0, %s17
      %s19 = sphi 0, %s17
      %s20 = sphi 0, %s19
      %s34 = sphi 0, %s20
      %s40 = sphi 0, %s42
      %s43 = sphi 0, %s40
      %s44 = sphi 0, %s43
      %s60 = sphi 0, %s44
      %s64 = sphi 0, %s64
      %s66 = sphi 0, %s64
      %s67 = sphi 0, %s66
      %s81 = sphi 0, %s67
      %s87 = sphi 0, %s89
      %s90 = sphi 0, %s87
      %s91 = sphi 0, %s90
      %s107 = sphi 0, %s91
    $region4: #{capsnet_forward.2} parent=1 // loop_header_branch
      %12 = sbr.rel (%p10) target = $region8
    $region5: #{capsnet_forward.2} parent=1 // loop_body
      %s14 = ssub.s32 %s9, 1
      %s15 = ssub.s32 %s9, 2
      %s16 = sadd.s32 %s9, 1
      %s18 = sadd.s32 %s17, 1
      %p21 = scmp.eq.s32.totalorder %s9, 1
      %p22 = scmp.ne.s32.totalorder %s17, %s19
      %p23 = scmp.eq.s32.totalorder %s9, 0
      %p24 = por %p22, %p23
      %p25 = scmp.ne.s32.totalorder %s17, %s19
      %p26 = scmp.eq.s32.totalorder %s14, 1
      %p27 = por %p25, %p26
      %p28 = scmp.ne.s32.totalorder %s19, %s20
      %p29 = scmp.eq.s32.totalorder %s14, 0
      %p30 = por %p28, %p29
      %p31 = scmp.ne.s32.totalorder %s19, %s20
      %p32 = scmp.eq.s32.totalorder %s15, 1
      %p33 = por %p31, %p32
      %p35 = scmp.ne.s32.totalorder %s20, %s34
      %p36 = scmp.eq.s32.totalorder %s15, 0
      %p37 = por %p35, %p36
      %s38 = ssub.s32 %s9, %s16
      %p39 = scmp.eq.s32.totalorder %s38, 0
      %s41 = sadd.s32 %s40, 1
      %s42 = scalar_select %p39, %s40, %s41
      %p45 = pneg %p39
      %p46 = scmp.eq.s32.totalorder %s9, 1
      %p47 = por %p45, %p46
      %p48 = scmp.ne.s32.totalorder %s40, %s43
      %p49 = scmp.eq.s32.totalorder %s9, 0
      %p50 = por %p48, %p49
      %p51 = scmp.ne.s32.totalorder %s40, %s43
      %p52 = scmp.eq.s32.totalorder %s14, 1
      %p53 = por %p51, %p52
      %p54 = scmp.ne.s32.totalorder %s43, %s44
      %p55 = scmp.eq.s32.totalorder %s14, 0
      %p56 = por %p54, %p55
      %p57 = scmp.ne.s32.totalorder %s43, %s44
      %p58 = scmp.eq.s32.totalorder %s15, 1
      %p59 = por %p57, %p58
      %p61 = scmp.ne.s32.totalorder %s44, %s60
      %p62 = scmp.eq.s32.totalorder %s15, 0
      %p63 = por %p61, %p62
      %s65 = sadd.s32 %s64, 1
      %p68 = scmp.eq.s32.totalorder %s9, 1
      %p69 = scmp.ne.s32.totalorder %s64, %s66
      %p70 = scmp.eq.s32.totalorder %s9, 0
      %p71 = por %p69, %p70
      %p72 = scmp.ne.s32.totalorder %s64, %s66
      %p73 = scmp.eq.s32.totalorder %s14, 1
      %p74 = por %p72, %p73
      %p75 = scmp.ne.s32.totalorder %s66, %s67
      %p76 = scmp.eq.s32.totalorder %s14, 0
      %p77 = por %p75, %p76
      %p78 = scmp.ne.s32.totalorder %s66, %s67
      %p79 = scmp.eq.s32.totalorder %s15, 1
      %p80 = por %p78, %p79
      %p82 = scmp.ne.s32.totalorder %s67, %s81
      %p83 = scmp.eq.s32.totalorder %s15, 0
      %p84 = por %p82, %p83
      %s85 = ssub.s32 %s9, %s16
      %p86 = scmp.eq.s32.totalorder %s85, 0
      %s88 = sadd.s32 %s87, 1
      %s89 = scalar_select %p86, %s87, %s88
      %p92 = pneg %p86
      %p93 = scmp.eq.s32.totalorder %s9, 1
      %p94 = por %p92, %p93
      %p95 = scmp.ne.s32.totalorder %s87, %s90
      %p96 = scmp.eq.s32.totalorder %s9, 0
      %p97 = por %p95, %p96
      %p98 = scmp.ne.s32.totalorder %s87, %s90
      %p99 = scmp.eq.s32.totalorder %s14, 1
      %p100 = por %p98, %p99
      %p101 = scmp.ne.s32.totalorder %s90, %s91
      %p102 = scmp.eq.s32.totalorder %s14, 0
      %p103 = por %p101, %p102
      %p104 = scmp.ne.s32.totalorder %s90, %s91
      %p105 = scmp.eq.s32.totalorder %s15, 1
      %p106 = por %p104, %p105
      %p108 = scmp.ne.s32.totalorder %s91, %s107
      %p109 = scmp.eq.s32.totalorder %s15, 0
      %p110 = por %p108, %p109
      %p111 = scmp.le.s32.totalorder 1, %s9
      %p112 = scmp.lt.s32.totalorder %s9, 3
      %p113 = pnand %p111, %p112
      %p114 = pneg %p113
      // Predicated region
      $region9: #{capsnet_forward.2} parent=5 // pred_check
        _
      $region10: #{capsnet_forward.2} parent=5 // pred_check_branch
        %116 = sbr.rel (%p113) target = $region12
      $region11: #{capsnet_forward.2} parent=5 // pred_region
        %s117 = ssub.s32 %s9, 1
        // Predicated region
        $region13: #{capsnet_forward.2} parent=11 // pred_check
          %p118 = pneg %p30
        $region14: #{capsnet_forward.2} parent=11 // pred_check_branch
          %120 = sbr.rel (%p118) target = $region16
        $region15: #{capsnet_forward.2} parent=11 // pred_region
          _
        $region16: #{capsnet_forward.2} parent=11 // pred_fallthru
          _
        // Predicated region
        $region17: #{capsnet_forward.2} parent=11 // pred_check
          %p121 = pneg %p77
        $region18: #{capsnet_forward.2} parent=11 // pred_check_branch
          %123 = sbr.rel (%p121) target = $region20
        $region19: #{capsnet_forward.2} parent=11 // pred_region
          _
        $region20: #{capsnet_forward.2} parent=11 // pred_fallthru
          _
      $region12: #{capsnet_forward.2} parent=5 // pred_fallthru
        _
      %p124 = scmp.lt.s32.totalorder %s9, 2
      // Predicated region
      $region21: #{capsnet_forward.2} parent=5 // pred_check
        %p125 = pneg %p124
      $region22: #{capsnet_forward.2} parent=5 // pred_check_branch
        %127 = sbr.rel (%p125) target = $region24
      $region23: #{capsnet_forward.2} parent=5 // pred_region
        // Predicated region
        $region25: #{capsnet_forward.2} parent=23 // pred_check
          %p128 = pneg %p50
        $region26: #{capsnet_forward.2} parent=23 // pred_check_branch
          %130 = sbr.rel (%p128) target = $region28
        $region27: #{capsnet_forward.2} parent=23 // pred_region
          %s131 = sand.u32 %s40, 1
          %s132 = sand.u32 %s40, 1
          %s133 = smul.addr %s132, 640
          %s134 = scalar_lea.vmem [#allocation2], %s133
          %s135 = smul.u32 5, %s9
          %s136 = smul.addr %s135, 4
          %s137 = scalar_lea.vmem %s1, %s136
          // Predicated region
          $region29: #{capsnet_forward.2} parent=27 // pred_check
            _
          $region30: #{capsnet_forward.2} parent=27 // pred_check_branch
            %139 = sbr.rel (0) target = $region32
          $region31: #{capsnet_forward.2} parent=27 // pred_region
            // Predicated region
            $region33: #{capsnet_forward.2} parent=31 // pred_check
              _
            $region34: #{capsnet_forward.2} parent=31 // pred_check_branch
              %141 = sbr.rel (0) target = $region36
            $region35: #{capsnet_forward.2} parent=31 // pred_region
              %s142 = scalar_lea.vmem %s137, 16
              %s143 = scalar_lea.vmem %s134, 16 [#allocation2]
              loop: start=0, step=1, limit=1
              $region37: #{capsnet_forward.2} parent=35 // loop_pre_header
                _
              $region38: #{capsnet_forward.2} parent=35 // loop_header
                %s145 = sphi 0, %s149
                %p146 = scmp.ge.s32.totalorder %s145, 1
                %s150 = sphi %s137, %s137
                %s151 = sphi %s134, %s134
              $region39: #{capsnet_forward.2} parent=35 // loop_header_branch
                %148 = sbr.rel (%p146) target = $region43
              $region40: #{capsnet_forward.2} parent=35 // loop_body
                %v152 = vld [vmem:[%s150] sm:$0xff]
                %153 = vst [vmem:[%s151] sm:$0xff] %v152
                %v154 = vld [vmem:[%s150 + $0x8] sm:$0xff]
                %155 = vst [vmem:[%s151 + $0x8] sm:$0xff] %v154
                %v156 = vld [vmem:[%s150 + $0x28] sm:$0xff]
                %157 = vst [vmem:[%s151 + $0x14] sm:$0xff] %v156
                %v158 = vld [vmem:[%s150 + $0x30] sm:$0xff]
                %159 = vst [vmem:[%s151 + $0x1c] sm:$0xff] %v158
                %v160 = vld [vmem:[%s150 + $0x50] sm:$0xff]
                %161 = vst [vmem:[%s151 + $0x28] sm:$0xff] %v160
                %v162 = vld [vmem:[%s150 + $0x58] sm:$0xff]
                %163 = vst [vmem:[%s151 + $0x30] sm:$0xff] %v162
                %v164 = vld [vmem:[%s150 + $0x78] sm:$0xff]
                %165 = vst [vmem:[%s151 + $0x3c] sm:$0xff] %v164
                %v166 = vld [vmem:[%s150 + $0x80] sm:$0xff]
                %167 = vst [vmem:[%s151 + $0x44] sm:$0xff] %v166
                %v168 = vld [vmem:[%s150 + $0xa0] sm:$0xff]
                %169 = vst [vmem:[%s151 + $0x50] sm:$0xff] %v168
                %v170 = vld [vmem:[%s150 + $0xa8] sm:$0xff]
                %171 = vst [vmem:[%s151 + $0x58] sm:$0xff] %v170
                %v172 = vld [vmem:[%s150 + $0xc8] sm:$0xff]
                %173 = vst [vmem:[%s151 + $0x64] sm:$0xff] %v172
                %v174 = vld [vmem:[%s150 + $0xd0] sm:$0xff]
                %175 = vst [vmem:[%s151 + $0x6c] sm:$0xff] %v174
                %v176 = vld [vmem:[%s150 + $0xf0] sm:$0xff]
                %177 = vst [vmem:[%s151 + $0x78] sm:$0xff] %v176
                %v178 = vld [vmem:[%s150 + $0xf8] sm:$0xff]
                %179 = vst [vmem:[%s151 + $0x80] sm:$0xff] %v178
                %v180 = vld [vmem:[%s150 + $0x118] sm:$0xff]
                %181 = vst [vmem:[%s151 + $0x8c] sm:$0xff] %v180
                %v182 = vld [vmem:[%s150 + $0x120] sm:$0xff]
                %183 = vst [vmem:[%s151 + $0x94] sm:$0xff] %v182
                %v184 = vld [vmem:[%s150 + $0x140] sm:$0xff]
                %185 = vst [vmem:[%s151 + $0xa0] sm:$0xff] %v184
                %v186 = vld [vmem:[%s150 + $0x148] sm:$0xff]
                %187 = vst [vmem:[%s151 + $0xa8] sm:$0xff] %v186
                %v188 = vld [vmem:[%s150 + $0x168] sm:$0xff]
                %189 = vst [vmem:[%s151 + $0xb4] sm:$0xff] %v188
                %v190 = vld [vmem:[%s150 + $0x170] sm:$0xff]
                %191 = vst [vmem:[%s151 + $0xbc] sm:$0xff] %v190
                %v192 = vld [vmem:[%s150 + $0x190] sm:$0xff]
                %193 = vst [vmem:[%s151 + $0xc8] sm:$0xff] %v192
                %v194 = vld [vmem:[%s150 + $0x198] sm:$0xff]
                %195 = vst [vmem:[%s151 + $0xd0] sm:$0xff] %v194
                %v196 = vld [vmem:[%s150 + $0x1b8] sm:$0xff]
                %197 = vst [vmem:[%s151 + $0xdc] sm:$0xff] %v196
                %v198 = vld [vmem:[%s150 + $0x1c0] sm:$0xff]
                %199 = vst [vmem:[%s151 + $0xe4] sm:$0xff] %v198
                %v200 = vld [vmem:[%s150 + $0x1e0] sm:$0xff]
                %201 = vst [vmem:[%s151 + $0xf0] sm:$0xff] %v200
                %v202 = vld [vmem:[%s150 + $0x1e8] sm:$0xff]
                %203 = vst [vmem:[%s151 + $0xf8] sm:$0xff] %v202
                %v204 = vld [vmem:[%s150 + $0x208] sm:$0xff]
                %205 = vst [vmem:[%s151 + $0x104] sm:$0xff] %v204
                %v206 = vld [vmem:[%s150 + $0x210] sm:$0xff]
                %207 = vst [vmem:[%s151 + $0x10c] sm:$0xff] %v206
                %v208 = vld [vmem:[%s150 + $0x230] sm:$0xff]
                %209 = vst [vmem:[%s151 + $0x118] sm:$0xff] %v208
                %v210 = vld [vmem:[%s150 + $0x238] sm:$0xff]
                %211 = vst [vmem:[%s151 + $0x120] sm:$0xff] %v210
                %v212 = vld [vmem:[%s150 + $0x258] sm:$0xff]
                %213 = vst [vmem:[%s151 + $0x12c] sm:$0xff] %v212
                %v214 = vld [vmem:[%s150 + $0x260] sm:$0xff]
                %215 = vst [vmem:[%s151 + $0x134] sm:$0xff] %v214
                %v216 = vld [vmem:[%s150 + $0x280] sm:$0xff]
                %217 = vst [vmem:[%s151 + $0x140] sm:$0xff] %v216
                %v218 = vld [vmem:[%s150 + $0x288] sm:$0xff]
                %219 = vst [vmem:[%s151 + $0x148] sm:$0xff] %v218
                %v220 = vld [vmem:[%s150 + $0x2a8] sm:$0xff]
                %221 = vst [vmem:[%s151 + $0x154] sm:$0xff] %v220
                %v222 = vld [vmem:[%s150 + $0x2b0] sm:$0xff]
                %223 = vst [vmem:[%s151 + $0x15c] sm:$0xff] %v222
                %v224 = vld [vmem:[%s150 + $0x2d0] sm:$0xff]
                %225 = vst [vmem:[%s151 + $0x168] sm:$0xff] %v224
                %v226 = vld [vmem:[%s150 + $0x2d8] sm:$0xff]
                %227 = vst [vmem:[%s151 + $0x170] sm:$0xff] %v226
                %v228 = vld [vmem:[%s150 + $0x2f8] sm:$0xff]
                %229 = vst [vmem:[%s151 + $0x17c] sm:$0xff] %v228
                %v230 = vld [vmem:[%s150 + $0x300] sm:$0xff]
                %231 = vst [vmem:[%s151 + $0x184] sm:$0xff] %v230
                %v232 = vld [vmem:[%s150 + $0x320] sm:$0xff]
                %233 = vst [vmem:[%s151 + $0x190] sm:$0xff] %v232
                %v234 = vld [vmem:[%s150 + $0x328] sm:$0xff]
                %235 = vst [vmem:[%s151 + $0x198] sm:$0xff] %v234
                %v236 = vld [vmem:[%s150 + $0x348] sm:$0xff]
                %237 = vst [vmem:[%s151 + $0x1a4] sm:$0xff] %v236
                %v238 = vld [vmem:[%s150 + $0x350] sm:$0xff]
                %239 = vst [vmem:[%s151 + $0x1ac] sm:$0xff] %v238
                %v240 = vld [vmem:[%s150 + $0x370] sm:$0xff]
                %241 = vst [vmem:[%s151 + $0x1b8] sm:$0xff] %v240
                %v242 = vld [vmem:[%s150 + $0x378] sm:$0xff]
                %243 = vst [vmem:[%s151 + $0x1c0] sm:$0xff] %v242
                %v244 = vld [vmem:[%s150 + $0x398] sm:$0xff]
                %245 = vst [vmem:[%s151 + $0x1cc] sm:$0xff] %v244
                %v246 = vld [vmem:[%s150 + $0x3a0] sm:$0xff]
                %247 = vst [vmem:[%s151 + $0x1d4] sm:$0xff] %v246
                %v248 = vld [vmem:[%s150 + $0x3c0] sm:$0xff]
                %249 = vst [vmem:[%s151 + $0x1e0] sm:$0xff] %v248
                %v250 = vld [vmem:[%s150 + $0x3c8] sm:$0xff]
                %251 = vst [vmem:[%s151 + $0x1e8] sm:$0xff] %v250
                %v252 = vld [vmem:[%s150 + $0x3e8] sm:$0xff]
                %253 = vst [vmem:[%s151 + $0x1f4] sm:$0xff] %v252
                %v254 = vld [vmem:[%s150 + $0x3f0] sm:$0xff]
                %255 = vst [vmem:[%s151 + $0x1fc] sm:$0xff] %v254
                %v256 = vld [vmem:[%s150 + $0x410] sm:$0xff]
                %257 = vst [vmem:[%s151 + $0x208] sm:$0xff] %v256
                %v258 = vld [vmem:[%s150 + $0x418] sm:$0xff]
                %259 = vst [vmem:[%s151 + $0x210] sm:$0xff] %v258
                %v260 = vld [vmem:[%s150 + $0x438] sm:$0xff]
                %261 = vst [vmem:[%s151 + $0x21c] sm:$0xff] %v260
                %v262 = vld [vmem:[%s150 + $0x440] sm:$0xff]
                %263 = vst [vmem:[%s151 + $0x224] sm:$0xff] %v262
                %v264 = vld [vmem:[%s150 + $0x460] sm:$0xff]
                %265 = vst [vmem:[%s151 + $0x230] sm:$0xff] %v264
                %v266 = vld [vmem:[%s150 + $0x468] sm:$0xff]
                %267 = vst [vmem:[%s151 + $0x238] sm:$0xff] %v266
                %v268 = vld [vmem:[%s150 + $0x488] sm:$0xff]
                %269 = vst [vmem:[%s151 + $0x244] sm:$0xff] %v268
                %v270 = vld [vmem:[%s150 + $0x490] sm:$0xff]
                %271 = vst [vmem:[%s151 + $0x24c] sm:$0xff] %v270
                %v272 = vld [vmem:[%s150 + $0x4b0] sm:$0xff]
                %273 = vst [vmem:[%s151 + $0x258] sm:$0xff] %v272
                %v274 = vld [vmem:[%s150 + $0x4b8] sm:$0xff]
                %275 = vst [vmem:[%s151 + $0x260] sm:$0xff] %v274
                %v276 = vld [vmem:[%s150 + $0x4d8] sm:$0xff]
                %277 = vst [vmem:[%s151 + $0x26c] sm:$0xff] %v276
                %v278 = vld [vmem:[%s150 + $0x4e0] sm:$0xff]
                %279 = vst [vmem:[%s151 + $0x274] sm:$0xff] %v278
              $region41: #{capsnet_forward.2} parent=35 // loop_footer
                %s149 = sadd.s32 1, %s145
              $region42: #{capsnet_forward.2} parent=35 // loop_footer_branch
                %144 = sbr.rel target = $region38
              $region43: #{capsnet_forward.2} parent=35 // loop_exit
                _
              loop: start=0, step=1, limit=1
              $region44: #{capsnet_forward.2} parent=35 // loop_pre_header
                _
              $region45: #{capsnet_forward.2} parent=35 // loop_header
                %s282 = sphi 0, %s286
                %p283 = scmp.ge.s32.totalorder %s282, 1
                %s287 = sphi %s142, %s142
                %s288 = sphi %s143, %s143
              $region46: #{capsnet_forward.2} parent=35 // loop_header_branch
                %285 = sbr.rel (%p283) target = $region50
              $region47: #{capsnet_forward.2} parent=35 // loop_body
                %v289 = vld [vmem:[%s287] sm:$0xf]
                %290 = vst [vmem:[%s288] sm:$0xf] %v289
                %v291 = vld [vmem:[%s287 + $0x28] sm:$0xf]
                %292 = vst [vmem:[%s288 + $0x14] sm:$0xf] %v291
                %v293 = vld [vmem:[%s287 + $0x50] sm:$0xf]
                %294 = vst [vmem:[%s288 + $0x28] sm:$0xf] %v293
                %v295 = vld [vmem:[%s287 + $0x78] sm:$0xf]
                %296 = vst [vmem:[%s288 + $0x3c] sm:$0xf] %v295
                %v297 = vld [vmem:[%s287 + $0xa0] sm:$0xf]
                %298 = vst [vmem:[%s288 + $0x50] sm:$0xf] %v297
                %v299 = vld [vmem:[%s287 + $0xc8] sm:$0xf]
                %300 = vst [vmem:[%s288 + $0x64] sm:$0xf] %v299
                %v301 = vld [vmem:[%s287 + $0xf0] sm:$0xf]
                %302 = vst [vmem:[%s288 + $0x78] sm:$0xf] %v301
                %v303 = vld [vmem:[%s287 + $0x118] sm:$0xf]
                %304 = vst [vmem:[%s288 + $0x8c] sm:$0xf] %v303
                %v305 = vld [vmem:[%s287 + $0x140] sm:$0xf]
                %306 = vst [vmem:[%s288 + $0xa0] sm:$0xf] %v305
                %v307 = vld [vmem:[%s287 + $0x168] sm:$0xf]
                %308 = vst [vmem:[%s288 + $0xb4] sm:$0xf] %v307
                %v309 = vld [vmem:[%s287 + $0x190] sm:$0xf]
                %310 = vst [vmem:[%s288 + $0xc8] sm:$0xf] %v309
                %v311 = vld [vmem:[%s287 + $0x1b8] sm:$0xf]
                %312 = vst [vmem:[%s288 + $0xdc] sm:$0xf] %v311
                %v313 = vld [vmem:[%s287 + $0x1e0] sm:$0xf]
                %314 = vst [vmem:[%s288 + $0xf0] sm:$0xf] %v313
                %v315 = vld [vmem:[%s287 + $0x208] sm:$0xf]
                %316 = vst [vmem:[%s288 + $0x104] sm:$0xf] %v315
                %v317 = vld [vmem:[%s287 + $0x230] sm:$0xf]
                %318 = vst [vmem:[%s288 + $0x118] sm:$0xf] %v317
                %v319 = vld [vmem:[%s287 + $0x258] sm:$0xf]
                %320 = vst [vmem:[%s288 + $0x12c] sm:$0xf] %v319
                %v321 = vld [vmem:[%s287 + $0x280] sm:$0xf]
                %322 = vst [vmem:[%s288 + $0x140] sm:$0xf] %v321
                %v323 = vld [vmem:[%s287 + $0x2a8] sm:$0xf]
                %324 = vst [vmem:[%s288 + $0x154] sm:$0xf] %v323
                %v325 = vld [vmem:[%s287 + $0x2d0] sm:$0xf]
                %326 = vst [vmem:[%s288 + $0x168] sm:$0xf] %v325
                %v327 = vld [vmem:[%s287 + $0x2f8] sm:$0xf]
                %328 = vst [vmem:[%s288 + $0x17c] sm:$0xf] %v327
                %v329 = vld [vmem:[%s287 + $0x320] sm:$0xf]
                %330 = vst [vmem:[%s288 + $0x190] sm:$0xf] %v329
                %v331 = vld [vmem:[%s287 + $0x348] sm:$0xf]
                %332 = vst [vmem:[%s288 + $0x1a4] sm:$0xf] %v331
                %v333 = vld [vmem:[%s287 + $0x370] sm:$0xf]
                %334 = vst [vmem:[%s288 + $0x1b8] sm:$0xf] %v333
                %v335 = vld [vmem:[%s287 + $0x398] sm:$0xf]
                %336 = vst [vmem:[%s288 + $0x1cc] sm:$0xf] %v335
                %v337 = vld [vmem:[%s287 + $0x3c0] sm:$0xf]
                %338 = vst [vmem:[%s288 + $0x1e0] sm:$0xf] %v337
                %v339 = vld [vmem:[%s287 + $0x3e8] sm:$0xf]
                %340 = vst [vmem:[%s288 + $0x1f4] sm:$0xf] %v339
                %v341 = vld [vmem:[%s287 + $0x410] sm:$0xf]
                %342 = vst [vmem:[%s288 + $0x208] sm:$0xf] %v341
                %v343 = vld [vmem:[%s287 + $0x438] sm:$0xf]
                %344 = vst [vmem:[%s288 + $0x21c] sm:$0xf] %v343
                %v345 = vld [vmem:[%s287 + $0x460] sm:$0xf]
                %346 = vst [vmem:[%s288 + $0x230] sm:$0xf] %v345
                %v347 = vld [vmem:[%s287 + $0x488] sm:$0xf]
                %348 = vst [vmem:[%s288 + $0x244] sm:$0xf] %v347
                %v349 = vld [vmem:[%s287 + $0x4b0] sm:$0xf]
                %350 = vst [vmem:[%s288 + $0x258] sm:$0xf] %v349
                %v351 = vld [vmem:[%s287 + $0x4d8] sm:$0xf]
                %352 = vst [vmem:[%s288 + $0x26c] sm:$0xf] %v351
              $region48: #{capsnet_forward.2} parent=35 // loop_footer
                %s286 = sadd.s32 1, %s282
              $region49: #{capsnet_forward.2} parent=35 // loop_footer_branch
                %281 = sbr.rel target = $region45
              $region50: #{capsnet_forward.2} parent=35 // loop_exit
                _
            $region36: #{capsnet_forward.2} parent=31 // pred_fallthru
              _
          $region32: #{capsnet_forward.2} parent=27 // pred_fallthru
            _
          %353 = vnop
        $region28: #{capsnet_forward.2} parent=23 // pred_fallthru
          _
      $region24: #{capsnet_forward.2} parent=5 // pred_fallthru
        _
      %p354 = scmp.le.s32.totalorder 1, %s9
      %p355 = scmp.lt.s32.totalorder %s9, 3
      %p356 = pnand %p354, %p355
      %p357 = pneg %p356
      // Predicated region
      $region51: #{capsnet_forward.2} parent=5 // pred_check
        _
      $region52: #{capsnet_forward.2} parent=5 // pred_check_branch
        %359 = sbr.rel (%p356) target = $region54
      $region53: #{capsnet_forward.2} parent=5 // pred_region
        %s360 = ssub.s32 %s9, 1
        %s361 = sand.u32 %s43, 1
        %s362 = sand.u32 %s43, 1
        %s363 = smul.addr %s362, 640
        %s364 = scalar_lea.vmem [#allocation2], %s363
        // Predicated region
        $region55: #{capsnet_forward.2} parent=53 // pred_check
          %p365 = pneg %p56
        $region56: #{capsnet_forward.2} parent=53 // pred_check_branch
          %367 = sbr.rel (%p365) target = $region58
        $region57: #{capsnet_forward.2} parent=53 // pred_region
          _
        $region58: #{capsnet_forward.2} parent=53 // pred_fallthru
          _
        %p368 = pneg %p30
        %p369 = pneg %p27
        %s370 = sand.u32 %s43, 1
        %s371 = sand.u32 %s43, 1
        %s372 = smul.addr %s371, 640
        %s373 = scalar_lea.vmem [#allocation2], %s372
        %p374 = pneg %p56
        %p375 = pneg %p53
        %p376 = pneg %p77
        %p377 = pneg %p74
        %p378 = pneg %p103
        %p379 = pneg %p100
        %s380 = sand.u32 %s90, 1
        %s381 = sand.u32 %s90, 1
        %s382 = smul.addr %s381, 80
        %s383 = scalar_lea.vmem [#allocation3], %s382
        %s384 = smul.u32 5, %s14
        %s385 = smul.u32 5, %s14
        %v387 = vld [vmem:[%s0] sm:$0xff]
        %v388 = vld [vmem:[%s0 + $0x8] sm:$0xff]
        %v389 = vld [vmem:[%s0 + $0x10] sm:$0xff]
        %v390 = vld [vmem:[%s0 + $0x18] sm:$0xff]
        %v391 = vld [vmem:[%s364] sm:$0xff]
        %v392 = vld [vmem:[%s364 + $0x8] sm:$0xff]
        %v393 = vld [vmem:[%s364 + $0x10] sm:$0xf]
        %v394 = vld [vmem:[%s364 + $0x14] sm:$0xff]
        %v395 = vld [vmem:[%s364 + $0x1c] sm:$0xff]
        %v396 = vld [vmem:[%s364 + $0x24] sm:$0xf]
        %v397 = vld [vmem:[%s364 + $0x28] sm:$0xff]
        %v398 = vld [vmem:[%s364 + $0x30] sm:$0xff]
        %v399 = vld [vmem:[%s364 + $0x38] sm:$0xf]
        %v400 = vld [vmem:[%s364 + $0x3c] sm:$0xff]
        %v401 = vld [vmem:[%s364 + $0x44] sm:$0xff]
        %v402 = vld [vmem:[%s364 + $0x4c] sm:$0xf]
        %v403 = vld [vmem:[%s364 + $0x50] sm:$0xff]
        %v404 = vld [vmem:[%s364 + $0x58] sm:$0xff]
        %v405 = vld [vmem:[%s364 + $0x60] sm:$0xf]
        %v406 = vld [vmem:[%s364 + $0x64] sm:$0xff]
        %v407 = vld [vmem:[%s364 + $0x6c] sm:$0xff]
        %v408 = vld [vmem:[%s364 + $0x74] sm:$0xf]
        %v409 = vld [vmem:[%s364 + $0x78] sm:$0xff]
        %v410 = vld [vmem:[%s364 + $0x80] sm:$0xff]
        %v411 = vld [vmem:[%s364 + $0x88] sm:$0xf]
        %v412 = vld [vmem:[%s364 + $0x8c] sm:$0xff]
        %v413 = vld [vmem:[%s364 + $0x94] sm:$0xff]
        %v414 = vld [vmem:[%s364 + $0x9c] sm:$0xf]
        %v415 = vld [vmem:[%s364 + $0xa0] sm:$0xff]
        %v416 = vld [vmem:[%s364 + $0xa8] sm:$0xff]
        %v417 = vld [vmem:[%s364 + $0xb0] sm:$0xf]
        %v418 = vld [vmem:[%s364 + $0xb4] sm:$0xff]
        %v419 = vld [vmem:[%s364 + $0xbc] sm:$0xff]
        %v420 = vld [vmem:[%s364 + $0xc4] sm:$0xf]
        %v421 = vld [vmem:[%s364 + $0xc8] sm:$0xff]
        %v422 = vld [vmem:[%s364 + $0xd0] sm:$0xff]
        %v423 = vld [vmem:[%s364 + $0xd8] sm:$0xf]
        %v424 = vld [vmem:[%s364 + $0xdc] sm:$0xff]
        %v425 = vld [vmem:[%s364 + $0xe4] sm:$0xff]
        %v426 = vld [vmem:[%s364 + $0xec] sm:$0xf]
        %v427 = vld [vmem:[%s364 + $0xf0] sm:$0xff]
        %v428 = vld [vmem:[%s364 + $0xf8] sm:$0xff]
        %v429 = vld [vmem:[%s364 + $0x100] sm:$0xf]
        %v430 = vld [vmem:[%s364 + $0x104] sm:$0xff]
        %v431 = vld [vmem:[%s364 + $0x10c] sm:$0xff]
        %v432 = vld [vmem:[%s364 + $0x114] sm:$0xf]
        %v433 = vld [vmem:[%s364 + $0x118] sm:$0xff]
        %v434 = vld [vmem:[%s364 + $0x120] sm:$0xff]
        %v435 = vld [vmem:[%s364 + $0x128] sm:$0xf]
        %v436 = vld [vmem:[%s364 + $0x12c] sm:$0xff]
        %v437 = vld [vmem:[%s364 + $0x134] sm:$0xff]
        %v438 = vld [vmem:[%s364 + $0x13c] sm:$0xf]
        %v439 = vld [vmem:[%s364 + $0x140] sm:$0xff]
        %v440 = vld [vmem:[%s364 + $0x148] sm:$0xff]
        %v441 = vld [vmem:[%s364 + $0x150] sm:$0xf]
        %v442 = vld [vmem:[%s364 + $0x154] sm:$0xff]
        %v443 = vld [vmem:[%s364 + $0x15c] sm:$0xff]
        %v444 = vld [vmem:[%s364 + $0x164] sm:$0xf]
        %v445 = vld [vmem:[%s364 + $0x168] sm:$0xff]
        %v446 = vld [vmem:[%s364 + $0x170] sm:$0xff]
        %v447 = vld [vmem:[%s364 + $0x178] sm:$0xf]
        %v448 = vld [vmem:[%s364 + $0x17c] sm:$0xff]
        %v449 = vld [vmem:[%s364 + $0x184] sm:$0xff]
        %v450 = vld [vmem:[%s364 + $0x18c] sm:$0xf]
        %v451 = vld [vmem:[%s364 + $0x190] sm:$0xff]
        %v452 = vld [vmem:[%s364 + $0x198] sm:$0xff]
        %v453 = vld [vmem:[%s364 + $0x1a0] sm:$0xf]
        %v454 = vld [vmem:[%s364 + $0x1a4] sm:$0xff]
        %v455 = vld [vmem:[%s364 + $0x1ac] sm:$0xff]
        %v456 = vld [vmem:[%s364 + $0x1b4] sm:$0xf]
        %v457 = vld [vmem:[%s364 + $0x1b8] sm:$0xff]
        %v458 = vld [vmem:[%s364 + $0x1c0] sm:$0xff]
        %v459 = vld [vmem:[%s364 + $0x1c8] sm:$0xf]
        %v460 = vld [vmem:[%s364 + $0x1cc] sm:$0xff]
        %v461 = vld [vmem:[%s364 + $0x1d4] sm:$0xff]
        %v462 = vld [vmem:[%s364 + $0x1dc] sm:$0xf]
        %v463 = vld [vmem:[%s364 + $0x1e0] sm:$0xff]
        %v464 = vld [vmem:[%s364 + $0x1e8] sm:$0xff]
        %v465 = vld [vmem:[%s364 + $0x1f0] sm:$0xf]
        %v466 = vld [vmem:[%s364 + $0x1f4] sm:$0xff]
        %v467 = vld [vmem:[%s364 + $0x1fc] sm:$0xff]
        %v468 = vld [vmem:[%s364 + $0x204] sm:$0xf]
        %v469 = vld [vmem:[%s364 + $0x208] sm:$0xff]
        %v470 = vld [vmem:[%s364 + $0x210] sm:$0xff]
        %v471 = vld [vmem:[%s364 + $0x218] sm:$0xf]
        %v472 = vld [vmem:[%s364 + $0x21c] sm:$0xff]
        %v473 = vld [vmem:[%s364 + $0x224] sm:$0xff]
        %v474 = vld [vmem:[%s364 + $0x22c] sm:$0xf]
        %v475 = vld [vmem:[%s364 + $0x230] sm:$0xff]
        %v476 = vld [vmem:[%s364 + $0x238] sm:$0xff]
        %v477 = vld [vmem:[%s364 + $0x240] sm:$0xf]
        %v478 = vld [vmem:[%s364 + $0x244] sm:$0xff]
        %v479 = vld [vmem:[%s364 + $0x24c] sm:$0xff]
        %v480 = vld [vmem:[%s364 + $0x254] sm:$0xf]
        %v481 = vld [vmem:[%s364 + $0x258] sm:$0xff]
        %v482 = vld [vmem:[%s364 + $0x260] sm:$0xff]
        %v483 = vld [vmem:[%s364 + $0x268] sm:$0xf]
        %v484 = vld [vmem:[%s364 + $0x26c] sm:$0xff]
        %v485 = vld [vmem:[%s364 + $0x274] sm:$0xff]
        %v486 = vld [vmem:[%s364 + $0x27c] sm:$0xf]
        %v487 = vld [vmem:[%s2] sm:$0xff]
        %v488 = vld [vmem:[%s2 + $0x8] sm:$0xff]
        %v489 = vld [vmem:[%s2 + $0x10] sm:$0xff]
        %v490 = vld [vmem:[%s2 + $0x18] sm:$0xff]
        %492 = vset.pattern.permute.xlu0 0
        %493 = vperm.xlu0 %492, %v487
        %v494 = vpop.permute.xlu0 %493
        %497 = vset.pattern.permute.xlu0 0
        %498 = vperm.xlu0 %497, %v488
        %v499 = vpop.permute.xlu0 %498
        %502 = vset.pattern.permute.xlu0 0
        %503 = vperm.xlu0 %502, %v489
        %v504 = vpop.permute.xlu0 %503
        %507 = vset.pattern.permute.xlu0 0
        %508 = vperm.xlu0 %507, %v490
        %v509 = vpop.permute.xlu0 %508
        %v515 = vunpack.c.l.b16 %v387
        %v516 = vunpack.c.h.b16 %v387
        %v517 = vunpack.c.l.b16 %v388
        %v518 = vunpack.c.h.b16 %v388
        %v519 = vunpack.c.l.b16 %v389
        %v520 = vunpack.c.h.b16 %v389
        %v521 = vunpack.c.l.b16 %v390
        %v522 = vunpack.c.h.b16 %v390
        %v523 = vpack.c.b16 %v517, %v515
        %v524 = vpack.c.b16 %v518, %v516
        %v525 = vpack.c.b16 %v521, %v519
        %v526 = vpack.c.b16 %v522, %v520
        %v627 = vunpack.c.l.b16 %v391
        %v628 = vunpack.c.h.b16 %v391
        %v629 = vunpack.c.l.b16 %v392
        %v630 = vunpack.c.h.b16 %v392
        %v631 = vunpack.c.l.b16 %v393
        %v632 = vunpack.c.l.b16 %v394
        %v633 = vunpack.c.h.b16 %v394
        %v634 = vunpack.c.l.b16 %v395
        %v635 = vunpack.c.h.b16 %v395
        %v636 = vunpack.c.l.b16 %v396
        %v637 = vunpack.c.l.b16 %v397
        %v638 = vunpack.c.h.b16 %v397
        %v639 = vunpack.c.l.b16 %v398
        %v640 = vunpack.c.h.b16 %v398
        %v641 = vunpack.c.l.b16 %v399
        %v642 = vunpack.c.l.b16 %v400
        %v643 = vunpack.c.h.b16 %v400
        %v644 = vunpack.c.l.b16 %v401
        %v645 = vunpack.c.h.b16 %v401
        %v646 = vunpack.c.l.b16 %v402
        %v647 = vunpack.c.l.b16 %v403
        %v648 = vunpack.c.h.b16 %v403
        %v649 = vunpack.c.l.b16 %v404
        %v650 = vunpack.c.h.b16 %v404
        %v651 = vunpack.c.l.b16 %v405
        %v652 = vunpack.c.l.b16 %v406
        %v653 = vunpack.c.h.b16 %v406
        %v654 = vunpack.c.l.b16 %v407
        %v655 = vunpack.c.h.b16 %v407
        %v656 = vunpack.c.l.b16 %v408
        %v657 = vunpack.c.l.b16 %v409
        %v658 = vunpack.c.h.b16 %v409
        %v659 = vunpack.c.l.b16 %v410
        %v660 = vunpack.c.h.b16 %v410
        %v661 = vunpack.c.l.b16 %v411
        %v662 = vunpack.c.l.b16 %v412
        %v663 = vunpack.c.h.b16 %v412
        %v664 = vunpack.c.l.b16 %v413
        %v665 = vunpack.c.h.b16 %v413
        %v666 = vunpack.c.l.b16 %v414
        %v667 = vunpack.c.l.b16 %v415
        %v668 = vunpack.c.h.b16 %v415
        %v669 = vunpack.c.l.b16 %v416
        %v670 = vunpack.c.h.b16 %v416
        %v671 = vunpack.c.l.b16 %v417
        %v672 = vunpack.c.l.b16 %v418
        %v673 = vunpack.c.h.b16 %v418
        %v674 = vunpack.c.l.b16 %v419
        %v675 = vunpack.c.h.b16 %v419
        %v676 = vunpack.c.l.b16 %v420
        %v677 = vunpack.c.l.b16 %v421
        %v678 = vunpack.c.h.b16 %v421
        %v679 = vunpack.c.l.b16 %v422
        %v680 = vunpack.c.h.b16 %v422
        %v681 = vunpack.c.l.b16 %v423
        %v682 = vunpack.c.l.b16 %v424
        %v683 = vunpack.c.h.b16 %v424
        %v684 = vunpack.c.l.b16 %v425
        %v685 = vunpack.c.h.b16 %v425
        %v686 = vunpack.c.l.b16 %v426
        %v687 = vunpack.c.l.b16 %v427
        %v688 = vunpack.c.h.b16 %v427
        %v689 = vunpack.c.l.b16 %v428
        %v690 = vunpack.c.h.b16 %v428
        %v691 = vunpack.c.l.b16 %v429
        %v692 = vunpack.c.l.b16 %v430
        %v693 = vunpack.c.h.b16 %v430
        %v694 = vunpack.c.l.b16 %v431
        %v695 = vunpack.c.h.b16 %v431
        %v696 = vunpack.c.l.b16 %v432
        %v697 = vunpack.c.l.b16 %v433
        %v698 = vunpack.c.h.b16 %v433
        %v699 = vunpack.c.l.b16 %v434
        %v700 = vunpack.c.h.b16 %v434
        %v701 = vunpack.c.l.b16 %v435
        %v702 = vunpack.c.l.b16 %v436
        %v703 = vunpack.c.h.b16 %v436
        %v704 = vunpack.c.l.b16 %v437
        %v705 = vunpack.c.h.b16 %v437
        %v706 = vunpack.c.l.b16 %v438
        %v707 = vunpack.c.l.b16 %v439
        %v708 = vunpack.c.h.b16 %v439
        %v709 = vunpack.c.l.b16 %v440
        %v710 = vunpack.c.h.b16 %v440
        %v711 = vunpack.c.l.b16 %v441
        %v712 = vunpack.c.l.b16 %v442
        %v713 = vunpack.c.h.b16 %v442
        %v714 = vunpack.c.l.b16 %v443
        %v715 = vunpack.c.h.b16 %v443
        %v716 = vunpack.c.l.b16 %v444
        %v717 = vunpack.c.l.b16 %v445
        %v718 = vunpack.c.h.b16 %v445
        %v719 = vunpack.c.l.b16 %v446
        %v720 = vunpack.c.h.b16 %v446
        %v721 = vunpack.c.l.b16 %v447
        %v722 = vunpack.c.l.b16 %v448
        %v723 = vunpack.c.h.b16 %v448
        %v724 = vunpack.c.l.b16 %v449
        %v725 = vunpack.c.h.b16 %v449
        %v726 = vunpack.c.l.b16 %v450
        %v727 = vunpack.c.l.b16 %v451
        %v728 = vunpack.c.h.b16 %v451
        %v729 = vunpack.c.l.b16 %v452
        %v730 = vunpack.c.h.b16 %v452
        %v731 = vunpack.c.l.b16 %v453
        %v732 = vunpack.c.l.b16 %v454
        %v733 = vunpack.c.h.b16 %v454
        %v734 = vunpack.c.l.b16 %v455
        %v735 = vunpack.c.h.b16 %v455
        %v736 = vunpack.c.l.b16 %v456
        %v737 = vunpack.c.l.b16 %v457
        %v738 = vunpack.c.h.b16 %v457
        %v739 = vunpack.c.l.b16 %v458
        %v740 = vunpack.c.h.b16 %v458
        %v741 = vunpack.c.l.b16 %v459
        %v742 = vunpack.c.l.b16 %v460
        %v743 = vunpack.c.h.b16 %v460
        %v744 = vunpack.c.l.b16 %v461
        %v745 = vunpack.c.h.b16 %v461
        %v746 = vunpack.c.l.b16 %v462
        %v747 = vunpack.c.l.b16 %v463
        %v748 = vunpack.c.h.b16 %v463
        %v749 = vunpack.c.l.b16 %v464
        %v750 = vunpack.c.h.b16 %v464
        %v751 = vunpack.c.l.b16 %v465
        %v752 = vunpack.c.l.b16 %v466
        %v753 = vunpack.c.h.b16 %v466
        %v754 = vunpack.c.l.b16 %v467
        %v755 = vunpack.c.h.b16 %v467
        %v756 = vunpack.c.l.b16 %v468
        %v757 = vunpack.c.l.b16 %v469
        %v758 = vunpack.c.h.b16 %v469
        %v759 = vunpack.c.l.b16 %v470
        %v760 = vunpack.c.h.b16 %v470
        %v761 = vunpack.c.l.b16 %v471
        %v762 = vunpack.c.l.b16 %v472
        %v763 = vunpack.c.h.b16 %v472
        %v764 = vunpack.c.l.b16 %v473
        %v765 = vunpack.c.h.b16 %v473
        %v766 = vunpack.c.l.b16 %v474
        %v767 = vunpack.c.l.b16 %v475
        %v768 = vunpack.c.h.b16 %v475
        %v769 = vunpack.c.l.b16 %v476
        %v770 = vunpack.c.h.b16 %v476
        %v771 = vunpack.c.l.b16 %v477
        %v772 = vunpack.c.l.b16 %v478
        %v773 = vunpack.c.h.b16 %v478
        %v774 = vunpack.c.l.b16 %v479
        %v775 = vunpack.c.h.b16 %v479
        %v776 = vunpack.c.l.b16 %v480
        %v777 = vunpack.c.l.b16 %v481
        %v778 = vunpack.c.h.b16 %v481
        %v779 = vunpack.c.l.b16 %v482
        %v780 = vunpack.c.h.b16 %v482
        %v781 = vunpack.c.l.b16 %v483
        %v782 = vunpack.c.l.b16 %v484
        %v783 = vunpack.c.h.b16 %v484
        %v784 = vunpack.c.l.b16 %v485
        %v785 = vunpack.c.h.b16 %v485
        %v786 = vunpack.c.l.b16 %v486
        %v787 = vpack.c.b16 %v632, %v627
        %v788 = vpack.c.b16 %v633, %v628
        %v789 = vpack.c.b16 %v634, %v629
        %v790 = vpack.c.b16 %v635, %v630
        %v791 = vpack.c.b16 %v636, %v631
        %v792 = vpack.c.b16 %v642, %v637
        %v793 = vpack.c.b16 %v643, %v638
        %v794 = vpack.c.b16 %v644, %v639
        %v795 = vpack.c.b16 %v645, %v640
        %v796 = vpack.c.b16 %v646, %v641
        %v797 = vpack.c.b16 %v652, %v647
        %v798 = vpack.c.b16 %v653, %v648
        %v799 = vpack.c.b16 %v654, %v649
        %v800 = vpack.c.b16 %v655, %v650
        %v801 = vpack.c.b16 %v656, %v651
        %v802 = vpack.c.b16 %v662, %v657
        %v803 = vpack.c.b16 %v663, %v658
        %v804 = vpack.c.b16 %v664, %v659
        %v805 = vpack.c.b16 %v665, %v660
        %v806 = vpack.c.b16 %v666, %v661
        %v807 = vpack.c.b16 %v672, %v667
        %v808 = vpack.c.b16 %v673, %v668
        %v809 = vpack.c.b16 %v674, %v669
        %v810 = vpack.c.b16 %v675, %v670
        %v811 = vpack.c.b16 %v676, %v671
        %v812 = vpack.c.b16 %v682, %v677
        %v813 = vpack.c.b16 %v683, %v678
        %v814 = vpack.c.b16 %v684, %v679
        %v815 = vpack.c.b16 %v685, %v680
        %v816 = vpack.c.b16 %v686, %v681
        %v817 = vpack.c.b16 %v692, %v687
        %v818 = vpack.c.b16 %v693, %v688
        %v819 = vpack.c.b16 %v694, %v689
        %v820 = vpack.c.b16 %v695, %v690
        %v821 = vpack.c.b16 %v696, %v691
        %v822 = vpack.c.b16 %v702, %v697
        %v823 = vpack.c.b16 %v703, %v698
        %v824 = vpack.c.b16 %v704, %v699
        %v825 = vpack.c.b16 %v705, %v700
        %v826 = vpack.c.b16 %v706, %v701
        %v827 = vpack.c.b16 %v712, %v707
        %v828 = vpack.c.b16 %v713, %v708
        %v829 = vpack.c.b16 %v714, %v709
        %v830 = vpack.c.b16 %v715, %v710
        %v831 = vpack.c.b16 %v716, %v711
        %v832 = vpack.c.b16 %v722, %v717
        %v833 = vpack.c.b16 %v723, %v718
        %v834 = vpack.c.b16 %v724, %v719
        %v835 = vpack.c.b16 %v725, %v720
        %v836 = vpack.c.b16 %v726, %v721
        %v837 = vpack.c.b16 %v732, %v727
        %v838 = vpack.c.b16 %v733, %v728
        %v839 = vpack.c.b16 %v734, %v729
        %v840 = vpack.c.b16 %v735, %v730
        %v841 = vpack.c.b16 %v736, %v731
        %v842 = vpack.c.b16 %v742, %v737
        %v843 = vpack.c.b16 %v743, %v738
        %v844 = vpack.c.b16 %v744, %v739
        %v845 = vpack.c.b16 %v745, %v740
        %v846 = vpack.c.b16 %v746, %v741
        %v847 = vpack.c.b16 %v752, %v747
        %v848 = vpack.c.b16 %v753, %v748
        %v849 = vpack.c.b16 %v754, %v749
        %v850 = vpack.c.b16 %v755, %v750
        %v851 = vpack.c.b16 %v756, %v751
        %v852 = vpack.c.b16 %v762, %v757
        %v853 = vpack.c.b16 %v763, %v758
        %v854 = vpack.c.b16 %v764, %v759
        %v855 = vpack.c.b16 %v765, %v760
        %v856 = vpack.c.b16 %v766, %v761
        %v857 = vpack.c.b16 %v772, %v767
        %v858 = vpack.c.b16 %v773, %v768
        %v859 = vpack.c.b16 %v774, %v769
        %v860 = vpack.c.b16 %v775, %v770
        %v861 = vpack.c.b16 %v776, %v771
        %v862 = vpack.c.b16 %v782, %v777
        %v863 = vpack.c.b16 %v783, %v778
        %v864 = vpack.c.b16 %v784, %v779
        %v865 = vpack.c.b16 %v785, %v780
        %v866 = vpack.c.b16 %v786, %v781
        %947 = vmatprep.subr.bf16.mxu0 %v788
        %948 = vmatpush1.bf16.msra.mxu0 %v787
        %949 = vmatprep.subr.bf16.mxu0 %v793
        %950 = vmatpush1.bf16.msra.mxu0 %v792
        %951 = vmatprep.subr.bf16.mxu0 %v798
        %952 = vmatpush1.bf16.msra.mxu0 %v797
        %953 = vmatprep.subr.bf16.mxu0 %v803
        %954 = vmatpush1.bf16.msra.mxu0 %v802
        %955 = vmatprep.subr.bf16.mxu0 %v808
        %956 = vmatpush1.bf16.msra.mxu0 %v807
        %957 = vmatprep.subr.bf16.mxu0 %v813
        %958 = vmatpush1.bf16.msra.mxu0 %v812
        %959 = vmatprep.subr.bf16.mxu0 %v818
        %960 = vmatpush1.bf16.msra.mxu0 %v817
        %961 = vmatprep.subr.bf16.mxu0 %v823
        %962 = vmatpush1.bf16.msra.mxu0 %v822
        %963 = vmatprep.subr.bf16.mxu0 %v828
        %964 = vmatpush1.bf16.msra.mxu0 %v827
        %965 = vmatprep.subr.bf16.mxu0 %v833
        %966 = vmatpush1.bf16.msra.mxu0 %v832
        %967 = vmatprep.subr.bf16.mxu0 %v838
        %968 = vmatpush1.bf16.msra.mxu0 %v837
        %969 = vmatprep.subr.bf16.mxu0 %v843
        %970 = vmatpush1.bf16.msra.mxu0 %v842
        %971 = vmatprep.subr.bf16.mxu0 %v848
        %972 = vmatpush1.bf16.msra.mxu0 %v847
        %973 = vmatprep.subr.bf16.mxu0 %v853
        %974 = vmatpush1.bf16.msra.mxu0 %v852
        %975 = vmatprep.subr.bf16.mxu0 %v858
        %976 = vmatpush1.bf16.msra.mxu0 %v857
        %977 = vmatprep.subr.bf16.mxu0 %v863
        %978 = vmatpush1.bf16.msra.mxu0 %v862
        %979 = vmatprep.mubr.bf16.mxu0 %v524
        %980 = vmatmul.mubr.bf16.gmra.mrb[0].mxu0 %v523
        %v981 = vpop.f32.mrb[0].mxu0
        %v982 = vadd.f32 %v494, %v981
        %v983 = vpop.f32.mrb[0].mxu0
        %v984 = vadd.f32 %v494, %v983
        %v985 = vpop.f32.mrb[0].mxu0
        %v986 = vadd.f32 %v499, %v985
        %v987 = vpop.f32.mrb[0].mxu0
        %v988 = vadd.f32 %v499, %v987
        %989 = vmatprep.mubr.bf16.mxu0 %v526
        %990 = vmatmul.mubr.bf16.gmra.mrb[0].mxu0 %v525
        %v991 = vpop.f32.mrb[0].mxu0
        %v992 = vadd.f32 %v504, %v991
        %v993 = vpop.f32.mrb[0].mxu0
        %v994 = vadd.f32 %v504, %v993
        %v995 = vpop.f32.mrb[0].mxu0
        %v996 = vadd.f32 %v509, %v995
        %v997 = vpop.f32.mrb[0].mxu0
        %v998 = vadd.f32 %v509, %v997
        %999 = vdwg.mxu0
        %1000 = vmatprep.subr.bf16.mxu0 %v790
        %1001 = vmatpush1.bf16.msra.mxu0 %v789
        %1002 = vmatprep.subr.bf16.mxu0 %v795
        %1003 = vmatpush1.bf16.msra.mxu0 %v794
        %1004 = vmatprep.subr.bf16.mxu0 %v800
        %1005 = vmatpush1.bf16.msra.mxu0 %v799
        %1006 = vmatprep.subr.bf16.mxu0 %v805
        %1007 = vmatpush1.bf16.msra.mxu0 %v804
        %1008 = vmatprep.subr.bf16.mxu0 %v810
        %1009 = vmatpush1.bf16.msra.mxu0 %v809
        %1010 = vmatprep.subr.bf16.mxu0 %v815
        %1011 = vmatpush1.bf16.msra.mxu0 %v814
        %1012 = vmatprep.subr.bf16.mxu0 %v820
        %1013 = vmatpush1.bf16.msra.mxu0 %v819
        %1014 = vmatprep.subr.bf16.mxu0 %v825
        %1015 = vmatpush1.bf16.msra.mxu0 %v824
        %1016 = vmatprep.subr.bf16.mxu0 %v830
        %1017 = vmatpush1.bf16.msra.mxu0 %v829
        %1018 = vmatprep.subr.bf16.mxu0 %v835
        %1019 = vmatpush1.bf16.msra.mxu0 %v834
        %1020 = vmatprep.subr.bf16.mxu0 %v840
        %1021 = vmatpush1.bf16.msra.mxu0 %v839
        %1022 = vmatprep.subr.bf16.mxu0 %v845
        %1023 = vmatpush1.bf16.msra.mxu0 %v844
        %1024 = vmatprep.subr.bf16.mxu0 %v850
        %1025 = vmatpush1.bf16.msra.mxu0 %v849
        %1026 = vmatprep.subr.bf16.mxu0 %v855
        %1027 = vmatpush1.bf16.msra.mxu0 %v854
        %1028 = vmatprep.subr.bf16.mxu0 %v860
        %1029 = vmatpush1.bf16.msra.mxu0 %v859
        %1030 = vmatprep.subr.bf16.mxu0 %v865
        %1031 = vmatpush1.bf16.msra.mxu0 %v864
        %1032 = vmatprep.mubr.bf16.mxu0 %v524
        %1033 = vmatmul.mubr.bf16.gmra.mrb[0].mxu0 %v523
        %v1034 = vpop.f32.mrb[0].mxu0
        %v1035 = vadd.f32 %v494, %v1034
        %v1036 = vpop.f32.mrb[0].mxu0
        %v1037 = vadd.f32 %v494, %v1036
        %v1038 = vpop.f32.mrb[0].mxu0
        %v1039 = vadd.f32 %v499, %v1038
        %v1040 = vpop.f32.mrb[0].mxu0
        %v1041 = vadd.f32 %v499, %v1040
        %1042 = vmatprep.mubr.bf16.mxu0 %v526
        %1043 = vmatmul.mubr.bf16.gmra.mrb[0].mxu0 %v525
        %v1044 = vpop.f32.mrb[0].mxu0
        %v1045 = vadd.f32 %v504, %v1044
        %v1046 = vpop.f32.mrb[0].mxu0
        %v1047 = vadd.f32 %v504, %v1046
        %v1048 = vpop.f32.mrb[0].mxu0
        %v1049 = vadd.f32 %v509, %v1048
        %v1050 = vpop.f32.mrb[0].mxu0
        %v1051 = vadd.f32 %v509, %v1050
        %1052 = vdwg.mxu0
        %1053 = vmatprep.subr.bf16.mxu0 0
        %1054 = vmatpush1.bf16.msra.mxu0 %v791
        %1055 = vmatprep.subr.bf16.mxu0 0
        %1056 = vmatpush1.bf16.msra.mxu0 %v796
        %1057 = vmatprep.subr.bf16.mxu0 0
        %1058 = vmatpush1.bf16.msra.mxu0 %v801
        %1059 = vmatprep.subr.bf16.mxu0 0
        %1060 = vmatpush1.bf16.msra.mxu0 %v806
        %1061 = vmatprep.subr.bf16.mxu0 0
        %1062 = vmatpush1.bf16.msra.mxu0 %v811
        %1063 = vmatprep.subr.bf16.mxu0 0
        %1064 = vmatpush1.bf16.msra.mxu0 %v816
        %1065 = vmatprep.subr.bf16.mxu0 0
        %1066 = vmatpush1.bf16.msra.mxu0 %v821
        %1067 = vmatprep.subr.bf16.mxu0 0
        %1068 = vmatpush1.bf16.msra.mxu0 %v826
        %1069 = vmatprep.subr.bf16.mxu0 0
        %1070 = vmatpush1.bf16.msra.mxu0 %v831
        %1071 = vmatprep.subr.bf16.mxu0 0
        %1072 = vmatpush1.bf16.msra.mxu0 %v836
        %1073 = vmatprep.subr.bf16.mxu0 0
        %1074 = vmatpush1.bf16.msra.mxu0 %v841
        %1075 = vmatprep.subr.bf16.mxu0 0
        %1076 = vmatpush1.bf16.msra.mxu0 %v846
        %1077 = vmatprep.subr.bf16.mxu0 0
        %1078 = vmatpush1.bf16.msra.mxu0 %v851
        %1079 = vmatprep.subr.bf16.mxu0 0
        %1080 = vmatpush1.bf16.msra.mxu0 %v856
        %1081 = vmatprep.subr.bf16.mxu0 0
        %1082 = vmatpush1.bf16.msra.mxu0 %v861
        %1083 = vmatprep.subr.bf16.mxu0 0
        %1084 = vmatpush1.bf16.msra.mxu0 %v866
        %1085 = vmatprep.mubr.bf16.mxu0 %v524
        %1086 = vmatmul.mubr.bf16.gmra.mrb[0].mxu0 %v523
        %v1087 = vpop.f32.mrb[0].mxu0
        %v1088 = vadd.f32 %v494, %v1087
        %v1089 = vpop.f32.mrb[0].mxu0
        %v1090 = vpop.f32.mrb[0].mxu0
        %v1091 = vadd.f32 %v499, %v1090
        %v1092 = vpop.f32.mrb[0].mxu0
        %1093 = vmatprep.mubr.bf16.mxu0 %v526
        %1094 = vmatmul.mubr.bf16.gmra.mrb[0].mxu0 %v525
        %v1095 = vpop.f32.mrb[0].mxu0
        %v1096 = vadd.f32 %v504, %v1095
        %v1097 = vpop.f32.mrb[0].mxu0
        %v1098 = vpop.f32.mrb[0].mxu0
        %v1099 = vadd.f32 %v509, %v1098
        %v1100 = vpop.f32.mrb[0].mxu0
        %1101 = vdwg.mxu0
        %v1102 = vmax.f32 %v982, 0.0
        %v1103 = vmax.f32 %v984, 0.0
        %v1104 = vmax.f32 %v1035, 0.0
        %v1105 = vmax.f32 %v1037, 0.0
        %v1106 = vmax.f32 %v1088, 0.0
        %v1107 = vmax.f32 %v986, 0.0
        %v1108 = vmax.f32 %v988, 0.0
        %v1109 = vmax.f32 %v1039, 0.0
        %v1110 = vmax.f32 %v1041, 0.0
        %v1111 = vmax.f32 %v1091, 0.0
        %v1112 = vmax.f32 %v992, 0.0
        %v1113 = vmax.f32 %v994, 0.0
        %v1114 = vmax.f32 %v1045, 0.0
        %v1115 = vmax.f32 %v1047, 0.0
        %v1116 = vmax.f32 %v1096, 0.0
        %v1117 = vmax.f32 %v996, 0.0
        %v1118 = vmax.f32 %v998, 0.0
        %v1119 = vmax.f32 %v1049, 0.0
        %v1120 = vmax.f32 %v1051, 0.0
        %v1121 = vmax.f32 %v1099, 0.0
        %v1122 = vpack.c.bf16 %v1107, %v1102
        %v1123 = vpack.c.bf16 %v1108, %v1103
        %v1124 = vpack.c.bf16 %v1109, %v1104
        %v1125 = vpack.c.bf16 %v1110, %v1105
        %v1126 = vpack.c.bf16 %v1111, %v1106
        %v1127 = vpack.c.bf16 %v1117, %v1112
        %v1128 = vpack.c.bf16 %v1118, %v1113
        %v1129 = vpack.c.bf16 %v1119, %v1114
        %v1130 = vpack.c.bf16 %v1120, %v1115
        %v1131 = vpack.c.bf16 %v1121, %v1116
        %v1142 = vunpack.c.l.b16 %v1122
        %v1143 = vunpack.c.l.b16 %v1123
        %v1144 = vunpack.c.l.b16 %v1124
        %v1145 = vunpack.c.l.b16 %v1125
        %v1146 = vunpack.c.l.b16 %v1126
        %v1147 = vunpack.c.h.b16 %v1122
        %v1148 = vunpack.c.h.b16 %v1123
        %v1149 = vunpack.c.h.b16 %v1124
        %v1150 = vunpack.c.h.b16 %v1125
        %v1151 = vunpack.c.h.b16 %v1126
        %v1152 = vunpack.c.l.b16 %v1127
        %v1153 = vunpack.c.l.b16 %v1128
        %v1154 = vunpack.c.l.b16 %v1129
        %v1155 = vunpack.c.l.b16 %v1130
        %v1156 = vunpack.c.l.b16 %v1131
        %v1157 = vunpack.c.h.b16 %v1127
        %v1158 = vunpack.c.h.b16 %v1128
        %v1159 = vunpack.c.h.b16 %v1129
        %v1160 = vunpack.c.h.b16 %v1130
        %v1161 = vunpack.c.h.b16 %v1131
        %v1162 = vpack.c.b16 %v1143, %v1142
        %v1163 = vpack.c.b16 %v1145, %v1144
        %v1164 = vpack.c.b16 %v1146, %v1146
        %v1165 = vpack.c.b16 %v1148, %v1147
        %v1166 = vpack.c.b16 %v1150, %v1149
        %v1167 = vpack.c.b16 %v1151, %v1151
        %v1168 = vpack.c.b16 %v1153, %v1152
        %v1169 = vpack.c.b16 %v1155, %v1154
        %v1170 = vpack.c.b16 %v1156, %v1156
        %v1171 = vpack.c.b16 %v1158, %v1157
        %v1172 = vpack.c.b16 %v1160, %v1159
        %v1173 = vpack.c.b16 %v1161, %v1161
        %1186 = vst [vmem:[%s383] sm:$0xff] %v1162
        %1187 = vst [vmem:[%s383 + $0x8] sm:$0xff] %v1163
        %1188 = vst [vmem:[%s383 + $0x10] sm:$0xf] %v1164
        %1189 = vst [vmem:[%s383 + $0x14] sm:$0xff] %v1165
        %1190 = vst [vmem:[%s383 + $0x1c] sm:$0xff] %v1166
        %1191 = vst [vmem:[%s383 + $0x24] sm:$0xf] %v1167
        %1192 = vst [vmem:[%s383 + $0x28] sm:$0xff] %v1168
        %1193 = vst [vmem:[%s383 + $0x30] sm:$0xff] %v1169
        %1194 = vst [vmem:[%s383 + $0x38] sm:$0xf] %v1170
        %1195 = vst [vmem:[%s383 + $0x3c] sm:$0xff] %v1171
        %1196 = vst [vmem:[%s383 + $0x44] sm:$0xff] %v1172
        %1197 = vst [vmem:[%s383 + $0x4c] sm:$0xf] %v1173
        %s1198 = sand.u32 %s90, 1
        %s1199 = sand.u32 %s90, 1
        %s1200 = smul.addr %s1199, 80
        %s1201 = scalar_lea.vmem [#allocation3], %s1200
        // Predicated region
        $region59: #{capsnet_forward.2} parent=53 // pred_check
          %p1202 = pneg %p100
        $region60: #{capsnet_forward.2} parent=53 // pred_check_branch
          %1204 = sbr.rel (%p1202) target = $region62
        $region61: #{capsnet_forward.2} parent=53 // pred_region
          %s1205 = smul.u32 5, %s14
          %s1206 = smul.addr %s1205, 4
          %s1207 = scalar_lea.vmem %s3, %s1206
          // Predicated region
          $region63: #{capsnet_forward.2} parent=61 // pred_check
            _
          $region64: #{capsnet_forward.2} parent=61 // pred_check_branch
            %1209 = sbr.rel (0) target = $region66
          $region65: #{capsnet_forward.2} parent=61 // pred_region
            // Predicated region
            $region67: #{capsnet_forward.2} parent=65 // pred_check
              _
            $region68: #{capsnet_forward.2} parent=65 // pred_check_branch
              %1211 = sbr.rel (0) target = $region70
            $region69: #{capsnet_forward.2} parent=65 // pred_region
              %s1212 = scalar_lea.vmem %s1201, 16 [#allocation3]
              %s1213 = scalar_lea.vmem %s1207, 16
              loop: start=0, step=1, limit=1
              $region71: #{capsnet_forward.2} parent=69 // loop_pre_header
                _
              $region72: #{capsnet_forward.2} parent=69 // loop_header
                %s1215 = sphi 0, %s1219
                %p1216 = scmp.ge.s32.totalorder %s1215, 1
                %s1220 = sphi %s1201, %s1201
                %s1221 = sphi %s1207, %s1207
              $region73: #{capsnet_forward.2} parent=69 // loop_header_branch
                %1218 = sbr.rel (%p1216) target = $region77
              $region74: #{capsnet_forward.2} parent=69 // loop_body
                %v1222 = vld [vmem:[%s1220] sm:$0xff]
                %1223 = vst [vmem:[%s1221] sm:$0xff] %v1222
                %v1224 = vld [vmem:[%s1220 + $0x8] sm:$0xff]
                %1225 = vst [vmem:[%s1221 + $0x8] sm:$0xff] %v1224
                %v1226 = vld [vmem:[%s1220 + $0x14] sm:$0xff]
                %1227 = vst [vmem:[%s1221 + $0x28] sm:$0xff] %v1226
                %v1228 = vld [vmem:[%s1220 + $0x1c] sm:$0xff]
                %1229 = vst [vmem:[%s1221 + $0x30] sm:$0xff] %v1228
                %v1230 = vld [vmem:[%s1220 + $0x28] sm:$0xff]
                %1231 = vst [vmem:[%s1221 + $0x50] sm:$0xff] %v1230
                %v1232 = vld [vmem:[%s1220 + $0x30] sm:$0xff]
                %1233 = vst [vmem:[%s1221 + $0x58] sm:$0xff] %v1232
                %v1234 = vld [vmem:[%s1220 + $0x3c] sm:$0xff]
                %1235 = vst [vmem:[%s1221 + $0x78] sm:$0xff] %v1234
                %v1236 = vld [vmem:[%s1220 + $0x44] sm:$0xff]
                %1237 = vst [vmem:[%s1221 + $0x80] sm:$0xff] %v1236
              $region75: #{capsnet_forward.2} parent=69 // loop_footer
                %s1219 = sadd.s32 1, %s1215
              $region76: #{capsnet_forward.2} parent=69 // loop_footer_branch
                %1214 = sbr.rel target = $region72
              $region77: #{capsnet_forward.2} parent=69 // loop_exit
                _
              loop: start=0, step=1, limit=1
              $region78: #{capsnet_forward.2} parent=69 // loop_pre_header
                _
              $region79: #{capsnet_forward.2} parent=69 // loop_header
                %s1240 = sphi 0, %s1244
                %p1241 = scmp.ge.s32.totalorder %s1240, 1
                %s1245 = sphi %s1212, %s1212
                %s1246 = sphi %s1213, %s1213
              $region80: #{capsnet_forward.2} parent=69 // loop_header_branch
                %1243 = sbr.rel (%p1241) target = $region84
              $region81: #{capsnet_forward.2} parent=69 // loop_body
                %v1247 = vld [vmem:[%s1245] sm:$0xf]
                %1248 = vst [vmem:[%s1246] sm:$0xf] %v1247
                %v1249 = vld [vmem:[%s1245 + $0x14] sm:$0xf]
                %1250 = vst [vmem:[%s1246 + $0x28] sm:$0xf] %v1249
                %v1251 = vld [vmem:[%s1245 + $0x28] sm:$0xf]
                %1252 = vst [vmem:[%s1246 + $0x50] sm:$0xf] %v1251
                %v1253 = vld [vmem:[%s1245 + $0x3c] sm:$0xf]
                %1254 = vst [vmem:[%s1246 + $0x78] sm:$0xf] %v1253
              $region82: #{capsnet_forward.2} parent=69 // loop_footer
                %s1244 = sadd.s32 1, %s1240
              $region83: #{capsnet_forward.2} parent=69 // loop_footer_branch
                %1239 = sbr.rel target = $region79
              $region84: #{capsnet_forward.2} parent=69 // loop_exit
                _
            $region70: #{capsnet_forward.2} parent=65 // pred_fallthru
              _
          $region66: #{capsnet_forward.2} parent=61 // pred_fallthru
            _
          %1255 = vnop
        $region62: #{capsnet_forward.2} parent=53 // pred_fallthru
          _
      $region54: #{capsnet_forward.2} parent=5 // pred_fallthru
        _
      %p1256 = scmp.le.s32.totalorder 2, %s9
      // Predicated region
      $region85: #{capsnet_forward.2} parent=5 // pred_check
        %p1257 = pneg %p1256
      $region86: #{capsnet_forward.2} parent=5 // pred_check_branch
        %1259 = sbr.rel (%p1257) target = $region88
      $region87: #{capsnet_forward.2} parent=5 // pred_region
        %s1260 = ssub.s32 %s9, 2
        // Predicated region
        $region89: #{capsnet_forward.2} parent=87 // pred_check
          %p1261 = pneg %p106
        $region90: #{capsnet_forward.2} parent=87 // pred_check_branch
          %1263 = sbr.rel (%p1261) target = $region92
        $region91: #{capsnet_forward.2} parent=87 // pred_region
          %s1264 = sand.u32 %s91, 1
          %s1265 = sand.u32 %s91, 1
          %s1266 = smul.addr %s1265, 80
          %s1267 = scalar_lea.vmem [#allocation3], %s1266
        $region92: #{capsnet_forward.2} parent=87 // pred_fallthru
          _
      $region88: #{capsnet_forward.2} parent=5 // pred_fallthru
        _
    $region6: #{capsnet_forward.2} parent=1 // loop_footer
      %s13 = sadd.s32 1, %s9
    $region7: #{capsnet_forward.2} parent=1 // loop_footer_branch
      %8 = sbr.rel target = $region3
    $region8: #{capsnet_forward.2} parent=1 // loop_exit
      _

// kernel: capsnet_forward.3
$region0: #{capsnet_forward.3}
  #allocation0 [shape = 'u32[]', space=smem, size = 0x4, offset = 0x4, fixed_abs, tag = 'smem constant byte address 0x4 - core index']
  #allocation1 [shape = 'u32[144,128]{1,0:T(1,128)}', space=vmem, size = 0x12000, scoped, tag = 'internal scratch']
  %s0 = inlined_call_operand.vmem [shape: bf16[64,2688], index: 0, kind: input, shape index: {}]
  %s1 = inlined_call_operand.vmem [shape: bf16[2688,162], index: 1, kind: input, shape index: {}]
  %s2 = inlined_call_operand.vmem [shape: f32[64,1], index: 2, kind: input, shape index: {}]
  %s3 = inlined_call_operand.vmem [shape: bf16[64,162], index: 3, kind: output, shape index: {}]
  %s4 = sld [smem:[#allocation0]]
  $region123: #{capsnet_forward.3} parent=0
    _
  %s6 = ssub.s32 1, %s4
  %s7 = scalar_select 0, %s6, %s4
  $region1: #{capsnet_forward.3} parent=0
    #allocation2 [shape = 'u8[1376256]{0}', space=vmem, size = 0x150000, scoped, tag = 'input window, operand 1']
    #allocation3 [shape = 'u8[32768]{0}', space=vmem, size = 0x8000, scoped, tag = 'output window, operand 0']
    loop: start=0, step=1, limit=4
    $region2: #{capsnet_forward.3} parent=1 // loop_pre_header
      _
    $region3: #{capsnet_forward.3} parent=1 // loop_header
      %s9 = sphi 0, %s13
      %p10 = scmp.ge.s32.totalorder %s9, 4
      %s17 = sphi 0, %s17
      %s19 = sphi 0, %s17
      %s20 = sphi 0, %s19
      %s34 = sphi 0, %s20
      %s40 = sphi 0, %s42
      %s43 = sphi 0, %s40
      %s44 = sphi 0, %s43
      %s60 = sphi 0, %s44
      %s64 = sphi 0, %s64
      %s66 = sphi 0, %s64
      %s67 = sphi 0, %s66
      %s81 = sphi 0, %s67
      %s87 = sphi 0, %s89
      %s90 = sphi 0, %s87
      %s91 = sphi 0, %s90
      %s107 = sphi 0, %s91
    $region4: #{capsnet_forward.3} parent=1 // loop_header_branch
      %12 = sbr.rel (%p10) target = $region8
    $region5: #{capsnet_forward.3} parent=1 // loop_body
      %s14 = ssub.s32 %s9, 1
      %s15 = ssub.s32 %s9, 2
      %s16 = sadd.s32 %s9, 1
      %s18 = sadd.s32 %s17, 1
      %p21 = scmp.eq.s32.totalorder %s9, 1
      %p22 = scmp.ne.s32.totalorder %s17, %s19
      %p23 = scmp.eq.s32.totalorder %s9, 0
      %p24 = por %p22, %p23
      %p25 = scmp.ne.s32.totalorder %s17, %s19
      %p26 = scmp.eq.s32.totalorder %s14, 1
      %p27 = por %p25, %p26
      %p28 = scmp.ne.s32.totalorder %s19, %s20
      %p29 = scmp.eq.s32.totalorder %s14, 0
      %p30 = por %p28, %p29
      %p31 = scmp.ne.s32.totalorder %s19, %s20
      %p32 = scmp.eq.s32.totalorder %s15, 1
      %p33 = por %p31, %p32
      %p35 = scmp.ne.s32.totalorder %s20, %s34
      %p36 = scmp.eq.s32.totalorder %s15, 0
      %p37 = por %p35, %p36
      %s38 = ssub.s32 %s9, %s16
      %p39 = scmp.eq.s32.totalorder %s38, 0
      %s41 = sadd.s32 %s40, 1
      %s42 = scalar_select %p39, %s40, %s41
      %p45 = pneg %p39
      %p46 = scmp.eq.s32.totalorder %s9, 1
      %p47 = por %p45, %p46
      %p48 = scmp.ne.s32.totalorder %s40, %s43
      %p49 = scmp.eq.s32.totalorder %s9, 0
      %p50 = por %p48, %p49
      %p51 = scmp.ne.s32.totalorder %s40, %s43
      %p52 = scmp.eq.s32.totalorder %s14, 1
      %p53 = por %p51, %p52
      %p54 = scmp.ne.s32.totalorder %s43, %s44
      %p55 = scmp.eq.s32.totalorder %s14, 0
      %p56 = por %p54, %p55
      %p57 = scmp.ne.s32.totalorder %s43, %s44
      %p58 = scmp.eq.s32.totalorder %s15, 1
      %p59 = por %p57, %p58
      %p61 = scmp.ne.s32.totalorder %s44, %s60
      %p62 = scmp.eq.s32.totalorder %s15, 0
      %p63 = por %p61, %p62
      %s65 = sadd.s32 %s64, 1
      %p68 = scmp.eq.s32.totalorder %s9, 1
      %p69 = scmp.ne.s32.totalorder %s64, %s66
      %p70 = scmp.eq.s32.totalorder %s9, 0
      %p71 = por %p69, %p70
      %p72 = scmp.ne.s32.totalorder %s64, %s66
      %p73 = scmp.eq.s32.totalorder %s14, 1
      %p74 = por %p72, %p73
      %p75 = scmp.ne.s32.totalorder %s66, %s67
      %p76 = scmp.eq.s32.totalorder %s14, 0
      %p77 = por %p75, %p76
      %p78 = scmp.ne.s32.totalorder %s66, %s67
      %p79 = scmp.eq.s32.totalorder %s15, 1
      %p80 = por %p78, %p79
      %p82 = scmp.ne.s32.totalorder %s67, %s81
      %p83 = scmp.eq.s32.totalorder %s15, 0
      %p84 = por %p82, %p83
      %s85 = ssub.s32 %s9, %s16
      %p86 = scmp.eq.s32.totalorder %s85, 0
      %s88 = sadd.s32 %s87, 1
      %s89 = scalar_select %p86, %s87, %s88
      %p92 = pneg %p86
      %p93 = scmp.eq.s32.totalorder %s9, 1
      %p94 = por %p92, %p93
      %p95 = scmp.ne.s32.totalorder %s87, %s90
      %p96 = scmp.eq.s32.totalorder %s9, 0
      %p97 = por %p95, %p96
      %p98 = scmp.ne.s32.totalorder %s87, %s90
      %p99 = scmp.eq.s32.totalorder %s14, 1
      %p100 = por %p98, %p99
      %p101 = scmp.ne.s32.totalorder %s90, %s91
      %p102 = scmp.eq.s32.totalorder %s14, 0
      %p103 = por %p101, %p102
      %p104 = scmp.ne.s32.totalorder %s90, %s91
      %p105 = scmp.eq.s32.totalorder %s15, 1
      %p106 = por %p104, %p105
      %p108 = scmp.ne.s32.totalorder %s91, %s107
      %p109 = scmp.eq.s32.totalorder %s15, 0
      %p110 = por %p108, %p109
      %p111 = scmp.le.s32.totalorder 1, %s9
      %p112 = scmp.lt.s32.totalorder %s9, 3
      %p113 = pnand %p111, %p112
      %p114 = pneg %p113
      // Predicated region
      $region9: #{capsnet_forward.3} parent=5 // pred_check
        _
      $region10: #{capsnet_forward.3} parent=5 // pred_check_branch
        %116 = sbr.rel (%p113) target = $region12
      $region11: #{capsnet_forward.3} parent=5 // pred_region
        %s117 = ssub.s32 %s9, 1
        // Predicated region
        $region13: #{capsnet_forward.3} parent=11 // pred_check
          %p118 = pneg %p30
        $region14: #{capsnet_forward.3} parent=11 // pred_check_branch
          %120 = sbr.rel (%p118) target = $region16
        $region15: #{capsnet_forward.3} parent=11 // pred_region
          _
        $region16: #{capsnet_forward.3} parent=11 // pred_fallthru
          _
        // Predicated region
        $region17: #{capsnet_forward.3} parent=11 // pred_check
          %p121 = pneg %p77
        $region18: #{capsnet_forward.3} parent=11 // pred_check_branch
          %123 = sbr.rel (%p121) target = $region20
        $region19: #{capsnet_forward.3} parent=11 // pred_region
          _
        $region20: #{capsnet_forward.3} parent=11 // pred_fallthru
          _
      $region12: #{capsnet_forward.3} parent=5 // pred_fallthru
        _
      %p124 = scmp.lt.s32.totalorder %s9, 2
      // Predicated region
      $region21: #{capsnet_forward.3} parent=5 // pred_check
        %p125 = pneg %p124
      $region22: #{capsnet_forward.3} parent=5 // pred_check_branch
        %127 = sbr.rel (%p125) target = $region24
      $region23: #{capsnet_forward.3} parent=5 // pred_region
        // Predicated region
        $region25: #{capsnet_forward.3} parent=23 // pred_check
          %p128 = pneg %p50
        $region26: #{capsnet_forward.3} parent=23 // pred_check_branch
          %130 = sbr.rel (%p128) target = $region28
        $region27: #{capsnet_forward.3} parent=23 // pred_region
          %s131 = sand.u32 %s40, 1
          %s132 = sand.u32 %s40, 1
          %s133 = smul.addr %s132, 1344
          %s134 = scalar_lea.vmem [#allocation2], %s133
          %s135 = smul.addr %s9, 4
          %s136 = scalar_lea.vmem %s1, %s135
          // Predicated region
          $region29: #{capsnet_forward.3} parent=27 // pred_check
            _
          $region30: #{capsnet_forward.3} parent=27 // pred_check_branch
            %138 = sbr.rel (0) target = $region32
          $region31: #{capsnet_forward.3} parent=27 // pred_region
            // Predicated region
            $region33: #{capsnet_forward.3} parent=31 // pred_check
              _
            $region34: #{capsnet_forward.3} parent=31 // pred_check_branch
              %140 = sbr.rel target = $region36
            $region35: #{capsnet_forward.3} parent=31 // pred_region
              // Predicated region
              $region48: #{capsnet_forward.3} parent=35 // pred_check
                _
              $region49: #{capsnet_forward.3} parent=35 // pred_check_branch
                %825 = sbr.rel (0) target = $region51
              $region50: #{capsnet_forward.3} parent=35 // pred_region
                loop: start=0, step=1, limit=1
                $region52: #{capsnet_forward.3} parent=50 // loop_pre_header
                  _
                $region53: #{capsnet_forward.3} parent=50 // loop_header
                  %s827 = sphi 0, %s831
                  %p828 = scmp.ge.s32.totalorder %s827, 1
                  %s832 = sphi %s136, %s136
                  %s833 = sphi %s134, %s134
                $region54: #{capsnet_forward.3} parent=50 // loop_header_branch
                  %830 = sbr.rel (%p828) target = $region58
                $region55: #{capsnet_forward.3} parent=50 // loop_body
                  _
                $region56: #{capsnet_forward.3} parent=50 // loop_footer
                  %s831 = sadd.s32 1, %s827
                $region57: #{capsnet_forward.3} parent=50 // loop_footer_branch
                  %826 = sbr.rel target = $region53
                $region58: #{capsnet_forward.3} parent=50 // loop_exit
                  _
                loop: start=0, step=1, limit=1
                $region59: #{capsnet_forward.3} parent=50 // loop_pre_header
                  _
                $region60: #{capsnet_forward.3} parent=50 // loop_header
                  %s836 = sphi 0, %s840
                  %p837 = scmp.ge.s32.totalorder %s836, 1
                  %s841 = sphi %s136, %s136
                  %s842 = sphi %s134, %s134
                $region61: #{capsnet_forward.3} parent=50 // loop_header_branch
                  %839 = sbr.rel (%p837) target = $region65
                $region62: #{capsnet_forward.3} parent=50 // loop_body
                  %v843 = vld [vmem:[%s841] sm:$0xf]
                  %844 = vst [vmem:[%s842] sm:$0xf] %v843
                  %v845 = vld [vmem:[%s841 + $0x8] sm:$0xf]
                  %846 = vst [vmem:[%s842 + $0x4] sm:$0xf] %v845
                  %v847 = vld [vmem:[%s841 + $0x10] sm:$0xf]
                  %848 = vst [vmem:[%s842 + $0x8] sm:$0xf] %v847
                  %v849 = vld [vmem:[%s841 + $0x18] sm:$0xf]
                  %850 = vst [vmem:[%s842 + $0xc] sm:$0xf] %v849
                  %v851 = vld [vmem:[%s841 + $0x20] sm:$0xf]
                  %852 = vst [vmem:[%s842 + $0x10] sm:$0xf] %v851
                  %v853 = vld [vmem:[%s841 + $0x28] sm:$0xf]
                  %854 = vst [vmem:[%s842 + $0x14] sm:$0xf] %v853
                  %v855 = vld [vmem:[%s841 + $0x30] sm:$0xf]
                  %856 = vst [vmem:[%s842 + $0x18] sm:$0xf] %v855
                  %v857 = vld [vmem:[%s841 + $0x38] sm:$0xf]
                  %858 = vst [vmem:[%s842 + $0x1c] sm:$0xf] %v857
                  %v859 = vld [vmem:[%s841 + $0x40] sm:$0xf]
                  %860 = vst [vmem:[%s842 + $0x20] sm:$0xf] %v859
                  %v861 = vld [vmem:[%s841 + $0x48] sm:$0xf]
                  %862 = vst [vmem:[%s842 + $0x24] sm:$0xf] %v861
                  %v863 = vld [vmem:[%s841 + $0x50] sm:$0xf]
                  %864 = vst [vmem:[%s842 + $0x28] sm:$0xf] %v863
                  %v865 = vld [vmem:[%s841 + $0x58] sm:$0xf]
                  %866 = vst [vmem:[%s842 + $0x2c] sm:$0xf] %v865
                  %v867 = vld [vmem:[%s841 + $0x60] sm:$0xf]
                  %868 = vst [vmem:[%s842 + $0x30] sm:$0xf] %v867
                  %v869 = vld [vmem:[%s841 + $0x68] sm:$0xf]
                  %870 = vst [vmem:[%s842 + $0x34] sm:$0xf] %v869
                  %v871 = vld [vmem:[%s841 + $0x70] sm:$0xf]
                  %872 = vst [vmem:[%s842 + $0x38] sm:$0xf] %v871
                  %v873 = vld [vmem:[%s841 + $0x78] sm:$0xf]
                  %874 = vst [vmem:[%s842 + $0x3c] sm:$0xf] %v873
                  %v875 = vld [vmem:[%s841 + $0x80] sm:$0xf]
                  %876 = vst [vmem:[%s842 + $0x40] sm:$0xf] %v875
                  %v877 = vld [vmem:[%s841 + $0x88] sm:$0xf]
                  %878 = vst [vmem:[%s842 + $0x44] sm:$0xf] %v877
                  %v879 = vld [vmem:[%s841 + $0x90] sm:$0xf]
                  %880 = vst [vmem:[%s842 + $0x48] sm:$0xf] %v879
                  %v881 = vld [vmem:[%s841 + $0x98] sm:$0xf]
                  %882 = vst [vmem:[%s842 + $0x4c] sm:$0xf] %v881
                  %v883 = vld [vmem:[%s841 + $0xa0] sm:$0xf]
                  %884 = vst [vmem:[%s842 + $0x50] sm:$0xf] %v883
                  %v885 = vld [vmem:[%s841 + $0xa8] sm:$0xf]
                  %886 = vst [vmem:[%s842 + $0x54] sm:$0xf] %v885
                  %v887 = vld [vmem:[%s841 + $0xb0] sm:$0xf]
                  %888 = vst [vmem:[%s842 + $0x58] sm:$0xf] %v887
                  %v889 = vld [vmem:[%s841 + $0xb8] sm:$0xf]
                  %890 = vst [vmem:[%s842 + $0x5c] sm:$0xf] %v889
                  %v891 = vld [vmem:[%s841 + $0xc0] sm:$0xf]
                  %892 = vst [vmem:[%s842 + $0x60] sm:$0xf] %v891
                  %v893 = vld [vmem:[%s841 + $0xc8] sm:$0xf]
                  %894 = vst [vmem:[%s842 + $0x64] sm:$0xf] %v893
                  %v895 = vld [vmem:[%s841 + $0xd0] sm:$0xf]
                  %896 = vst [vmem:[%s842 + $0x68] sm:$0xf] %v895
                  %v897 = vld [vmem:[%s841 + $0xd8] sm:$0xf]
                  %898 = vst [vmem:[%s842 + $0x6c] sm:$0xf] %v897
                  %v899 = vld [vmem:[%s841 + $0xe0] sm:$0xf]
                  %900 = vst [vmem:[%s842 + $0x70] sm:$0xf] %v899
                  %v901 = vld [vmem:[%s841 + $0xe8] sm:$0xf]
                  %902 = vst [vmem:[%s842 + $0x74] sm:$0xf] %v901
                  %v903 = vld [vmem:[%s841 + $0xf0] sm:$0xf]
                  %904 = vst [vmem:[%s842 + $0x78] sm:$0xf] %v903
                  %v905 = vld [vmem:[%s841 + $0xf8] sm:$0xf]
                  %906 = vst [vmem:[%s842 + $0x7c] sm:$0xf] %v905
                  %v907 = vld [vmem:[%s841 + $0x100] sm:$0xf]
                  %908 = vst [vmem:[%s842 + $0x80] sm:$0xf] %v907
                  %v909 = vld [vmem:[%s841 + $0x108] sm:$0xf]
                  %910 = vst [vmem:[%s842 + $0x84] sm:$0xf] %v909
                  %v911 = vld [vmem:[%s841 + $0x110] sm:$0xf]
                  %912 = vst [vmem:[%s842 + $0x88] sm:$0xf] %v911
                  %v913 = vld [vmem:[%s841 + $0x118] sm:$0xf]
                  %914 = vst [vmem:[%s842 + $0x8c] sm:$0xf] %v913
                  %v915 = vld [vmem:[%s841 + $0x120] sm:$0xf]
                  %916 = vst [vmem:[%s842 + $0x90] sm:$0xf] %v915
                  %v917 = vld [vmem:[%s841 + $0x128] sm:$0xf]
                  %918 = vst [vmem:[%s842 + $0x94] sm:$0xf] %v917
                  %v919 = vld [vmem:[%s841 + $0x130] sm:$0xf]
                  %920 = vst [vmem:[%s842 + $0x98] sm:$0xf] %v919
                  %v921 = vld [vmem:[%s841 + $0x138] sm:$0xf]
                  %922 = vst [vmem:[%s842 + $0x9c] sm:$0xf] %v921
                  %v923 = vld [vmem:[%s841 + $0x140] sm:$0xf]
                  %924 = vst [vmem:[%s842 + $0xa0] sm:$0xf] %v923
                  %v925 = vld [vmem:[%s841 + $0x148] sm:$0xf]
                  %926 = vst [vmem:[%s842 + $0xa4] sm:$0xf] %v925
                  %v927 = vld [vmem:[%s841 + $0x150] sm:$0xf]
                  %928 = vst [vmem:[%s842 + $0xa8] sm:$0xf] %v927
                  %v929 = vld [vmem:[%s841 + $0x158] sm:$0xf]
                  %930 = vst [vmem:[%s842 + $0xac] sm:$0xf] %v929
                  %v931 = vld [vmem:[%s841 + $0x160] sm:$0xf]
                  %932 = vst [vmem:[%s842 + $0xb0] sm:$0xf] %v931
                  %v933 = vld [vmem:[%s841 + $0x168] sm:$0xf]
                  %934 = vst [vmem:[%s842 + $0xb4] sm:$0xf] %v933
                  %v935 = vld [vmem:[%s841 + $0x170] sm:$0xf]
                  %936 = vst [vmem:[%s842 + $0xb8] sm:$0xf] %v935
                  %v937 = vld [vmem:[%s841 + $0x178] sm:$0xf]
                  %938 = vst [vmem:[%s842 + $0xbc] sm:$0xf] %v937
                  %v939 = vld [vmem:[%s841 + $0x180] sm:$0xf]
                  %940 = vst [vmem:[%s842 + $0xc0] sm:$0xf] %v939
                  %v941 = vld [vmem:[%s841 + $0x188] sm:$0xf]
                  %942 = vst [vmem:[%s842 + $0xc4] sm:$0xf] %v941
                  %v943 = vld [vmem:[%s841 + $0x190] sm:$0xf]
                  %944 = vst [vmem:[%s842 + $0xc8] sm:$0xf] %v943
                  %v945 = vld [vmem:[%s841 + $0x198] sm:$0xf]
                  %946 = vst [vmem:[%s842 + $0xcc] sm:$0xf] %v945
                  %v947 = vld [vmem:[%s841 + $0x1a0] sm:$0xf]
                  %948 = vst [vmem:[%s842 + $0xd0] sm:$0xf] %v947
                  %v949 = vld [vmem:[%s841 + $0x1a8] sm:$0xf]
                  %950 = vst [vmem:[%s842 + $0xd4] sm:$0xf] %v949
                  %v951 = vld [vmem:[%s841 + $0x1b0] sm:$0xf]
                  %952 = vst [vmem:[%s842 + $0xd8] sm:$0xf] %v951
                  %v953 = vld [vmem:[%s841 + $0x1b8] sm:$0xf]
                  %954 = vst [vmem:[%s842 + $0xdc] sm:$0xf] %v953
                  %v955 = vld [vmem:[%s841 + $0x1c0] sm:$0xf]
                  %956 = vst [vmem:[%s842 + $0xe0] sm:$0xf] %v955
                  %v957 = vld [vmem:[%s841 + $0x1c8] sm:$0xf]
                  %958 = vst [vmem:[%s842 + $0xe4] sm:$0xf] %v957
                  %v959 = vld [vmem:[%s841 + $0x1d0] sm:$0xf]
                  %960 = vst [vmem:[%s842 + $0xe8] sm:$0xf] %v959
                  %v961 = vld [vmem:[%s841 + $0x1d8] sm:$0xf]
                  %962 = vst [vmem:[%s842 + $0xec] sm:$0xf] %v961
                  %v963 = vld [vmem:[%s841 + $0x1e0] sm:$0xf]
                  %964 = vst [vmem:[%s842 + $0xf0] sm:$0xf] %v963
                  %v965 = vld [vmem:[%s841 + $0x1e8] sm:$0xf]
                  %966 = vst [vmem:[%s842 + $0xf4] sm:$0xf] %v965
                  %v967 = vld [vmem:[%s841 + $0x1f0] sm:$0xf]
                  %968 = vst [vmem:[%s842 + $0xf8] sm:$0xf] %v967
                  %v969 = vld [vmem:[%s841 + $0x1f8] sm:$0xf]
                  %970 = vst [vmem:[%s842 + $0xfc] sm:$0xf] %v969
                  %v971 = vld [vmem:[%s841 + $0x200] sm:$0xf]
                  %972 = vst [vmem:[%s842 + $0x100] sm:$0xf] %v971
                  %v973 = vld [vmem:[%s841 + $0x208] sm:$0xf]
                  %974 = vst [vmem:[%s842 + $0x104] sm:$0xf] %v973
                  %v975 = vld [vmem:[%s841 + $0x210] sm:$0xf]
                  %976 = vst [vmem:[%s842 + $0x108] sm:$0xf] %v975
                  %v977 = vld [vmem:[%s841 + $0x218] sm:$0xf]
                  %978 = vst [vmem:[%s842 + $0x10c] sm:$0xf] %v977
                  %v979 = vld [vmem:[%s841 + $0x220] sm:$0xf]
                  %980 = vst [vmem:[%s842 + $0x110] sm:$0xf] %v979
                  %v981 = vld [vmem:[%s841 + $0x228] sm:$0xf]
                  %982 = vst [vmem:[%s842 + $0x114] sm:$0xf] %v981
                  %v983 = vld [vmem:[%s841 + $0x230] sm:$0xf]
                  %984 = vst [vmem:[%s842 + $0x118] sm:$0xf] %v983
                  %v985 = vld [vmem:[%s841 + $0x238] sm:$0xf]
                  %986 = vst [vmem:[%s842 + $0x11c] sm:$0xf] %v985
                  %v987 = vld [vmem:[%s841 + $0x240] sm:$0xf]
                  %988 = vst [vmem:[%s842 + $0x120] sm:$0xf] %v987
                  %v989 = vld [vmem:[%s841 + $0x248] sm:$0xf]
                  %990 = vst [vmem:[%s842 + $0x124] sm:$0xf] %v989
                  %v991 = vld [vmem:[%s841 + $0x250] sm:$0xf]
                  %992 = vst [vmem:[%s842 + $0x128] sm:$0xf] %v991
                  %v993 = vld [vmem:[%s841 + $0x258] sm:$0xf]
                  %994 = vst [vmem:[%s842 + $0x12c] sm:$0xf] %v993
                  %v995 = vld [vmem:[%s841 + $0x260] sm:$0xf]
                  %996 = vst [vmem:[%s842 + $0x130] sm:$0xf] %v995
                  %v997 = vld [vmem:[%s841 + $0x268] sm:$0xf]
                  %998 = vst [vmem:[%s842 + $0x134] sm:$0xf] %v997
                  %v999 = vld [vmem:[%s841 + $0x270] sm:$0xf]
                  %1000 = vst [vmem:[%s842 + $0x138] sm:$0xf] %v999
                  %v1001 = vld [vmem:[%s841 + $0x278] sm:$0xf]
                  %1002 = vst [vmem:[%s842 + $0x13c] sm:$0xf] %v1001
                  %v1003 = vld [vmem:[%s841 + $0x280] sm:$0xf]
                  %1004 = vst [vmem:[%s842 + $0x140] sm:$0xf] %v1003
                  %v1005 = vld [vmem:[%s841 + $0x288] sm:$0xf]
                  %1006 = vst [vmem:[%s842 + $0x144] sm:$0xf] %v1005
                  %v1007 = vld [vmem:[%s841 + $0x290] sm:$0xf]
                  %1008 = vst [vmem:[%s842 + $0x148] sm:$0xf] %v1007
                  %v1009 = vld [vmem:[%s841 + $0x298] sm:$0xf]
                  %1010 = vst [vmem:[%s842 + $0x14c] sm:$0xf] %v1009
                  %v1011 = vld [vmem:[%s841 + $0x2a0] sm:$0xf]
                  %1012 = vst [vmem:[%s842 + $0x150] sm:$0xf] %v1011
                  %v1013 = vld [vmem:[%s841 + $0x2a8] sm:$0xf]
                  %1014 = vst [vmem:[%s842 + $0x154] sm:$0xf] %v1013
                  %v1015 = vld [vmem:[%s841 + $0x2b0] sm:$0xf]
                  %1016 = vst [vmem:[%s842 + $0x158] sm:$0xf] %v1015
                  %v1017 = vld [vmem:[%s841 + $0x2b8] sm:$0xf]
                  %1018 = vst [vmem:[%s842 + $0x15c] sm:$0xf] %v1017
                  %v1019 = vld [vmem:[%s841 + $0x2c0] sm:$0xf]
                  %1020 = vst [vmem:[%s842 + $0x160] sm:$0xf] %v1019
                  %v1021 = vld [vmem:[%s841 + $0x2c8] sm:$0xf]
                  %1022 = vst [vmem:[%s842 + $0x164] sm:$0xf] %v1021
                  %v1023 = vld [vmem:[%s841 + $0x2d0] sm:$0xf]
                  %1024 = vst [vmem:[%s842 + $0x168] sm:$0xf] %v1023
                  %v1025 = vld [vmem:[%s841 + $0x2d8] sm:$0xf]
                  %1026 = vst [vmem:[%s842 + $0x16c] sm:$0xf] %v1025
                  %v1027 = vld [vmem:[%s841 + $0x2e0] sm:$0xf]
                  %1028 = vst [vmem:[%s842 + $0x170] sm:$0xf] %v1027
                  %v1029 = vld [vmem:[%s841 + $0x2e8] sm:$0xf]
                  %1030 = vst [vmem:[%s842 + $0x174] sm:$0xf] %v1029
                  %v1031 = vld [vmem:[%s841 + $0x2f0] sm:$0xf]
                  %1032 = vst [vmem:[%s842 + $0x178] sm:$0xf] %v1031
                  %v1033 = vld [vmem:[%s841 + $0x2f8] sm:$0xf]
                  %1034 = vst [vmem:[%s842 + $0x17c] sm:$0xf] %v1033
                  %v1035 = vld [vmem:[%s841 + $0x300] sm:$0xf]
                  %1036 = vst [vmem:[%s842 + $0x180] sm:$0xf] %v1035
                  %v1037 = vld [vmem:[%s841 + $0x308] sm:$0xf]
                  %1038 = vst [vmem:[%s842 + $0x184] sm:$0xf] %v1037
                  %v1039 = vld [vmem:[%s841 + $0x310] sm:$0xf]
                  %1040 = vst [vmem:[%s842 + $0x188] sm:$0xf] %v1039
                  %v1041 = vld [vmem:[%s841 + $0x318] sm:$0xf]
                  %1042 = vst [vmem:[%s842 + $0x18c] sm:$0xf] %v1041
                  %v1043 = vld [vmem:[%s841 + $0x320] sm:$0xf]
                  %1044 = vst [vmem:[%s842 + $0x190] sm:$0xf] %v1043
                  %v1045 = vld [vmem:[%s841 + $0x328] sm:$0xf]
                  %1046 = vst [vmem:[%s842 + $0x194] sm:$0xf] %v1045
                  %v1047 = vld [vmem:[%s841 + $0x330] sm:$0xf]
                  %1048 = vst [vmem:[%s842 + $0x198] sm:$0xf] %v1047
                  %v1049 = vld [vmem:[%s841 + $0x338] sm:$0xf]
                  %1050 = vst [vmem:[%s842 + $0x19c] sm:$0xf] %v1049
                  %v1051 = vld [vmem:[%s841 + $0x340] sm:$0xf]
                  %1052 = vst [vmem:[%s842 + $0x1a0] sm:$0xf] %v1051
                  %v1053 = vld [vmem:[%s841 + $0x348] sm:$0xf]
                  %1054 = vst [vmem:[%s842 + $0x1a4] sm:$0xf] %v1053
                  %v1055 = vld [vmem:[%s841 + $0x350] sm:$0xf]
                  %1056 = vst [vmem:[%s842 + $0x1a8] sm:$0xf] %v1055
                  %v1057 = vld [vmem:[%s841 + $0x358] sm:$0xf]
                  %1058 = vst [vmem:[%s842 + $0x1ac] sm:$0xf] %v1057
                  %v1059 = vld [vmem:[%s841 + $0x360] sm:$0xf]
                  %1060 = vst [vmem:[%s842 + $0x1b0] sm:$0xf] %v1059
                  %v1061 = vld [vmem:[%s841 + $0x368] sm:$0xf]
                  %1062 = vst [vmem:[%s842 + $0x1b4] sm:$0xf] %v1061
                  %v1063 = vld [vmem:[%s841 + $0x370] sm:$0xf]
                  %1064 = vst [vmem:[%s842 + $0x1b8] sm:$0xf] %v1063
                  %v1065 = vld [vmem:[%s841 + $0x378] sm:$0xf]
                  %1066 = vst [vmem:[%s842 + $0x1bc] sm:$0xf] %v1065
                  %v1067 = vld [vmem:[%s841 + $0x380] sm:$0xf]
                  %1068 = vst [vmem:[%s842 + $0x1c0] sm:$0xf] %v1067
                  %v1069 = vld [vmem:[%s841 + $0x388] sm:$0xf]
                  %1070 = vst [vmem:[%s842 + $0x1c4] sm:$0xf] %v1069
                  %v1071 = vld [vmem:[%s841 + $0x390] sm:$0xf]
                  %1072 = vst [vmem:[%s842 + $0x1c8] sm:$0xf] %v1071
                  %v1073 = vld [vmem:[%s841 + $0x398] sm:$0xf]
                  %1074 = vst [vmem:[%s842 + $0x1cc] sm:$0xf] %v1073
                  %v1075 = vld [vmem:[%s841 + $0x3a0] sm:$0xf]
                  %1076 = vst [vmem:[%s842 + $0x1d0] sm:$0xf] %v1075
                  %v1077 = vld [vmem:[%s841 + $0x3a8] sm:$0xf]
                  %1078 = vst [vmem:[%s842 + $0x1d4] sm:$0xf] %v1077
                  %v1079 = vld [vmem:[%s841 + $0x3b0] sm:$0xf]
                  %1080 = vst [vmem:[%s842 + $0x1d8] sm:$0xf] %v1079
                  %v1081 = vld [vmem:[%s841 + $0x3b8] sm:$0xf]
                  %1082 = vst [vmem:[%s842 + $0x1dc] sm:$0xf] %v1081
                  %v1083 = vld [vmem:[%s841 + $0x3c0] sm:$0xf]
                  %1084 = vst [vmem:[%s842 + $0x1e0] sm:$0xf] %v1083
                  %v1085 = vld [vmem:[%s841 + $0x3c8] sm:$0xf]
                  %1086 = vst [vmem:[%s842 + $0x1e4] sm:$0xf] %v1085
                  %v1087 = vld [vmem:[%s841 + $0x3d0] sm:$0xf]
                  %1088 = vst [vmem:[%s842 + $0x1e8] sm:$0xf] %v1087
                  %v1089 = vld [vmem:[%s841 + $0x3d8] sm:$0xf]
                  %1090 = vst [vmem:[%s842 + $0x1ec] sm:$0xf] %v1089
                  %v1091 = vld [vmem:[%s841 + $0x3e0] sm:$0xf]
                  %1092 = vst [vmem:[%s842 + $0x1f0] sm:$0xf] %v1091
                  %v1093 = vld [vmem:[%s841 + $0x3e8] sm:$0xf]
                  %1094 = vst [vmem:[%s842 + $0x1f4] sm:$0xf] %v1093
                  %v1095 = vld [vmem:[%s841 + $0x3f0] sm:$0xf]
                  %1096 = vst [vmem:[%s842 + $0x1f8] sm:$0xf] %v1095
                  %v1097 = vld [vmem:[%s841 + $0x3f8] sm:$0xf]
                  %1098 = vst [vmem:[%s842 + $0x1fc] sm:$0xf] %v1097
                  %v1099 = vld [vmem:[%s841 + $0x400] sm:$0xf]
                  %1100 = vst [vmem:[%s842 + $0x200] sm:$0xf] %v1099
                  %v1101 = vld [vmem:[%s841 + $0x408] sm:$0xf]
                  %1102 = vst [vmem:[%s842 + $0x204] sm:$0xf] %v1101
                  %v1103 = vld [vmem:[%s841 + $0x410] sm:$0xf]
                  %1104 = vst [vmem:[%s842 + $0x208] sm:$0xf] %v1103
                  %v1105 = vld [vmem:[%s841 + $0x418] sm:$0xf]
                  %1106 = vst [vmem:[%s842 + $0x20c] sm:$0xf] %v1105
                  %v1107 = vld [vmem:[%s841 + $0x420] sm:$0xf]
                  %1108 = vst [vmem:[%s842 + $0x210] sm:$0xf] %v1107
                  %v1109 = vld [vmem:[%s841 + $0x428] sm:$0xf]
                  %1110 = vst [vmem:[%s842 + $0x214] sm:$0xf] %v1109
                  %v1111 = vld [vmem:[%s841 + $0x430] sm:$0xf]
                  %1112 = vst [vmem:[%s842 + $0x218] sm:$0xf] %v1111
                  %v1113 = vld [vmem:[%s841 + $0x438] sm:$0xf]
                  %1114 = vst [vmem:[%s842 + $0x21c] sm:$0xf] %v1113
                  %v1115 = vld [vmem:[%s841 + $0x440] sm:$0xf]
                  %1116 = vst [vmem:[%s842 + $0x220] sm:$0xf] %v1115
                  %v1117 = vld [vmem:[%s841 + $0x448] sm:$0xf]
                  %1118 = vst [vmem:[%s842 + $0x224] sm:$0xf] %v1117
                  %v1119 = vld [vmem:[%s841 + $0x450] sm:$0xf]
                  %1120 = vst [vmem:[%s842 + $0x228] sm:$0xf] %v1119
                  %v1121 = vld [vmem:[%s841 + $0x458] sm:$0xf]
                  %1122 = vst [vmem:[%s842 + $0x22c] sm:$0xf] %v1121
                  %v1123 = vld [vmem:[%s841 + $0x460] sm:$0xf]
                  %1124 = vst [vmem:[%s842 + $0x230] sm:$0xf] %v1123
                  %v1125 = vld [vmem:[%s841 + $0x468] sm:$0xf]
                  %1126 = vst [vmem:[%s842 + $0x234] sm:$0xf] %v1125
                  %v1127 = vld [vmem:[%s841 + $0x470] sm:$0xf]
                  %1128 = vst [vmem:[%s842 + $0x238] sm:$0xf] %v1127
                  %v1129 = vld [vmem:[%s841 + $0x478] sm:$0xf]
                  %1130 = vst [vmem:[%s842 + $0x23c] sm:$0xf] %v1129
                  %v1131 = vld [vmem:[%s841 + $0x480] sm:$0xf]
                  %1132 = vst [vmem:[%s842 + $0x240] sm:$0xf] %v1131
                  %v1133 = vld [vmem:[%s841 + $0x488] sm:$0xf]
                  %1134 = vst [vmem:[%s842 + $0x244] sm:$0xf] %v1133
                  %v1135 = vld [vmem:[%s841 + $0x490] sm:$0xf]
                  %1136 = vst [vmem:[%s842 + $0x248] sm:$0xf] %v1135
                  %v1137 = vld [vmem:[%s841 + $0x498] sm:$0xf]
                  %1138 = vst [vmem:[%s842 + $0x24c] sm:$0xf] %v1137
                  %v1139 = vld [vmem:[%s841 + $0x4a0] sm:$0xf]
                  %1140 = vst [vmem:[%s842 + $0x250] sm:$0xf] %v1139
                  %v1141 = vld [vmem:[%s841 + $0x4a8] sm:$0xf]
                  %1142 = vst [vmem:[%s842 + $0x254] sm:$0xf] %v1141
                  %v1143 = vld [vmem:[%s841 + $0x4b0] sm:$0xf]
                  %1144 = vst [vmem:[%s842 + $0x258] sm:$0xf] %v1143
                  %v1145 = vld [vmem:[%s841 + $0x4b8] sm:$0xf]
                  %1146 = vst [vmem:[%s842 + $0x25c] sm:$0xf] %v1145
                  %v1147 = vld [vmem:[%s841 + $0x4c0] sm:$0xf]
                  %1148 = vst [vmem:[%s842 + $0x260] sm:$0xf] %v1147
                  %v1149 = vld [vmem:[%s841 + $0x4c8] sm:$0xf]
                  %1150 = vst [vmem:[%s842 + $0x264] sm:$0xf] %v1149
                  %v1151 = vld [vmem:[%s841 + $0x4d0] sm:$0xf]
                  %1152 = vst [vmem:[%s842 + $0x268] sm:$0xf] %v1151
                  %v1153 = vld [vmem:[%s841 + $0x4d8] sm:$0xf]
                  %1154 = vst [vmem:[%s842 + $0x26c] sm:$0xf] %v1153
                  %v1155 = vld [vmem:[%s841 + $0x4e0] sm:$0xf]
                  %1156 = vst [vmem:[%s842 + $0x270] sm:$0xf] %v1155
                  %v1157 = vld [vmem:[%s841 + $0x4e8] sm:$0xf]
                  %1158 = vst [vmem:[%s842 + $0x274] sm:$0xf] %v1157
                  %v1159 = vld [vmem:[%s841 + $0x4f0] sm:$0xf]
                  %1160 = vst [vmem:[%s842 + $0x278] sm:$0xf] %v1159
                  %v1161 = vld [vmem:[%s841 + $0x4f8] sm:$0xf]
                  %1162 = vst [vmem:[%s842 + $0x27c] sm:$0xf] %v1161
                  %v1163 = vld [vmem:[%s841 + $0x500] sm:$0xf]
                  %1164 = vst [vmem:[%s842 + $0x280] sm:$0xf] %v1163
                  %v1165 = vld [vmem:[%s841 + $0x508] sm:$0xf]
                  %1166 = vst [vmem:[%s842 + $0x284] sm:$0xf] %v1165
                  %v1167 = vld [vmem:[%s841 + $0x510] sm:$0xf]
                  %1168 = vst [vmem:[%s842 + $0x288] sm:$0xf] %v1167
                  %v1169 = vld [vmem:[%s841 + $0x518] sm:$0xf]
                  %1170 = vst [vmem:[%s842 + $0x28c] sm:$0xf] %v1169
                  %v1171 = vld [vmem:[%s841 + $0x520] sm:$0xf]
                  %1172 = vst [vmem:[%s842 + $0x290] sm:$0xf] %v1171
                  %v1173 = vld [vmem:[%s841 + $0x528] sm:$0xf]
                  %1174 = vst [vmem:[%s842 + $0x294] sm:$0xf] %v1173
                  %v1175 = vld [vmem:[%s841 + $0x530] sm:$0xf]
                  %1176 = vst [vmem:[%s842 + $0x298] sm:$0xf] %v1175
                  %v1177 = vld [vmem:[%s841 + $0x538] sm:$0xf]
                  %1178 = vst [vmem:[%s842 + $0x29c] sm:$0xf] %v1177
                  %v1179 = vld [vmem:[%s841 + $0x540] sm:$0xf]
                  %1180 = vst [vmem:[%s842 + $0x2a0] sm:$0xf] %v1179
                  %v1181 = vld [vmem:[%s841 + $0x548] sm:$0xf]
                  %1182 = vst [vmem:[%s842 + $0x2a4] sm:$0xf] %v1181
                  %v1183 = vld [vmem:[%s841 + $0x550] sm:$0xf]
                  %1184 = vst [vmem:[%s842 + $0x2a8] sm:$0xf] %v1183
                  %v1185 = vld [vmem:[%s841 + $0x558] sm:$0xf]
                  %1186 = vst [vmem:[%s842 + $0x2ac] sm:$0xf] %v1185
                  %v1187 = vld [vmem:[%s841 + $0x560] sm:$0xf]
                  %1188 = vst [vmem:[%s842 + $0x2b0] sm:$0xf] %v1187
                  %v1189 = vld [vmem:[%s841 + $0x568] sm:$0xf]
                  %1190 = vst [vmem:[%s842 + $0x2b4] sm:$0xf] %v1189
                  %v1191 = vld [vmem:[%s841 + $0x570] sm:$0xf]
                  %1192 = vst [vmem:[%s842 + $0x2b8] sm:$0xf] %v1191
                  %v1193 = vld [vmem:[%s841 + $0x578] sm:$0xf]
                  %1194 = vst [vmem:[%s842 + $0x2bc] sm:$0xf] %v1193
                  %v1195 = vld [vmem:[%s841 + $0x580] sm:$0xf]
                  %1196 = vst [vmem:[%s842 + $0x2c0] sm:$0xf] %v1195
                  %v1197 = vld [vmem:[%s841 + $0x588] sm:$0xf]
                  %1198 = vst [vmem:[%s842 + $0x2c4] sm:$0xf] %v1197
                  %v1199 = vld [vmem:[%s841 + $0x590] sm:$0xf]
                  %1200 = vst [vmem:[%s842 + $0x2c8] sm:$0xf] %v1199
                  %v1201 = vld [vmem:[%s841 + $0x598] sm:$0xf]
                  %1202 = vst [vmem:[%s842 + $0x2cc] sm:$0xf] %v1201
                  %v1203 = vld [vmem:[%s841 + $0x5a0] sm:$0xf]
                  %1204 = vst [vmem:[%s842 + $0x2d0] sm:$0xf] %v1203
                  %v1205 = vld [vmem:[%s841 + $0x5a8] sm:$0xf]
                  %1206 = vst [vmem:[%s842 + $0x2d4] sm:$0xf] %v1205
                  %v1207 = vld [vmem:[%s841 + $0x5b0] sm:$0xf]
                  %1208 = vst [vmem:[%s842 + $0x2d8] sm:$0xf] %v1207
                  %v1209 = vld [vmem:[%s841 + $0x5b8] sm:$0xf]
                  %1210 = vst [vmem:[%s842 + $0x2dc] sm:$0xf] %v1209
                  %v1211 = vld [vmem:[%s841 + $0x5c0] sm:$0xf]
                  %1212 = vst [vmem:[%s842 + $0x2e0] sm:$0xf] %v1211
                  %v1213 = vld [vmem:[%s841 + $0x5c8] sm:$0xf]
                  %1214 = vst [vmem:[%s842 + $0x2e4] sm:$0xf] %v1213
                  %v1215 = vld [vmem:[%s841 + $0x5d0] sm:$0xf]
                  %1216 = vst [vmem:[%s842 + $0x2e8] sm:$0xf] %v1215
                  %v1217 = vld [vmem:[%s841 + $0x5d8] sm:$0xf]
                  %1218 = vst [vmem:[%s842 + $0x2ec] sm:$0xf] %v1217
                  %v1219 = vld [vmem:[%s841 + $0x5e0] sm:$0xf]
                  %1220 = vst [vmem:[%s842 + $0x2f0] sm:$0xf] %v1219
                  %v1221 = vld [vmem:[%s841 + $0x5e8] sm:$0xf]
                  %1222 = vst [vmem:[%s842 + $0x2f4] sm:$0xf] %v1221
                  %v1223 = vld [vmem:[%s841 + $0x5f0] sm:$0xf]
                  %1224 = vst [vmem:[%s842 + $0x2f8] sm:$0xf] %v1223
                  %v1225 = vld [vmem:[%s841 + $0x5f8] sm:$0xf]
                  %1226 = vst [vmem:[%s842 + $0x2fc] sm:$0xf] %v1225
                  %v1227 = vld [vmem:[%s841 + $0x600] sm:$0xf]
                  %1228 = vst [vmem:[%s842 + $0x300] sm:$0xf] %v1227
                  %v1229 = vld [vmem:[%s841 + $0x608] sm:$0xf]
                  %1230 = vst [vmem:[%s842 + $0x304] sm:$0xf] %v1229
                  %v1231 = vld [vmem:[%s841 + $0x610] sm:$0xf]
                  %1232 = vst [vmem:[%s842 + $0x308] sm:$0xf] %v1231
                  %v1233 = vld [vmem:[%s841 + $0x618] sm:$0xf]
                  %1234 = vst [vmem:[%s842 + $0x30c] sm:$0xf] %v1233
                  %v1235 = vld [vmem:[%s841 + $0x620] sm:$0xf]
                  %1236 = vst [vmem:[%s842 + $0x310] sm:$0xf] %v1235
                  %v1237 = vld [vmem:[%s841 + $0x628] sm:$0xf]
                  %1238 = vst [vmem:[%s842 + $0x314] sm:$0xf] %v1237
                  %v1239 = vld [vmem:[%s841 + $0x630] sm:$0xf]
                  %1240 = vst [vmem:[%s842 + $0x318] sm:$0xf] %v1239
                  %v1241 = vld [vmem:[%s841 + $0x638] sm:$0xf]
                  %1242 = vst [vmem:[%s842 + $0x31c] sm:$0xf] %v1241
                  %v1243 = vld [vmem:[%s841 + $0x640] sm:$0xf]
                  %1244 = vst [vmem:[%s842 + $0x320] sm:$0xf] %v1243
                  %v1245 = vld [vmem:[%s841 + $0x648] sm:$0xf]
                  %1246 = vst [vmem:[%s842 + $0x324] sm:$0xf] %v1245
                  %v1247 = vld [vmem:[%s841 + $0x650] sm:$0xf]
                  %1248 = vst [vmem:[%s842 + $0x328] sm:$0xf] %v1247
                  %v1249 = vld [vmem:[%s841 + $0x658] sm:$0xf]
                  %1250 = vst [vmem:[%s842 + $0x32c] sm:$0xf] %v1249
                  %v1251 = vld [vmem:[%s841 + $0x660] sm:$0xf]
                  %1252 = vst [vmem:[%s842 + $0x330] sm:$0xf] %v1251
                  %v1253 = vld [vmem:[%s841 + $0x668] sm:$0xf]
                  %1254 = vst [vmem:[%s842 + $0x334] sm:$0xf] %v1253
                  %v1255 = vld [vmem:[%s841 + $0x670] sm:$0xf]
                  %1256 = vst [vmem:[%s842 + $0x338] sm:$0xf] %v1255
                  %v1257 = vld [vmem:[%s841 + $0x678] sm:$0xf]
                  %1258 = vst [vmem:[%s842 + $0x33c] sm:$0xf] %v1257
                  %v1259 = vld [vmem:[%s841 + $0x680] sm:$0xf]
                  %1260 = vst [vmem:[%s842 + $0x340] sm:$0xf] %v1259
                  %v1261 = vld [vmem:[%s841 + $0x688] sm:$0xf]
                  %1262 = vst [vmem:[%s842 + $0x344] sm:$0xf] %v1261
                  %v1263 = vld [vmem:[%s841 + $0x690] sm:$0xf]
                  %1264 = vst [vmem:[%s842 + $0x348] sm:$0xf] %v1263
                  %v1265 = vld [vmem:[%s841 + $0x698] sm:$0xf]
                  %1266 = vst [vmem:[%s842 + $0x34c] sm:$0xf] %v1265
                  %v1267 = vld [vmem:[%s841 + $0x6a0] sm:$0xf]
                  %1268 = vst [vmem:[%s842 + $0x350] sm:$0xf] %v1267
                  %v1269 = vld [vmem:[%s841 + $0x6a8] sm:$0xf]
                  %1270 = vst [vmem:[%s842 + $0x354] sm:$0xf] %v1269
                  %v1271 = vld [vmem:[%s841 + $0x6b0] sm:$0xf]
                  %1272 = vst [vmem:[%s842 + $0x358] sm:$0xf] %v1271
                  %v1273 = vld [vmem:[%s841 + $0x6b8] sm:$0xf]
                  %1274 = vst [vmem:[%s842 + $0x35c] sm:$0xf] %v1273
                  %v1275 = vld [vmem:[%s841 + $0x6c0] sm:$0xf]
                  %1276 = vst [vmem:[%s842 + $0x360] sm:$0xf] %v1275
                  %v1277 = vld [vmem:[%s841 + $0x6c8] sm:$0xf]
                  %1278 = vst [vmem:[%s842 + $0x364] sm:$0xf] %v1277
                  %v1279 = vld [vmem:[%s841 + $0x6d0] sm:$0xf]
                  %1280 = vst [vmem:[%s842 + $0x368] sm:$0xf] %v1279
                  %v1281 = vld [vmem:[%s841 + $0x6d8] sm:$0xf]
                  %1282 = vst [vmem:[%s842 + $0x36c] sm:$0xf] %v1281
                  %v1283 = vld [vmem:[%s841 + $0x6e0] sm:$0xf]
                  %1284 = vst [vmem:[%s842 + $0x370] sm:$0xf] %v1283
                  %v1285 = vld [vmem:[%s841 + $0x6e8] sm:$0xf]
                  %1286 = vst [vmem:[%s842 + $0x374] sm:$0xf] %v1285
                  %v1287 = vld [vmem:[%s841 + $0x6f0] sm:$0xf]
                  %1288 = vst [vmem:[%s842 + $0x378] sm:$0xf] %v1287
                  %v1289 = vld [vmem:[%s841 + $0x6f8] sm:$0xf]
                  %1290 = vst [vmem:[%s842 + $0x37c] sm:$0xf] %v1289
                  %v1291 = vld [vmem:[%s841 + $0x700] sm:$0xf]
                  %1292 = vst [vmem:[%s842 + $0x380] sm:$0xf] %v1291
                  %v1293 = vld [vmem:[%s841 + $0x708] sm:$0xf]
                  %1294 = vst [vmem:[%s842 + $0x384] sm:$0xf] %v1293
                  %v1295 = vld [vmem:[%s841 + $0x710] sm:$0xf]
                  %1296 = vst [vmem:[%s842 + $0x388] sm:$0xf] %v1295
                  %v1297 = vld [vmem:[%s841 + $0x718] sm:$0xf]
                  %1298 = vst [vmem:[%s842 + $0x38c] sm:$0xf] %v1297
                  %v1299 = vld [vmem:[%s841 + $0x720] sm:$0xf]
                  %1300 = vst [vmem:[%s842 + $0x390] sm:$0xf] %v1299
                  %v1301 = vld [vmem:[%s841 + $0x728] sm:$0xf]
                  %1302 = vst [vmem:[%s842 + $0x394] sm:$0xf] %v1301
                  %v1303 = vld [vmem:[%s841 + $0x730] sm:$0xf]
                  %1304 = vst [vmem:[%s842 + $0x398] sm:$0xf] %v1303
                  %v1305 = vld [vmem:[%s841 + $0x738] sm:$0xf]
                  %1306 = vst [vmem:[%s842 + $0x39c] sm:$0xf] %v1305
                  %v1307 = vld [vmem:[%s841 + $0x740] sm:$0xf]
                  %1308 = vst [vmem:[%s842 + $0x3a0] sm:$0xf] %v1307
                  %v1309 = vld [vmem:[%s841 + $0x748] sm:$0xf]
                  %1310 = vst [vmem:[%s842 + $0x3a4] sm:$0xf] %v1309
                  %v1311 = vld [vmem:[%s841 + $0x750] sm:$0xf]
                  %1312 = vst [vmem:[%s842 + $0x3a8] sm:$0xf] %v1311
                  %v1313 = vld [vmem:[%s841 + $0x758] sm:$0xf]
                  %1314 = vst [vmem:[%s842 + $0x3ac] sm:$0xf] %v1313
                  %v1315 = vld [vmem:[%s841 + $0x760] sm:$0xf]
                  %1316 = vst [vmem:[%s842 + $0x3b0] sm:$0xf] %v1315
                  %v1317 = vld [vmem:[%s841 + $0x768] sm:$0xf]
                  %1318 = vst [vmem:[%s842 + $0x3b4] sm:$0xf] %v1317
                  %v1319 = vld [vmem:[%s841 + $0x770] sm:$0xf]
                  %1320 = vst [vmem:[%s842 + $0x3b8] sm:$0xf] %v1319
                  %v1321 = vld [vmem:[%s841 + $0x778] sm:$0xf]
                  %1322 = vst [vmem:[%s842 + $0x3bc] sm:$0xf] %v1321
                  %v1323 = vld [vmem:[%s841 + $0x780] sm:$0xf]
                  %1324 = vst [vmem:[%s842 + $0x3c0] sm:$0xf] %v1323
                  %v1325 = vld [vmem:[%s841 + $0x788] sm:$0xf]
                  %1326 = vst [vmem:[%s842 + $0x3c4] sm:$0xf] %v1325
                  %v1327 = vld [vmem:[%s841 + $0x790] sm:$0xf]
                  %1328 = vst [vmem:[%s842 + $0x3c8] sm:$0xf] %v1327
                  %v1329 = vld [vmem:[%s841 + $0x798] sm:$0xf]
                  %1330 = vst [vmem:[%s842 + $0x3cc] sm:$0xf] %v1329
                  %v1331 = vld [vmem:[%s841 + $0x7a0] sm:$0xf]
                  %1332 = vst [vmem:[%s842 + $0x3d0] sm:$0xf] %v1331
                  %v1333 = vld [vmem:[%s841 + $0x7a8] sm:$0xf]
                  %1334 = vst [vmem:[%s842 + $0x3d4] sm:$0xf] %v1333
                  %v1335 = vld [vmem:[%s841 + $0x7b0] sm:$0xf]
                  %1336 = vst [vmem:[%s842 + $0x3d8] sm:$0xf] %v1335
                  %v1337 = vld [vmem:[%s841 + $0x7b8] sm:$0xf]
                  %1338 = vst [vmem:[%s842 + $0x3dc] sm:$0xf] %v1337
                  %v1339 = vld [vmem:[%s841 + $0x7c0] sm:$0xf]
                  %1340 = vst [vmem:[%s842 + $0x3e0] sm:$0xf] %v1339
                  %v1341 = vld [vmem:[%s841 + $0x7c8] sm:$0xf]
                  %1342 = vst [vmem:[%s842 + $0x3e4] sm:$0xf] %v1341
                  %v1343 = vld [vmem:[%s841 + $0x7d0] sm:$0xf]
                  %1344 = vst [vmem:[%s842 + $0x3e8] sm:$0xf] %v1343
                  %v1345 = vld [vmem:[%s841 + $0x7d8] sm:$0xf]
                  %1346 = vst [vmem:[%s842 + $0x3ec] sm:$0xf] %v1345
                  %v1347 = vld [vmem:[%s841 + $0x7e0] sm:$0xf]
                  %1348 = vst [vmem:[%s842 + $0x3f0] sm:$0xf] %v1347
                  %v1349 = vld [vmem:[%s841 + $0x7e8] sm:$0xf]
                  %1350 = vst [vmem:[%s842 + $0x3f4] sm:$0xf] %v1349
                  %v1351 = vld [vmem:[%s841 + $0x7f0] sm:$0xf]
                  %1352 = vst [vmem:[%s842 + $0x3f8] sm:$0xf] %v1351
                  %v1353 = vld [vmem:[%s841 + $0x7f8] sm:$0xf]
                  %1354 = vst [vmem:[%s842 + $0x3fc] sm:$0xf] %v1353
                  %v1355 = vld [vmem:[%s841 + $0x800] sm:$0xf]
                  %1356 = vst [vmem:[%s842 + $0x400] sm:$0xf] %v1355
                  %v1357 = vld [vmem:[%s841 + $0x808] sm:$0xf]
                  %1358 = vst [vmem:[%s842 + $0x404] sm:$0xf] %v1357
                  %v1359 = vld [vmem:[%s841 + $0x810] sm:$0xf]
                  %1360 = vst [vmem:[%s842 + $0x408] sm:$0xf] %v1359
                  %v1361 = vld [vmem:[%s841 + $0x818] sm:$0xf]
                  %1362 = vst [vmem:[%s842 + $0x40c] sm:$0xf] %v1361
                  %v1363 = vld [vmem:[%s841 + $0x820] sm:$0xf]
                  %1364 = vst [vmem:[%s842 + $0x410] sm:$0xf] %v1363
                  %v1365 = vld [vmem:[%s841 + $0x828] sm:$0xf]
                  %1366 = vst [vmem:[%s842 + $0x414] sm:$0xf] %v1365
                  %v1367 = vld [vmem:[%s841 + $0x830] sm:$0xf]
                  %1368 = vst [vmem:[%s842 + $0x418] sm:$0xf] %v1367
                  %v1369 = vld [vmem:[%s841 + $0x838] sm:$0xf]
                  %1370 = vst [vmem:[%s842 + $0x41c] sm:$0xf] %v1369
                  %v1371 = vld [vmem:[%s841 + $0x840] sm:$0xf]
                  %1372 = vst [vmem:[%s842 + $0x420] sm:$0xf] %v1371
                  %v1373 = vld [vmem:[%s841 + $0x848] sm:$0xf]
                  %1374 = vst [vmem:[%s842 + $0x424] sm:$0xf] %v1373
                  %v1375 = vld [vmem:[%s841 + $0x850] sm:$0xf]
                  %1376 = vst [vmem:[%s842 + $0x428] sm:$0xf] %v1375
                  %v1377 = vld [vmem:[%s841 + $0x858] sm:$0xf]
                  %1378 = vst [vmem:[%s842 + $0x42c] sm:$0xf] %v1377
                  %v1379 = vld [vmem:[%s841 + $0x860] sm:$0xf]
                  %1380 = vst [vmem:[%s842 + $0x430] sm:$0xf] %v1379
                  %v1381 = vld [vmem:[%s841 + $0x868] sm:$0xf]
                  %1382 = vst [vmem:[%s842 + $0x434] sm:$0xf] %v1381
                  %v1383 = vld [vmem:[%s841 + $0x870] sm:$0xf]
                  %1384 = vst [vmem:[%s842 + $0x438] sm:$0xf] %v1383
                  %v1385 = vld [vmem:[%s841 + $0x878] sm:$0xf]
                  %1386 = vst [vmem:[%s842 + $0x43c] sm:$0xf] %v1385
                  %v1387 = vld [vmem:[%s841 + $0x880] sm:$0xf]
                  %1388 = vst [vmem:[%s842 + $0x440] sm:$0xf] %v1387
                  %v1389 = vld [vmem:[%s841 + $0x888] sm:$0xf]
                  %1390 = vst [vmem:[%s842 + $0x444] sm:$0xf] %v1389
                  %v1391 = vld [vmem:[%s841 + $0x890] sm:$0xf]
                  %1392 = vst [vmem:[%s842 + $0x448] sm:$0xf] %v1391
                  %v1393 = vld [vmem:[%s841 + $0x898] sm:$0xf]
                  %1394 = vst [vmem:[%s842 + $0x44c] sm:$0xf] %v1393
                  %v1395 = vld [vmem:[%s841 + $0x8a0] sm:$0xf]
                  %1396 = vst [vmem:[%s842 + $0x450] sm:$0xf] %v1395
                  %v1397 = vld [vmem:[%s841 + $0x8a8] sm:$0xf]
                  %1398 = vst [vmem:[%s842 + $0x454] sm:$0xf] %v1397
                  %v1399 = vld [vmem:[%s841 + $0x8b0] sm:$0xf]
                  %1400 = vst [vmem:[%s842 + $0x458] sm:$0xf] %v1399
                  %v1401 = vld [vmem:[%s841 + $0x8b8] sm:$0xf]
                  %1402 = vst [vmem:[%s842 + $0x45c] sm:$0xf] %v1401
                  %v1403 = vld [vmem:[%s841 + $0x8c0] sm:$0xf]
                  %1404 = vst [vmem:[%s842 + $0x460] sm:$0xf] %v1403
                  %v1405 = vld [vmem:[%s841 + $0x8c8] sm:$0xf]
                  %1406 = vst [vmem:[%s842 + $0x464] sm:$0xf] %v1405
                  %v1407 = vld [vmem:[%s841 + $0x8d0] sm:$0xf]
                  %1408 = vst [vmem:[%s842 + $0x468] sm:$0xf] %v1407
                  %v1409 = vld [vmem:[%s841 + $0x8d8] sm:$0xf]
                  %1410 = vst [vmem:[%s842 + $0x46c] sm:$0xf] %v1409
                  %v1411 = vld [vmem:[%s841 + $0x8e0] sm:$0xf]
                  %1412 = vst [vmem:[%s842 + $0x470] sm:$0xf] %v1411
                  %v1413 = vld [vmem:[%s841 + $0x8e8] sm:$0xf]
                  %1414 = vst [vmem:[%s842 + $0x474] sm:$0xf] %v1413
                  %v1415 = vld [vmem:[%s841 + $0x8f0] sm:$0xf]
                  %1416 = vst [vmem:[%s842 + $0x478] sm:$0xf] %v1415
                  %v1417 = vld [vmem:[%s841 + $0x8f8] sm:$0xf]
                  %1418 = vst [vmem:[%s842 + $0x47c] sm:$0xf] %v1417
                  %v1419 = vld [vmem:[%s841 + $0x900] sm:$0xf]
                  %1420 = vst [vmem:[%s842 + $0x480] sm:$0xf] %v1419
                  %v1421 = vld [vmem:[%s841 + $0x908] sm:$0xf]
                  %1422 = vst [vmem:[%s842 + $0x484] sm:$0xf] %v1421
                  %v1423 = vld [vmem:[%s841 + $0x910] sm:$0xf]
                  %1424 = vst [vmem:[%s842 + $0x488] sm:$0xf] %v1423
                  %v1425 = vld [vmem:[%s841 + $0x918] sm:$0xf]
                  %1426 = vst [vmem:[%s842 + $0x48c] sm:$0xf] %v1425
                  %v1427 = vld [vmem:[%s841 + $0x920] sm:$0xf]
                  %1428 = vst [vmem:[%s842 + $0x490] sm:$0xf] %v1427
                  %v1429 = vld [vmem:[%s841 + $0x928] sm:$0xf]
                  %1430 = vst [vmem:[%s842 + $0x494] sm:$0xf] %v1429
                  %v1431 = vld [vmem:[%s841 + $0x930] sm:$0xf]
                  %1432 = vst [vmem:[%s842 + $0x498] sm:$0xf] %v1431
                  %v1433 = vld [vmem:[%s841 + $0x938] sm:$0xf]
                  %1434 = vst [vmem:[%s842 + $0x49c] sm:$0xf] %v1433
                  %v1435 = vld [vmem:[%s841 + $0x940] sm:$0xf]
                  %1436 = vst [vmem:[%s842 + $0x4a0] sm:$0xf] %v1435
                  %v1437 = vld [vmem:[%s841 + $0x948] sm:$0xf]
                  %1438 = vst [vmem:[%s842 + $0x4a4] sm:$0xf] %v1437
                  %v1439 = vld [vmem:[%s841 + $0x950] sm:$0xf]
                  %1440 = vst [vmem:[%s842 + $0x4a8] sm:$0xf] %v1439
                  %v1441 = vld [vmem:[%s841 + $0x958] sm:$0xf]
                  %1442 = vst [vmem:[%s842 + $0x4ac] sm:$0xf] %v1441
                  %v1443 = vld [vmem:[%s841 + $0x960] sm:$0xf]
                  %1444 = vst [vmem:[%s842 + $0x4b0] sm:$0xf] %v1443
                  %v1445 = vld [vmem:[%s841 + $0x968] sm:$0xf]
                  %1446 = vst [vmem:[%s842 + $0x4b4] sm:$0xf] %v1445
                  %v1447 = vld [vmem:[%s841 + $0x970] sm:$0xf]
                  %1448 = vst [vmem:[%s842 + $0x4b8] sm:$0xf] %v1447
                  %v1449 = vld [vmem:[%s841 + $0x978] sm:$0xf]
                  %1450 = vst [vmem:[%s842 + $0x4bc] sm:$0xf] %v1449
                  %v1451 = vld [vmem:[%s841 + $0x980] sm:$0xf]
                  %1452 = vst [vmem:[%s842 + $0x4c0] sm:$0xf] %v1451
                  %v1453 = vld [vmem:[%s841 + $0x988] sm:$0xf]
                  %1454 = vst [vmem:[%s842 + $0x4c4] sm:$0xf] %v1453
                  %v1455 = vld [vmem:[%s841 + $0x990] sm:$0xf]
                  %1456 = vst [vmem:[%s842 + $0x4c8] sm:$0xf] %v1455
                  %v1457 = vld [vmem:[%s841 + $0x998] sm:$0xf]
                  %1458 = vst [vmem:[%s842 + $0x4cc] sm:$0xf] %v1457
                  %v1459 = vld [vmem:[%s841 + $0x9a0] sm:$0xf]
                  %1460 = vst [vmem:[%s842 + $0x4d0] sm:$0xf] %v1459
                  %v1461 = vld [vmem:[%s841 + $0x9a8] sm:$0xf]
                  %1462 = vst [vmem:[%s842 + $0x4d4] sm:$0xf] %v1461
                  %v1463 = vld [vmem:[%s841 + $0x9b0] sm:$0xf]
                  %1464 = vst [vmem:[%s842 + $0x4d8] sm:$0xf] %v1463
                  %v1465 = vld [vmem:[%s841 + $0x9b8] sm:$0xf]
                  %1466 = vst [vmem:[%s842 + $0x4dc] sm:$0xf] %v1465
                  %v1467 = vld [vmem:[%s841 + $0x9c0] sm:$0xf]
                  %1468 = vst [vmem:[%s842 + $0x4e0] sm:$0xf] %v1467
                  %v1469 = vld [vmem:[%s841 + $0x9c8] sm:$0xf]
                  %1470 = vst [vmem:[%s842 + $0x4e4] sm:$0xf] %v1469
                  %v1471 = vld [vmem:[%s841 + $0x9d0] sm:$0xf]
                  %1472 = vst [vmem:[%s842 + $0x4e8] sm:$0xf] %v1471
                  %v1473 = vld [vmem:[%s841 + $0x9d8] sm:$0xf]
                  %1474 = vst [vmem:[%s842 + $0x4ec] sm:$0xf] %v1473
                  %v1475 = vld [vmem:[%s841 + $0x9e0] sm:$0xf]
                  %1476 = vst [vmem:[%s842 + $0x4f0] sm:$0xf] %v1475
                  %v1477 = vld [vmem:[%s841 + $0x9e8] sm:$0xf]
                  %1478 = vst [vmem:[%s842 + $0x4f4] sm:$0xf] %v1477
                  %v1479 = vld [vmem:[%s841 + $0x9f0] sm:$0xf]
                  %1480 = vst [vmem:[%s842 + $0x4f8] sm:$0xf] %v1479
                  %v1481 = vld [vmem:[%s841 + $0x9f8] sm:$0xf]
                  %1482 = vst [vmem:[%s842 + $0x4fc] sm:$0xf] %v1481
                  %v1483 = vld [vmem:[%s841 + $0xa00] sm:$0xf]
                  %1484 = vst [vmem:[%s842 + $0x500] sm:$0xf] %v1483
                  %v1485 = vld [vmem:[%s841 + $0xa08] sm:$0xf]
                  %1486 = vst [vmem:[%s842 + $0x504] sm:$0xf] %v1485
                  %v1487 = vld [vmem:[%s841 + $0xa10] sm:$0xf]
                  %1488 = vst [vmem:[%s842 + $0x508] sm:$0xf] %v1487
                  %v1489 = vld [vmem:[%s841 + $0xa18] sm:$0xf]
                  %1490 = vst [vmem:[%s842 + $0x50c] sm:$0xf] %v1489
                  %v1491 = vld [vmem:[%s841 + $0xa20] sm:$0xf]
                  %1492 = vst [vmem:[%s842 + $0x510] sm:$0xf] %v1491
                  %v1493 = vld [vmem:[%s841 + $0xa28] sm:$0xf]
                  %1494 = vst [vmem:[%s842 + $0x514] sm:$0xf] %v1493
                  %v1495 = vld [vmem:[%s841 + $0xa30] sm:$0xf]
                  %1496 = vst [vmem:[%s842 + $0x518] sm:$0xf] %v1495
                  %v1497 = vld [vmem:[%s841 + $0xa38] sm:$0xf]
                  %1498 = vst [vmem:[%s842 + $0x51c] sm:$0xf] %v1497
                  %v1499 = vld [vmem:[%s841 + $0xa40] sm:$0xf]
                  %1500 = vst [vmem:[%s842 + $0x520] sm:$0xf] %v1499
                  %v1501 = vld [vmem:[%s841 + $0xa48] sm:$0xf]
                  %1502 = vst [vmem:[%s842 + $0x524] sm:$0xf] %v1501
                  %v1503 = vld [vmem:[%s841 + $0xa50] sm:$0xf]
                  %1504 = vst [vmem:[%s842 + $0x528] sm:$0xf] %v1503
                  %v1505 = vld [vmem:[%s841 + $0xa58] sm:$0xf]
                  %1506 = vst [vmem:[%s842 + $0x52c] sm:$0xf] %v1505
                  %v1507 = vld [vmem:[%s841 + $0xa60] sm:$0xf]
                  %1508 = vst [vmem:[%s842 + $0x530] sm:$0xf] %v1507
                  %v1509 = vld [vmem:[%s841 + $0xa68] sm:$0xf]
                  %1510 = vst [vmem:[%s842 + $0x534] sm:$0xf] %v1509
                  %v1511 = vld [vmem:[%s841 + $0xa70] sm:$0xf]
                  %1512 = vst [vmem:[%s842 + $0x538] sm:$0xf] %v1511
                  %v1513 = vld [vmem:[%s841 + $0xa78] sm:$0xf]
                  %1514 = vst [vmem:[%s842 + $0x53c] sm:$0xf] %v1513
                $region63: #{capsnet_forward.3} parent=50 // loop_footer
                  %s840 = sadd.s32 1, %s836
                $region64: #{capsnet_forward.3} parent=50 // loop_footer_branch
                  %835 = sbr.rel target = $region60
                $region65: #{capsnet_forward.3} parent=50 // loop_exit
                  _
              $region51: #{capsnet_forward.3} parent=35 // pred_fallthru
                _
            $region36: #{capsnet_forward.3} parent=31 // pred_fallthru
              _
            // Predicated region
            $region37: #{capsnet_forward.3} parent=31 // pred_check
              _
            $region38: #{capsnet_forward.3} parent=31 // pred_check_branch
              %142 = sbr.rel (0) target = $region40
            $region39: #{capsnet_forward.3} parent=31 // pred_region
              loop: start=0, step=1, limit=1
              $region41: #{capsnet_forward.3} parent=39 // loop_pre_header
                _
              $region42: #{capsnet_forward.3} parent=39 // loop_header
                %s145 = sphi 0, %s149
                %p146 = scmp.ge.s32.totalorder %s145, 1
                %s150 = sphi %s136, %s136
                %s151 = sphi %s134, %s134
              $region43: #{capsnet_forward.3} parent=39 // loop_header_branch
                %148 = sbr.rel (%p146) target = $region47
              $region44: #{capsnet_forward.3} parent=39 // loop_body
                %v152 = vld [vmem:[%s150] sm:$0xf]
                %153 = vst [vmem:[%s151] sm:$0xf] %v152
                %v154 = vld [vmem:[%s150 + $0x8] sm:$0xf]
                %155 = vst [vmem:[%s151 + $0x4] sm:$0xf] %v154
                %v156 = vld [vmem:[%s150 + $0x10] sm:$0xf]
                %157 = vst [vmem:[%s151 + $0x8] sm:$0xf] %v156
                %v158 = vld [vmem:[%s150 + $0x18] sm:$0xf]
                %159 = vst [vmem:[%s151 + $0xc] sm:$0xf] %v158
                %v160 = vld [vmem:[%s150 + $0x20] sm:$0xf]
                %161 = vst [vmem:[%s151 + $0x10] sm:$0xf] %v160
                %v162 = vld [vmem:[%s150 + $0x28] sm:$0xf]
                %163 = vst [vmem:[%s151 + $0x14] sm:$0xf] %v162
                %v164 = vld [vmem:[%s150 + $0x30] sm:$0xf]
                %165 = vst [vmem:[%s151 + $0x18] sm:$0xf] %v164
                %v166 = vld [vmem:[%s150 + $0x38] sm:$0xf]
                %167 = vst [vmem:[%s151 + $0x1c] sm:$0xf] %v166
                %v168 = vld [vmem:[%s150 + $0x40] sm:$0xf]
                %169 = vst [vmem:[%s151 + $0x20] sm:$0xf] %v168
                %v170 = vld [vmem:[%s150 + $0x48] sm:$0xf]
                %171 = vst [vmem:[%s151 + $0x24] sm:$0xf] %v170
                %v172 = vld [vmem:[%s150 + $0x50] sm:$0xf]
                %173 = vst [vmem:[%s151 + $0x28] sm:$0xf] %v172
                %v174 = vld [vmem:[%s150 + $0x58] sm:$0xf]
                %175 = vst [vmem:[%s151 + $0x2c] sm:$0xf] %v174
                %v176 = vld [vmem:[%s150 + $0x60] sm:$0xf]
                %177 = vst [vmem:[%s151 + $0x30] sm:$0xf] %v176
                %v178 = vld [vmem:[%s150 + $0x68] sm:$0xf]
                %179 = vst [vmem:[%s151 + $0x34] sm:$0xf] %v178
                %v180 = vld [vmem:[%s150 + $0x70] sm:$0xf]
                %181 = vst [vmem:[%s151 + $0x38] sm:$0xf] %v180
                %v182 = vld [vmem:[%s150 + $0x78] sm:$0xf]
                %183 = vst [vmem:[%s151 + $0x3c] sm:$0xf] %v182
                %v184 = vld [vmem:[%s150 + $0x80] sm:$0xf]
                %185 = vst [vmem:[%s151 + $0x40] sm:$0xf] %v184
                %v186 = vld [vmem:[%s150 + $0x88] sm:$0xf]
                %187 = vst [vmem:[%s151 + $0x44] sm:$0xf] %v186
                %v188 = vld [vmem:[%s150 + $0x90] sm:$0xf]
                %189 = vst [vmem:[%s151 + $0x48] sm:$0xf] %v188
                %v190 = vld [vmem:[%s150 + $0x98] sm:$0xf]
                %191 = vst [vmem:[%s151 + $0x4c] sm:$0xf] %v190
                %v192 = vld [vmem:[%s150 + $0xa0] sm:$0xf]
                %193 = vst [vmem:[%s151 + $0x50] sm:$0xf] %v192
                %v194 = vld [vmem:[%s150 + $0xa8] sm:$0xf]
                %195 = vst [vmem:[%s151 + $0x54] sm:$0xf] %v194
                %v196 = vld [vmem:[%s150 + $0xb0] sm:$0xf]
                %197 = vst [vmem:[%s151 + $0x58] sm:$0xf] %v196
                %v198 = vld [vmem:[%s150 + $0xb8] sm:$0xf]
                %199 = vst [vmem:[%s151 + $0x5c] sm:$0xf] %v198
                %v200 = vld [vmem:[%s150 + $0xc0] sm:$0xf]
                %201 = vst [vmem:[%s151 + $0x60] sm:$0xf] %v200
                %v202 = vld [vmem:[%s150 + $0xc8] sm:$0xf]
                %203 = vst [vmem:[%s151 + $0x64] sm:$0xf] %v202
                %v204 = vld [vmem:[%s150 + $0xd0] sm:$0xf]
                %205 = vst [vmem:[%s151 + $0x68] sm:$0xf] %v204
                %v206 = vld [vmem:[%s150 + $0xd8] sm:$0xf]
                %207 = vst [vmem:[%s151 + $0x6c] sm:$0xf] %v206
                %v208 = vld [vmem:[%s150 + $0xe0] sm:$0xf]
                %209 = vst [vmem:[%s151 + $0x70] sm:$0xf] %v208
                %v210 = vld [vmem:[%s150 + $0xe8] sm:$0xf]
                %211 = vst [vmem:[%s151 + $0x74] sm:$0xf] %v210
                %v212 = vld [vmem:[%s150 + $0xf0] sm:$0xf]
                %213 = vst [vmem:[%s151 + $0x78] sm:$0xf] %v212
                %v214 = vld [vmem:[%s150 + $0xf8] sm:$0xf]
                %215 = vst [vmem:[%s151 + $0x7c] sm:$0xf] %v214
                %v216 = vld [vmem:[%s150 + $0x100] sm:$0xf]
                %217 = vst [vmem:[%s151 + $0x80] sm:$0xf] %v216
                %v218 = vld [vmem:[%s150 + $0x108] sm:$0xf]
                %219 = vst [vmem:[%s151 + $0x84] sm:$0xf] %v218
                %v220 = vld [vmem:[%s150 + $0x110] sm:$0xf]
                %221 = vst [vmem:[%s151 + $0x88] sm:$0xf] %v220
                %v222 = vld [vmem:[%s150 + $0x118] sm:$0xf]
                %223 = vst [vmem:[%s151 + $0x8c] sm:$0xf] %v222
                %v224 = vld [vmem:[%s150 + $0x120] sm:$0xf]
                %225 = vst [vmem:[%s151 + $0x90] sm:$0xf] %v224
                %v226 = vld [vmem:[%s150 + $0x128] sm:$0xf]
                %227 = vst [vmem:[%s151 + $0x94] sm:$0xf] %v226
                %v228 = vld [vmem:[%s150 + $0x130] sm:$0xf]
                %229 = vst [vmem:[%s151 + $0x98] sm:$0xf] %v228
                %v230 = vld [vmem:[%s150 + $0x138] sm:$0xf]
                %231 = vst [vmem:[%s151 + $0x9c] sm:$0xf] %v230
                %v232 = vld [vmem:[%s150 + $0x140] sm:$0xf]
                %233 = vst [vmem:[%s151 + $0xa0] sm:$0xf] %v232
                %v234 = vld [vmem:[%s150 + $0x148] sm:$0xf]
                %235 = vst [vmem:[%s151 + $0xa4] sm:$0xf] %v234
                %v236 = vld [vmem:[%s150 + $0x150] sm:$0xf]
                %237 = vst [vmem:[%s151 + $0xa8] sm:$0xf] %v236
                %v238 = vld [vmem:[%s150 + $0x158] sm:$0xf]
                %239 = vst [vmem:[%s151 + $0xac] sm:$0xf] %v238
                %v240 = vld [vmem:[%s150 + $0x160] sm:$0xf]
                %241 = vst [vmem:[%s151 + $0xb0] sm:$0xf] %v240
                %v242 = vld [vmem:[%s150 + $0x168] sm:$0xf]
                %243 = vst [vmem:[%s151 + $0xb4] sm:$0xf] %v242
                %v244 = vld [vmem:[%s150 + $0x170] sm:$0xf]
                %245 = vst [vmem:[%s151 + $0xb8] sm:$0xf] %v244
                %v246 = vld [vmem:[%s150 + $0x178] sm:$0xf]
                %247 = vst [vmem:[%s151 + $0xbc] sm:$0xf] %v246
                %v248 = vld [vmem:[%s150 + $0x180] sm:$0xf]
                %249 = vst [vmem:[%s151 + $0xc0] sm:$0xf] %v248
                %v250 = vld [vmem:[%s150 + $0x188] sm:$0xf]
                %251 = vst [vmem:[%s151 + $0xc4] sm:$0xf] %v250
                %v252 = vld [vmem:[%s150 + $0x190] sm:$0xf]
                %253 = vst [vmem:[%s151 + $0xc8] sm:$0xf] %v252
                %v254 = vld [vmem:[%s150 + $0x198] sm:$0xf]
                %255 = vst [vmem:[%s151 + $0xcc] sm:$0xf] %v254
                %v256 = vld [vmem:[%s150 + $0x1a0] sm:$0xf]
                %257 = vst [vmem:[%s151 + $0xd0] sm:$0xf] %v256
                %v258 = vld [vmem:[%s150 + $0x1a8] sm:$0xf]
                %259 = vst [vmem:[%s151 + $0xd4] sm:$0xf] %v258
                %v260 = vld [vmem:[%s150 + $0x1b0] sm:$0xf]
                %261 = vst [vmem:[%s151 + $0xd8] sm:$0xf] %v260
                %v262 = vld [vmem:[%s150 + $0x1b8] sm:$0xf]
                %263 = vst [vmem:[%s151 + $0xdc] sm:$0xf] %v262
                %v264 = vld [vmem:[%s150 + $0x1c0] sm:$0xf]
                %265 = vst [vmem:[%s151 + $0xe0] sm:$0xf] %v264
                %v266 = vld [vmem:[%s150 + $0x1c8] sm:$0xf]
                %267 = vst [vmem:[%s151 + $0xe4] sm:$0xf] %v266
                %v268 = vld [vmem:[%s150 + $0x1d0] sm:$0xf]
                %269 = vst [vmem:[%s151 + $0xe8] sm:$0xf] %v268
                %v270 = vld [vmem:[%s150 + $0x1d8] sm:$0xf]
                %271 = vst [vmem:[%s151 + $0xec] sm:$0xf] %v270
                %v272 = vld [vmem:[%s150 + $0x1e0] sm:$0xf]
                %273 = vst [vmem:[%s151 + $0xf0] sm:$0xf] %v272
                %v274 = vld [vmem:[%s150 + $0x1e8] sm:$0xf]
                %275 = vst [vmem:[%s151 + $0xf4] sm:$0xf] %v274
                %v276 = vld [vmem:[%s150 + $0x1f0] sm:$0xf]
                %277 = vst [vmem:[%s151 + $0xf8] sm:$0xf] %v276
                %v278 = vld [vmem:[%s150 + $0x1f8] sm:$0xf]
                %279 = vst [vmem:[%s151 + $0xfc] sm:$0xf] %v278
                %v280 = vld [vmem:[%s150 + $0x200] sm:$0xf]
                %281 = vst [vmem:[%s151 + $0x100] sm:$0xf] %v280
                %v282 = vld [vmem:[%s150 + $0x208] sm:$0xf]
                %283 = vst [vmem:[%s151 + $0x104] sm:$0xf] %v282
                %v284 = vld [vmem:[%s150 + $0x210] sm:$0xf]
                %285 = vst [vmem:[%s151 + $0x108] sm:$0xf] %v284
                %v286 = vld [vmem:[%s150 + $0x218] sm:$0xf]
                %287 = vst [vmem:[%s151 + $0x10c] sm:$0xf] %v286
                %v288 = vld [vmem:[%s150 + $0x220] sm:$0xf]
                %289 = vst [vmem:[%s151 + $0x110] sm:$0xf] %v288
                %v290 = vld [vmem:[%s150 + $0x228] sm:$0xf]
                %291 = vst [vmem:[%s151 + $0x114] sm:$0xf] %v290
                %v292 = vld [vmem:[%s150 + $0x230] sm:$0xf]
                %293 = vst [vmem:[%s151 + $0x118] sm:$0xf] %v292
                %v294 = vld [vmem:[%s150 + $0x238] sm:$0xf]
                %295 = vst [vmem:[%s151 + $0x11c] sm:$0xf] %v294
                %v296 = vld [vmem:[%s150 + $0x240] sm:$0xf]
                %297 = vst [vmem:[%s151 + $0x120] sm:$0xf] %v296
                %v298 = vld [vmem:[%s150 + $0x248] sm:$0xf]
                %299 = vst [vmem:[%s151 + $0x124] sm:$0xf] %v298
                %v300 = vld [vmem:[%s150 + $0x250] sm:$0xf]
                %301 = vst [vmem:[%s151 + $0x128] sm:$0xf] %v300
                %v302 = vld [vmem:[%s150 + $0x258] sm:$0xf]
                %303 = vst [vmem:[%s151 + $0x12c] sm:$0xf] %v302
                %v304 = vld [vmem:[%s150 + $0x260] sm:$0xf]
                %305 = vst [vmem:[%s151 + $0x130] sm:$0xf] %v304
                %v306 = vld [vmem:[%s150 + $0x268] sm:$0xf]
                %307 = vst [vmem:[%s151 + $0x134] sm:$0xf] %v306
                %v308 = vld [vmem:[%s150 + $0x270] sm:$0xf]
                %309 = vst [vmem:[%s151 + $0x138] sm:$0xf] %v308
                %v310 = vld [vmem:[%s150 + $0x278] sm:$0xf]
                %311 = vst [vmem:[%s151 + $0x13c] sm:$0xf] %v310
                %v312 = vld [vmem:[%s150 + $0x280] sm:$0xf]
                %313 = vst [vmem:[%s151 + $0x140] sm:$0xf] %v312
                %v314 = vld [vmem:[%s150 + $0x288] sm:$0xf]
                %315 = vst [vmem:[%s151 + $0x144] sm:$0xf] %v314
                %v316 = vld [vmem:[%s150 + $0x290] sm:$0xf]
                %317 = vst [vmem:[%s151 + $0x148] sm:$0xf] %v316
                %v318 = vld [vmem:[%s150 + $0x298] sm:$0xf]
                %319 = vst [vmem:[%s151 + $0x14c] sm:$0xf] %v318
                %v320 = vld [vmem:[%s150 + $0x2a0] sm:$0xf]
                %321 = vst [vmem:[%s151 + $0x150] sm:$0xf] %v320
                %v322 = vld [vmem:[%s150 + $0x2a8] sm:$0xf]
                %323 = vst [vmem:[%s151 + $0x154] sm:$0xf] %v322
                %v324 = vld [vmem:[%s150 + $0x2b0] sm:$0xf]
                %325 = vst [vmem:[%s151 + $0x158] sm:$0xf] %v324
                %v326 = vld [vmem:[%s150 + $0x2b8] sm:$0xf]
                %327 = vst [vmem:[%s151 + $0x15c] sm:$0xf] %v326
                %v328 = vld [vmem:[%s150 + $0x2c0] sm:$0xf]
                %329 = vst [vmem:[%s151 + $0x160] sm:$0xf] %v328
                %v330 = vld [vmem:[%s150 + $0x2c8] sm:$0xf]
                %331 = vst [vmem:[%s151 + $0x164] sm:$0xf] %v330
                %v332 = vld [vmem:[%s150 + $0x2d0] sm:$0xf]
                %333 = vst [vmem:[%s151 + $0x168] sm:$0xf] %v332
                %v334 = vld [vmem:[%s150 + $0x2d8] sm:$0xf]
                %335 = vst [vmem:[%s151 + $0x16c] sm:$0xf] %v334
                %v336 = vld [vmem:[%s150 + $0x2e0] sm:$0xf]
                %337 = vst [vmem:[%s151 + $0x170] sm:$0xf] %v336
                %v338 = vld [vmem:[%s150 + $0x2e8] sm:$0xf]
                %339 = vst [vmem:[%s151 + $0x174] sm:$0xf] %v338
                %v340 = vld [vmem:[%s150 + $0x2f0] sm:$0xf]
                %341 = vst [vmem:[%s151 + $0x178] sm:$0xf] %v340
                %v342 = vld [vmem:[%s150 + $0x2f8] sm:$0xf]
                %343 = vst [vmem:[%s151 + $0x17c] sm:$0xf] %v342
                %v344 = vld [vmem:[%s150 + $0x300] sm:$0xf]
                %345 = vst [vmem:[%s151 + $0x180] sm:$0xf] %v344
                %v346 = vld [vmem:[%s150 + $0x308] sm:$0xf]
                %347 = vst [vmem:[%s151 + $0x184] sm:$0xf] %v346
                %v348 = vld [vmem:[%s150 + $0x310] sm:$0xf]
                %349 = vst [vmem:[%s151 + $0x188] sm:$0xf] %v348
                %v350 = vld [vmem:[%s150 + $0x318] sm:$0xf]
                %351 = vst [vmem:[%s151 + $0x18c] sm:$0xf] %v350
                %v352 = vld [vmem:[%s150 + $0x320] sm:$0xf]
                %353 = vst [vmem:[%s151 + $0x190] sm:$0xf] %v352
                %v354 = vld [vmem:[%s150 + $0x328] sm:$0xf]
                %355 = vst [vmem:[%s151 + $0x194] sm:$0xf] %v354
                %v356 = vld [vmem:[%s150 + $0x330] sm:$0xf]
                %357 = vst [vmem:[%s151 + $0x198] sm:$0xf] %v356
                %v358 = vld [vmem:[%s150 + $0x338] sm:$0xf]
                %359 = vst [vmem:[%s151 + $0x19c] sm:$0xf] %v358
                %v360 = vld [vmem:[%s150 + $0x340] sm:$0xf]
                %361 = vst [vmem:[%s151 + $0x1a0] sm:$0xf] %v360
                %v362 = vld [vmem:[%s150 + $0x348] sm:$0xf]
                %363 = vst [vmem:[%s151 + $0x1a4] sm:$0xf] %v362
                %v364 = vld [vmem:[%s150 + $0x350] sm:$0xf]
                %365 = vst [vmem:[%s151 + $0x1a8] sm:$0xf] %v364
                %v366 = vld [vmem:[%s150 + $0x358] sm:$0xf]
                %367 = vst [vmem:[%s151 + $0x1ac] sm:$0xf] %v366
                %v368 = vld [vmem:[%s150 + $0x360] sm:$0xf]
                %369 = vst [vmem:[%s151 + $0x1b0] sm:$0xf] %v368
                %v370 = vld [vmem:[%s150 + $0x368] sm:$0xf]
                %371 = vst [vmem:[%s151 + $0x1b4] sm:$0xf] %v370
                %v372 = vld [vmem:[%s150 + $0x370] sm:$0xf]
                %373 = vst [vmem:[%s151 + $0x1b8] sm:$0xf] %v372
                %v374 = vld [vmem:[%s150 + $0x378] sm:$0xf]
                %375 = vst [vmem:[%s151 + $0x1bc] sm:$0xf] %v374
                %v376 = vld [vmem:[%s150 + $0x380] sm:$0xf]
                %377 = vst [vmem:[%s151 + $0x1c0] sm:$0xf] %v376
                %v378 = vld [vmem:[%s150 + $0x388] sm:$0xf]
                %379 = vst [vmem:[%s151 + $0x1c4] sm:$0xf] %v378
                %v380 = vld [vmem:[%s150 + $0x390] sm:$0xf]
                %381 = vst [vmem:[%s151 + $0x1c8] sm:$0xf] %v380
                %v382 = vld [vmem:[%s150 + $0x398] sm:$0xf]
                %383 = vst [vmem:[%s151 + $0x1cc] sm:$0xf] %v382
                %v384 = vld [vmem:[%s150 + $0x3a0] sm:$0xf]
                %385 = vst [vmem:[%s151 + $0x1d0] sm:$0xf] %v384
                %v386 = vld [vmem:[%s150 + $0x3a8] sm:$0xf]
                %387 = vst [vmem:[%s151 + $0x1d4] sm:$0xf] %v386
                %v388 = vld [vmem:[%s150 + $0x3b0] sm:$0xf]
                %389 = vst [vmem:[%s151 + $0x1d8] sm:$0xf] %v388
                %v390 = vld [vmem:[%s150 + $0x3b8] sm:$0xf]
                %391 = vst [vmem:[%s151 + $0x1dc] sm:$0xf] %v390
                %v392 = vld [vmem:[%s150 + $0x3c0] sm:$0xf]
                %393 = vst [vmem:[%s151 + $0x1e0] sm:$0xf] %v392
                %v394 = vld [vmem:[%s150 + $0x3c8] sm:$0xf]
                %395 = vst [vmem:[%s151 + $0x1e4] sm:$0xf] %v394
                %v396 = vld [vmem:[%s150 + $0x3d0] sm:$0xf]
                %397 = vst [vmem:[%s151 + $0x1e8] sm:$0xf] %v396
                %v398 = vld [vmem:[%s150 + $0x3d8] sm:$0xf]
                %399 = vst [vmem:[%s151 + $0x1ec] sm:$0xf] %v398
                %v400 = vld [vmem:[%s150 + $0x3e0] sm:$0xf]
                %401 = vst [vmem:[%s151 + $0x1f0] sm:$0xf] %v400
                %v402 = vld [vmem:[%s150 + $0x3e8] sm:$0xf]
                %403 = vst [vmem:[%s151 + $0x1f4] sm:$0xf] %v402
                %v404 = vld [vmem:[%s150 + $0x3f0] sm:$0xf]
                %405 = vst [vmem:[%s151 + $0x1f8] sm:$0xf] %v404
                %v406 = vld [vmem:[%s150 + $0x3f8] sm:$0xf]
                %407 = vst [vmem:[%s151 + $0x1fc] sm:$0xf] %v406
                %v408 = vld [vmem:[%s150 + $0x400] sm:$0xf]
                %409 = vst [vmem:[%s151 + $0x200] sm:$0xf] %v408
                %v410 = vld [vmem:[%s150 + $0x408] sm:$0xf]
                %411 = vst [vmem:[%s151 + $0x204] sm:$0xf] %v410
                %v412 = vld [vmem:[%s150 + $0x410] sm:$0xf]
                %413 = vst [vmem:[%s151 + $0x208] sm:$0xf] %v412
                %v414 = vld [vmem:[%s150 + $0x418] sm:$0xf]
                %415 = vst [vmem:[%s151 + $0x20c] sm:$0xf] %v414
                %v416 = vld [vmem:[%s150 + $0x420] sm:$0xf]
                %417 = vst [vmem:[%s151 + $0x210] sm:$0xf] %v416
                %v418 = vld [vmem:[%s150 + $0x428] sm:$0xf]
                %419 = vst [vmem:[%s151 + $0x214] sm:$0xf] %v418
                %v420 = vld [vmem:[%s150 + $0x430] sm:$0xf]
                %421 = vst [vmem:[%s151 + $0x218] sm:$0xf] %v420
                %v422 = vld [vmem:[%s150 + $0x438] sm:$0xf]
                %423 = vst [vmem:[%s151 + $0x21c] sm:$0xf] %v422
                %v424 = vld [vmem:[%s150 + $0x440] sm:$0xf]
                %425 = vst [vmem:[%s151 + $0x220] sm:$0xf] %v424
                %v426 = vld [vmem:[%s150 + $0x448] sm:$0xf]
                %427 = vst [vmem:[%s151 + $0x224] sm:$0xf] %v426
                %v428 = vld [vmem:[%s150 + $0x450] sm:$0xf]
                %429 = vst [vmem:[%s151 + $0x228] sm:$0xf] %v428
                %v430 = vld [vmem:[%s150 + $0x458] sm:$0xf]
                %431 = vst [vmem:[%s151 + $0x22c] sm:$0xf] %v430
                %v432 = vld [vmem:[%s150 + $0x460] sm:$0xf]
                %433 = vst [vmem:[%s151 + $0x230] sm:$0xf] %v432
                %v434 = vld [vmem:[%s150 + $0x468] sm:$0xf]
                %435 = vst [vmem:[%s151 + $0x234] sm:$0xf] %v434
                %v436 = vld [vmem:[%s150 + $0x470] sm:$0xf]
                %437 = vst [vmem:[%s151 + $0x238] sm:$0xf] %v436
                %v438 = vld [vmem:[%s150 + $0x478] sm:$0xf]
                %439 = vst [vmem:[%s151 + $0x23c] sm:$0xf] %v438
                %v440 = vld [vmem:[%s150 + $0x480] sm:$0xf]
                %441 = vst [vmem:[%s151 + $0x240] sm:$0xf] %v440
                %v442 = vld [vmem:[%s150 + $0x488] sm:$0xf]
                %443 = vst [vmem:[%s151 + $0x244] sm:$0xf] %v442
                %v444 = vld [vmem:[%s150 + $0x490] sm:$0xf]
                %445 = vst [vmem:[%s151 + $0x248] sm:$0xf] %v444
                %v446 = vld [vmem:[%s150 + $0x498] sm:$0xf]
                %447 = vst [vmem:[%s151 + $0x24c] sm:$0xf] %v446
                %v448 = vld [vmem:[%s150 + $0x4a0] sm:$0xf]
                %449 = vst [vmem:[%s151 + $0x250] sm:$0xf] %v448
                %v450 = vld [vmem:[%s150 + $0x4a8] sm:$0xf]
                %451 = vst [vmem:[%s151 + $0x254] sm:$0xf] %v450
                %v452 = vld [vmem:[%s150 + $0x4b0] sm:$0xf]
                %453 = vst [vmem:[%s151 + $0x258] sm:$0xf] %v452
                %v454 = vld [vmem:[%s150 + $0x4b8] sm:$0xf]
                %455 = vst [vmem:[%s151 + $0x25c] sm:$0xf] %v454
                %v456 = vld [vmem:[%s150 + $0x4c0] sm:$0xf]
                %457 = vst [vmem:[%s151 + $0x260] sm:$0xf] %v456
                %v458 = vld [vmem:[%s150 + $0x4c8] sm:$0xf]
                %459 = vst [vmem:[%s151 + $0x264] sm:$0xf] %v458
                %v460 = vld [vmem:[%s150 + $0x4d0] sm:$0xf]
                %461 = vst [vmem:[%s151 + $0x268] sm:$0xf] %v460
                %v462 = vld [vmem:[%s150 + $0x4d8] sm:$0xf]
                %463 = vst [vmem:[%s151 + $0x26c] sm:$0xf] %v462
                %v464 = vld [vmem:[%s150 + $0x4e0] sm:$0xf]
                %465 = vst [vmem:[%s151 + $0x270] sm:$0xf] %v464
                %v466 = vld [vmem:[%s150 + $0x4e8] sm:$0xf]
                %467 = vst [vmem:[%s151 + $0x274] sm:$0xf] %v466
                %v468 = vld [vmem:[%s150 + $0x4f0] sm:$0xf]
                %469 = vst [vmem:[%s151 + $0x278] sm:$0xf] %v468
                %v470 = vld [vmem:[%s150 + $0x4f8] sm:$0xf]
                %471 = vst [vmem:[%s151 + $0x27c] sm:$0xf] %v470
                %v472 = vld [vmem:[%s150 + $0x500] sm:$0xf]
                %473 = vst [vmem:[%s151 + $0x280] sm:$0xf] %v472
                %v474 = vld [vmem:[%s150 + $0x508] sm:$0xf]
                %475 = vst [vmem:[%s151 + $0x284] sm:$0xf] %v474
                %v476 = vld [vmem:[%s150 + $0x510] sm:$0xf]
                %477 = vst [vmem:[%s151 + $0x288] sm:$0xf] %v476
                %v478 = vld [vmem:[%s150 + $0x518] sm:$0xf]
                %479 = vst [vmem:[%s151 + $0x28c] sm:$0xf] %v478
                %v480 = vld [vmem:[%s150 + $0x520] sm:$0xf]
                %481 = vst [vmem:[%s151 + $0x290] sm:$0xf] %v480
                %v482 = vld [vmem:[%s150 + $0x528] sm:$0xf]
                %483 = vst [vmem:[%s151 + $0x294] sm:$0xf] %v482
                %v484 = vld [vmem:[%s150 + $0x530] sm:$0xf]
                %485 = vst [vmem:[%s151 + $0x298] sm:$0xf] %v484
                %v486 = vld [vmem:[%s150 + $0x538] sm:$0xf]
                %487 = vst [vmem:[%s151 + $0x29c] sm:$0xf] %v486
                %v488 = vld [vmem:[%s150 + $0x540] sm:$0xf]
                %489 = vst [vmem:[%s151 + $0x2a0] sm:$0xf] %v488
                %v490 = vld [vmem:[%s150 + $0x548] sm:$0xf]
                %491 = vst [vmem:[%s151 + $0x2a4] sm:$0xf] %v490
                %v492 = vld [vmem:[%s150 + $0x550] sm:$0xf]
                %493 = vst [vmem:[%s151 + $0x2a8] sm:$0xf] %v492
                %v494 = vld [vmem:[%s150 + $0x558] sm:$0xf]
                %495 = vst [vmem:[%s151 + $0x2ac] sm:$0xf] %v494
                %v496 = vld [vmem:[%s150 + $0x560] sm:$0xf]
                %497 = vst [vmem:[%s151 + $0x2b0] sm:$0xf] %v496
                %v498 = vld [vmem:[%s150 + $0x568] sm:$0xf]
                %499 = vst [vmem:[%s151 + $0x2b4] sm:$0xf] %v498
                %v500 = vld [vmem:[%s150 + $0x570] sm:$0xf]
                %501 = vst [vmem:[%s151 + $0x2b8] sm:$0xf] %v500
                %v502 = vld [vmem:[%s150 + $0x578] sm:$0xf]
                %503 = vst [vmem:[%s151 + $0x2bc] sm:$0xf] %v502
                %v504 = vld [vmem:[%s150 + $0x580] sm:$0xf]
                %505 = vst [vmem:[%s151 + $0x2c0] sm:$0xf] %v504
                %v506 = vld [vmem:[%s150 + $0x588] sm:$0xf]
                %507 = vst [vmem:[%s151 + $0x2c4] sm:$0xf] %v506
                %v508 = vld [vmem:[%s150 + $0x590] sm:$0xf]
                %509 = vst [vmem:[%s151 + $0x2c8] sm:$0xf] %v508
                %v510 = vld [vmem:[%s150 + $0x598] sm:$0xf]
                %511 = vst [vmem:[%s151 + $0x2cc] sm:$0xf] %v510
                %v512 = vld [vmem:[%s150 + $0x5a0] sm:$0xf]
                %513 = vst [vmem:[%s151 + $0x2d0] sm:$0xf] %v512
                %v514 = vld [vmem:[%s150 + $0x5a8] sm:$0xf]
                %515 = vst [vmem:[%s151 + $0x2d4] sm:$0xf] %v514
                %v516 = vld [vmem:[%s150 + $0x5b0] sm:$0xf]
                %517 = vst [vmem:[%s151 + $0x2d8] sm:$0xf] %v516
                %v518 = vld [vmem:[%s150 + $0x5b8] sm:$0xf]
                %519 = vst [vmem:[%s151 + $0x2dc] sm:$0xf] %v518
                %v520 = vld [vmem:[%s150 + $0x5c0] sm:$0xf]
                %521 = vst [vmem:[%s151 + $0x2e0] sm:$0xf] %v520
                %v522 = vld [vmem:[%s150 + $0x5c8] sm:$0xf]
                %523 = vst [vmem:[%s151 + $0x2e4] sm:$0xf] %v522
                %v524 = vld [vmem:[%s150 + $0x5d0] sm:$0xf]
                %525 = vst [vmem:[%s151 + $0x2e8] sm:$0xf] %v524
                %v526 = vld [vmem:[%s150 + $0x5d8] sm:$0xf]
                %527 = vst [vmem:[%s151 + $0x2ec] sm:$0xf] %v526
                %v528 = vld [vmem:[%s150 + $0x5e0] sm:$0xf]
                %529 = vst [vmem:[%s151 + $0x2f0] sm:$0xf] %v528
                %v530 = vld [vmem:[%s150 + $0x5e8] sm:$0xf]
                %531 = vst [vmem:[%s151 + $0x2f4] sm:$0xf] %v530
                %v532 = vld [vmem:[%s150 + $0x5f0] sm:$0xf]
                %533 = vst [vmem:[%s151 + $0x2f8] sm:$0xf] %v532
                %v534 = vld [vmem:[%s150 + $0x5f8] sm:$0xf]
                %535 = vst [vmem:[%s151 + $0x2fc] sm:$0xf] %v534
                %v536 = vld [vmem:[%s150 + $0x600] sm:$0xf]
                %537 = vst [vmem:[%s151 + $0x300] sm:$0xf] %v536
                %v538 = vld [vmem:[%s150 + $0x608] sm:$0xf]
                %539 = vst [vmem:[%s151 + $0x304] sm:$0xf] %v538
                %v540 = vld [vmem:[%s150 + $0x610] sm:$0xf]
                %541 = vst [vmem:[%s151 + $0x308] sm:$0xf] %v540
                %v542 = vld [vmem:[%s150 + $0x618] sm:$0xf]
                %543 = vst [vmem:[%s151 + $0x30c] sm:$0xf] %v542
                %v544 = vld [vmem:[%s150 + $0x620] sm:$0xf]
                %545 = vst [vmem:[%s151 + $0x310] sm:$0xf] %v544
                %v546 = vld [vmem:[%s150 + $0x628] sm:$0xf]
                %547 = vst [vmem:[%s151 + $0x314] sm:$0xf] %v546
                %v548 = vld [vmem:[%s150 + $0x630] sm:$0xf]
                %549 = vst [vmem:[%s151 + $0x318] sm:$0xf] %v548
                %v550 = vld [vmem:[%s150 + $0x638] sm:$0xf]
                %551 = vst [vmem:[%s151 + $0x31c] sm:$0xf] %v550
                %v552 = vld [vmem:[%s150 + $0x640] sm:$0xf]
                %553 = vst [vmem:[%s151 + $0x320] sm:$0xf] %v552
                %v554 = vld [vmem:[%s150 + $0x648] sm:$0xf]
                %555 = vst [vmem:[%s151 + $0x324] sm:$0xf] %v554
                %v556 = vld [vmem:[%s150 + $0x650] sm:$0xf]
                %557 = vst [vmem:[%s151 + $0x328] sm:$0xf] %v556
                %v558 = vld [vmem:[%s150 + $0x658] sm:$0xf]
                %559 = vst [vmem:[%s151 + $0x32c] sm:$0xf] %v558
                %v560 = vld [vmem:[%s150 + $0x660] sm:$0xf]
                %561 = vst [vmem:[%s151 + $0x330] sm:$0xf] %v560
                %v562 = vld [vmem:[%s150 + $0x668] sm:$0xf]
                %563 = vst [vmem:[%s151 + $0x334] sm:$0xf] %v562
                %v564 = vld [vmem:[%s150 + $0x670] sm:$0xf]
                %565 = vst [vmem:[%s151 + $0x338] sm:$0xf] %v564
                %v566 = vld [vmem:[%s150 + $0x678] sm:$0xf]
                %567 = vst [vmem:[%s151 + $0x33c] sm:$0xf] %v566
                %v568 = vld [vmem:[%s150 + $0x680] sm:$0xf]
                %569 = vst [vmem:[%s151 + $0x340] sm:$0xf] %v568
                %v570 = vld [vmem:[%s150 + $0x688] sm:$0xf]
                %571 = vst [vmem:[%s151 + $0x344] sm:$0xf] %v570
                %v572 = vld [vmem:[%s150 + $0x690] sm:$0xf]
                %573 = vst [vmem:[%s151 + $0x348] sm:$0xf] %v572
                %v574 = vld [vmem:[%s150 + $0x698] sm:$0xf]
                %575 = vst [vmem:[%s151 + $0x34c] sm:$0xf] %v574
                %v576 = vld [vmem:[%s150 + $0x6a0] sm:$0xf]
                %577 = vst [vmem:[%s151 + $0x350] sm:$0xf] %v576
                %v578 = vld [vmem:[%s150 + $0x6a8] sm:$0xf]
                %579 = vst [vmem:[%s151 + $0x354] sm:$0xf] %v578
                %v580 = vld [vmem:[%s150 + $0x6b0] sm:$0xf]
                %581 = vst [vmem:[%s151 + $0x358] sm:$0xf] %v580
                %v582 = vld [vmem:[%s150 + $0x6b8] sm:$0xf]
                %583 = vst [vmem:[%s151 + $0x35c] sm:$0xf] %v582
                %v584 = vld [vmem:[%s150 + $0x6c0] sm:$0xf]
                %585 = vst [vmem:[%s151 + $0x360] sm:$0xf] %v584
                %v586 = vld [vmem:[%s150 + $0x6c8] sm:$0xf]
                %587 = vst [vmem:[%s151 + $0x364] sm:$0xf] %v586
                %v588 = vld [vmem:[%s150 + $0x6d0] sm:$0xf]
                %589 = vst [vmem:[%s151 + $0x368] sm:$0xf] %v588
                %v590 = vld [vmem:[%s150 + $0x6d8] sm:$0xf]
                %591 = vst [vmem:[%s151 + $0x36c] sm:$0xf] %v590
                %v592 = vld [vmem:[%s150 + $0x6e0] sm:$0xf]
                %593 = vst [vmem:[%s151 + $0x370] sm:$0xf] %v592
                %v594 = vld [vmem:[%s150 + $0x6e8] sm:$0xf]
                %595 = vst [vmem:[%s151 + $0x374] sm:$0xf] %v594
                %v596 = vld [vmem:[%s150 + $0x6f0] sm:$0xf]
                %597 = vst [vmem:[%s151 + $0x378] sm:$0xf] %v596
                %v598 = vld [vmem:[%s150 + $0x6f8] sm:$0xf]
                %599 = vst [vmem:[%s151 + $0x37c] sm:$0xf] %v598
                %v600 = vld [vmem:[%s150 + $0x700] sm:$0xf]
                %601 = vst [vmem:[%s151 + $0x380] sm:$0xf] %v600
                %v602 = vld [vmem:[%s150 + $0x708] sm:$0xf]
                %603 = vst [vmem:[%s151 + $0x384] sm:$0xf] %v602
                %v604 = vld [vmem:[%s150 + $0x710] sm:$0xf]
                %605 = vst [vmem:[%s151 + $0x388] sm:$0xf] %v604
                %v606 = vld [vmem:[%s150 + $0x718] sm:$0xf]
                %607 = vst [vmem:[%s151 + $0x38c] sm:$0xf] %v606
                %v608 = vld [vmem:[%s150 + $0x720] sm:$0xf]
                %609 = vst [vmem:[%s151 + $0x390] sm:$0xf] %v608
                %v610 = vld [vmem:[%s150 + $0x728] sm:$0xf]
                %611 = vst [vmem:[%s151 + $0x394] sm:$0xf] %v610
                %v612 = vld [vmem:[%s150 + $0x730] sm:$0xf]
                %613 = vst [vmem:[%s151 + $0x398] sm:$0xf] %v612
                %v614 = vld [vmem:[%s150 + $0x738] sm:$0xf]
                %615 = vst [vmem:[%s151 + $0x39c] sm:$0xf] %v614
                %v616 = vld [vmem:[%s150 + $0x740] sm:$0xf]
                %617 = vst [vmem:[%s151 + $0x3a0] sm:$0xf] %v616
                %v618 = vld [vmem:[%s150 + $0x748] sm:$0xf]
                %619 = vst [vmem:[%s151 + $0x3a4] sm:$0xf] %v618
                %v620 = vld [vmem:[%s150 + $0x750] sm:$0xf]
                %621 = vst [vmem:[%s151 + $0x3a8] sm:$0xf] %v620
                %v622 = vld [vmem:[%s150 + $0x758] sm:$0xf]
                %623 = vst [vmem:[%s151 + $0x3ac] sm:$0xf] %v622
                %v624 = vld [vmem:[%s150 + $0x760] sm:$0xf]
                %625 = vst [vmem:[%s151 + $0x3b0] sm:$0xf] %v624
                %v626 = vld [vmem:[%s150 + $0x768] sm:$0xf]
                %627 = vst [vmem:[%s151 + $0x3b4] sm:$0xf] %v626
                %v628 = vld [vmem:[%s150 + $0x770] sm:$0xf]
                %629 = vst [vmem:[%s151 + $0x3b8] sm:$0xf] %v628
                %v630 = vld [vmem:[%s150 + $0x778] sm:$0xf]
                %631 = vst [vmem:[%s151 + $0x3bc] sm:$0xf] %v630
                %v632 = vld [vmem:[%s150 + $0x780] sm:$0xf]
                %633 = vst [vmem:[%s151 + $0x3c0] sm:$0xf] %v632
                %v634 = vld [vmem:[%s150 + $0x788] sm:$0xf]
                %635 = vst [vmem:[%s151 + $0x3c4] sm:$0xf] %v634
                %v636 = vld [vmem:[%s150 + $0x790] sm:$0xf]
                %637 = vst [vmem:[%s151 + $0x3c8] sm:$0xf] %v636
                %v638 = vld [vmem:[%s150 + $0x798] sm:$0xf]
                %639 = vst [vmem:[%s151 + $0x3cc] sm:$0xf] %v638
                %v640 = vld [vmem:[%s150 + $0x7a0] sm:$0xf]
                %641 = vst [vmem:[%s151 + $0x3d0] sm:$0xf] %v640
                %v642 = vld [vmem:[%s150 + $0x7a8] sm:$0xf]
                %643 = vst [vmem:[%s151 + $0x3d4] sm:$0xf] %v642
                %v644 = vld [vmem:[%s150 + $0x7b0] sm:$0xf]
                %645 = vst [vmem:[%s151 + $0x3d8] sm:$0xf] %v644
                %v646 = vld [vmem:[%s150 + $0x7b8] sm:$0xf]
                %647 = vst [vmem:[%s151 + $0x3dc] sm:$0xf] %v646
                %v648 = vld [vmem:[%s150 + $0x7c0] sm:$0xf]
                %649 = vst [vmem:[%s151 + $0x3e0] sm:$0xf] %v648
                %v650 = vld [vmem:[%s150 + $0x7c8] sm:$0xf]
                %651 = vst [vmem:[%s151 + $0x3e4] sm:$0xf] %v650
                %v652 = vld [vmem:[%s150 + $0x7d0] sm:$0xf]
                %653 = vst [vmem:[%s151 + $0x3e8] sm:$0xf] %v652
                %v654 = vld [vmem:[%s150 + $0x7d8] sm:$0xf]
                %655 = vst [vmem:[%s151 + $0x3ec] sm:$0xf] %v654
                %v656 = vld [vmem:[%s150 + $0x7e0] sm:$0xf]
                %657 = vst [vmem:[%s151 + $0x3f0] sm:$0xf] %v656
                %v658 = vld [vmem:[%s150 + $0x7e8] sm:$0xf]
                %659 = vst [vmem:[%s151 + $0x3f4] sm:$0xf] %v658
                %v660 = vld [vmem:[%s150 + $0x7f0] sm:$0xf]
                %661 = vst [vmem:[%s151 + $0x3f8] sm:$0xf] %v660
                %v662 = vld [vmem:[%s150 + $0x7f8] sm:$0xf]
                %663 = vst [vmem:[%s151 + $0x3fc] sm:$0xf] %v662
                %v664 = vld [vmem:[%s150 + $0x800] sm:$0xf]
                %665 = vst [vmem:[%s151 + $0x400] sm:$0xf] %v664
                %v666 = vld [vmem:[%s150 + $0x808] sm:$0xf]
                %667 = vst [vmem:[%s151 + $0x404] sm:$0xf] %v666
                %v668 = vld [vmem:[%s150 + $0x810] sm:$0xf]
                %669 = vst [vmem:[%s151 + $0x408] sm:$0xf] %v668
                %v670 = vld [vmem:[%s150 + $0x818] sm:$0xf]
                %671 = vst [vmem:[%s151 + $0x40c] sm:$0xf] %v670
                %v672 = vld [vmem:[%s150 + $0x820] sm:$0xf]
                %673 = vst [vmem:[%s151 + $0x410] sm:$0xf] %v672
                %v674 = vld [vmem:[%s150 + $0x828] sm:$0xf]
                %675 = vst [vmem:[%s151 + $0x414] sm:$0xf] %v674
                %v676 = vld [vmem:[%s150 + $0x830] sm:$0xf]
                %677 = vst [vmem:[%s151 + $0x418] sm:$0xf] %v676
                %v678 = vld [vmem:[%s150 + $0x838] sm:$0xf]
                %679 = vst [vmem:[%s151 + $0x41c] sm:$0xf] %v678
                %v680 = vld [vmem:[%s150 + $0x840] sm:$0xf]
                %681 = vst [vmem:[%s151 + $0x420] sm:$0xf] %v680
                %v682 = vld [vmem:[%s150 + $0x848] sm:$0xf]
                %683 = vst [vmem:[%s151 + $0x424] sm:$0xf] %v682
                %v684 = vld [vmem:[%s150 + $0x850] sm:$0xf]
                %685 = vst [vmem:[%s151 + $0x428] sm:$0xf] %v684
                %v686 = vld [vmem:[%s150 + $0x858] sm:$0xf]
                %687 = vst [vmem:[%s151 + $0x42c] sm:$0xf] %v686
                %v688 = vld [vmem:[%s150 + $0x860] sm:$0xf]
                %689 = vst [vmem:[%s151 + $0x430] sm:$0xf] %v688
                %v690 = vld [vmem:[%s150 + $0x868] sm:$0xf]
                %691 = vst [vmem:[%s151 + $0x434] sm:$0xf] %v690
                %v692 = vld [vmem:[%s150 + $0x870] sm:$0xf]
                %693 = vst [vmem:[%s151 + $0x438] sm:$0xf] %v692
                %v694 = vld [vmem:[%s150 + $0x878] sm:$0xf]
                %695 = vst [vmem:[%s151 + $0x43c] sm:$0xf] %v694
                %v696 = vld [vmem:[%s150 + $0x880] sm:$0xf]
                %697 = vst [vmem:[%s151 + $0x440] sm:$0xf] %v696
                %v698 = vld [vmem:[%s150 + $0x888] sm:$0xf]
                %699 = vst [vmem:[%s151 + $0x444] sm:$0xf] %v698
                %v700 = vld [vmem:[%s150 + $0x890] sm:$0xf]
                %701 = vst [vmem:[%s151 + $0x448] sm:$0xf] %v700
                %v702 = vld [vmem:[%s150 + $0x898] sm:$0xf]
                %703 = vst [vmem:[%s151 + $0x44c] sm:$0xf] %v702
                %v704 = vld [vmem:[%s150 + $0x8a0] sm:$0xf]
                %705 = vst [vmem:[%s151 + $0x450] sm:$0xf] %v704
                %v706 = vld [vmem:[%s150 + $0x8a8] sm:$0xf]
                %707 = vst [vmem:[%s151 + $0x454] sm:$0xf] %v706
                %v708 = vld [vmem:[%s150 + $0x8b0] sm:$0xf]
                %709 = vst [vmem:[%s151 + $0x458] sm:$0xf] %v708
                %v710 = vld [vmem:[%s150 + $0x8b8] sm:$0xf]
                %711 = vst [vmem:[%s151 + $0x45c] sm:$0xf] %v710
                %v712 = vld [vmem:[%s150 + $0x8c0] sm:$0xf]
                %713 = vst [vmem:[%s151 + $0x460] sm:$0xf] %v712
                %v714 = vld [vmem:[%s150 + $0x8c8] sm:$0xf]
                %715 = vst [vmem:[%s151 + $0x464] sm:$0xf] %v714
                %v716 = vld [vmem:[%s150 + $0x8d0] sm:$0xf]
                %717 = vst [vmem:[%s151 + $0x468] sm:$0xf] %v716
                %v718 = vld [vmem:[%s150 + $0x8d8] sm:$0xf]
                %719 = vst [vmem:[%s151 + $0x46c] sm:$0xf] %v718
                %v720 = vld [vmem:[%s150 + $0x8e0] sm:$0xf]
                %721 = vst [vmem:[%s151 + $0x470] sm:$0xf] %v720
                %v722 = vld [vmem:[%s150 + $0x8e8] sm:$0xf]
                %723 = vst [vmem:[%s151 + $0x474] sm:$0xf] %v722
                %v724 = vld [vmem:[%s150 + $0x8f0] sm:$0xf]
                %725 = vst [vmem:[%s151 + $0x478] sm:$0xf] %v724
                %v726 = vld [vmem:[%s150 + $0x8f8] sm:$0xf]
                %727 = vst [vmem:[%s151 + $0x47c] sm:$0xf] %v726
                %v728 = vld [vmem:[%s150 + $0x900] sm:$0xf]
                %729 = vst [vmem:[%s151 + $0x480] sm:$0xf] %v728
                %v730 = vld [vmem:[%s150 + $0x908] sm:$0xf]
                %731 = vst [vmem:[%s151 + $0x484] sm:$0xf] %v730
                %v732 = vld [vmem:[%s150 + $0x910] sm:$0xf]
                %733 = vst [vmem:[%s151 + $0x488] sm:$0xf] %v732
                %v734 = vld [vmem:[%s150 + $0x918] sm:$0xf]
                %735 = vst [vmem:[%s151 + $0x48c] sm:$0xf] %v734
                %v736 = vld [vmem:[%s150 + $0x920] sm:$0xf]
                %737 = vst [vmem:[%s151 + $0x490] sm:$0xf] %v736
                %v738 = vld [vmem:[%s150 + $0x928] sm:$0xf]
                %739 = vst [vmem:[%s151 + $0x494] sm:$0xf] %v738
                %v740 = vld [vmem:[%s150 + $0x930] sm:$0xf]
                %741 = vst [vmem:[%s151 + $0x498] sm:$0xf] %v740
                %v742 = vld [vmem:[%s150 + $0x938] sm:$0xf]
                %743 = vst [vmem:[%s151 + $0x49c] sm:$0xf] %v742
                %v744 = vld [vmem:[%s150 + $0x940] sm:$0xf]
                %745 = vst [vmem:[%s151 + $0x4a0] sm:$0xf] %v744
                %v746 = vld [vmem:[%s150 + $0x948] sm:$0xf]
                %747 = vst [vmem:[%s151 + $0x4a4] sm:$0xf] %v746
                %v748 = vld [vmem:[%s150 + $0x950] sm:$0xf]
                %749 = vst [vmem:[%s151 + $0x4a8] sm:$0xf] %v748
                %v750 = vld [vmem:[%s150 + $0x958] sm:$0xf]
                %751 = vst [vmem:[%s151 + $0x4ac] sm:$0xf] %v750
                %v752 = vld [vmem:[%s150 + $0x960] sm:$0xf]
                %753 = vst [vmem:[%s151 + $0x4b0] sm:$0xf] %v752
                %v754 = vld [vmem:[%s150 + $0x968] sm:$0xf]
                %755 = vst [vmem:[%s151 + $0x4b4] sm:$0xf] %v754
                %v756 = vld [vmem:[%s150 + $0x970] sm:$0xf]
                %757 = vst [vmem:[%s151 + $0x4b8] sm:$0xf] %v756
                %v758 = vld [vmem:[%s150 + $0x978] sm:$0xf]
                %759 = vst [vmem:[%s151 + $0x4bc] sm:$0xf] %v758
                %v760 = vld [vmem:[%s150 + $0x980] sm:$0xf]
                %761 = vst [vmem:[%s151 + $0x4c0] sm:$0xf] %v760
                %v762 = vld [vmem:[%s150 + $0x988] sm:$0xf]
                %763 = vst [vmem:[%s151 + $0x4c4] sm:$0xf] %v762
                %v764 = vld [vmem:[%s150 + $0x990] sm:$0xf]
                %765 = vst [vmem:[%s151 + $0x4c8] sm:$0xf] %v764
                %v766 = vld [vmem:[%s150 + $0x998] sm:$0xf]
                %767 = vst [vmem:[%s151 + $0x4cc] sm:$0xf] %v766
                %v768 = vld [vmem:[%s150 + $0x9a0] sm:$0xf]
                %769 = vst [vmem:[%s151 + $0x4d0] sm:$0xf] %v768
                %v770 = vld [vmem:[%s150 + $0x9a8] sm:$0xf]
                %771 = vst [vmem:[%s151 + $0x4d4] sm:$0xf] %v770
                %v772 = vld [vmem:[%s150 + $0x9b0] sm:$0xf]
                %773 = vst [vmem:[%s151 + $0x4d8] sm:$0xf] %v772
                %v774 = vld [vmem:[%s150 + $0x9b8] sm:$0xf]
                %775 = vst [vmem:[%s151 + $0x4dc] sm:$0xf] %v774
                %v776 = vld [vmem:[%s150 + $0x9c0] sm:$0xf]
                %777 = vst [vmem:[%s151 + $0x4e0] sm:$0xf] %v776
                %v778 = vld [vmem:[%s150 + $0x9c8] sm:$0xf]
                %779 = vst [vmem:[%s151 + $0x4e4] sm:$0xf] %v778
                %v780 = vld [vmem:[%s150 + $0x9d0] sm:$0xf]
                %781 = vst [vmem:[%s151 + $0x4e8] sm:$0xf] %v780
                %v782 = vld [vmem:[%s150 + $0x9d8] sm:$0xf]
                %783 = vst [vmem:[%s151 + $0x4ec] sm:$0xf] %v782
                %v784 = vld [vmem:[%s150 + $0x9e0] sm:$0xf]
                %785 = vst [vmem:[%s151 + $0x4f0] sm:$0xf] %v784
                %v786 = vld [vmem:[%s150 + $0x9e8] sm:$0xf]
                %787 = vst [vmem:[%s151 + $0x4f4] sm:$0xf] %v786
                %v788 = vld [vmem:[%s150 + $0x9f0] sm:$0xf]
                %789 = vst [vmem:[%s151 + $0x4f8] sm:$0xf] %v788
                %v790 = vld [vmem:[%s150 + $0x9f8] sm:$0xf]
                %791 = vst [vmem:[%s151 + $0x4fc] sm:$0xf] %v790
                %v792 = vld [vmem:[%s150 + $0xa00] sm:$0xf]
                %793 = vst [vmem:[%s151 + $0x500] sm:$0xf] %v792
                %v794 = vld [vmem:[%s150 + $0xa08] sm:$0xf]
                %795 = vst [vmem:[%s151 + $0x504] sm:$0xf] %v794
                %v796 = vld [vmem:[%s150 + $0xa10] sm:$0xf]
                %797 = vst [vmem:[%s151 + $0x508] sm:$0xf] %v796
                %v798 = vld [vmem:[%s150 + $0xa18] sm:$0xf]
                %799 = vst [vmem:[%s151 + $0x50c] sm:$0xf] %v798
                %v800 = vld [vmem:[%s150 + $0xa20] sm:$0xf]
                %801 = vst [vmem:[%s151 + $0x510] sm:$0xf] %v800
                %v802 = vld [vmem:[%s150 + $0xa28] sm:$0xf]
                %803 = vst [vmem:[%s151 + $0x514] sm:$0xf] %v802
                %v804 = vld [vmem:[%s150 + $0xa30] sm:$0xf]
                %805 = vst [vmem:[%s151 + $0x518] sm:$0xf] %v804
                %v806 = vld [vmem:[%s150 + $0xa38] sm:$0xf]
                %807 = vst [vmem:[%s151 + $0x51c] sm:$0xf] %v806
                %v808 = vld [vmem:[%s150 + $0xa40] sm:$0xf]
                %809 = vst [vmem:[%s151 + $0x520] sm:$0xf] %v808
                %v810 = vld [vmem:[%s150 + $0xa48] sm:$0xf]
                %811 = vst [vmem:[%s151 + $0x524] sm:$0xf] %v810
                %v812 = vld [vmem:[%s150 + $0xa50] sm:$0xf]
                %813 = vst [vmem:[%s151 + $0x528] sm:$0xf] %v812
                %v814 = vld [vmem:[%s150 + $0xa58] sm:$0xf]
                %815 = vst [vmem:[%s151 + $0x52c] sm:$0xf] %v814
                %v816 = vld [vmem:[%s150 + $0xa60] sm:$0xf]
                %817 = vst [vmem:[%s151 + $0x530] sm:$0xf] %v816
                %v818 = vld [vmem:[%s150 + $0xa68] sm:$0xf]
                %819 = vst [vmem:[%s151 + $0x534] sm:$0xf] %v818
                %v820 = vld [vmem:[%s150 + $0xa70] sm:$0xf]
                %821 = vst [vmem:[%s151 + $0x538] sm:$0xf] %v820
                %v822 = vld [vmem:[%s150 + $0xa78] sm:$0xf]
                %823 = vst [vmem:[%s151 + $0x53c] sm:$0xf] %v822
              $region45: #{capsnet_forward.3} parent=39 // loop_footer
                %s149 = sadd.s32 1, %s145
              $region46: #{capsnet_forward.3} parent=39 // loop_footer_branch
                %144 = sbr.rel target = $region42
              $region47: #{capsnet_forward.3} parent=39 // loop_exit
                _
            $region40: #{capsnet_forward.3} parent=31 // pred_fallthru
              _
          $region32: #{capsnet_forward.3} parent=27 // pred_fallthru
            _
          %1515 = vnop
        $region28: #{capsnet_forward.3} parent=23 // pred_fallthru
          _
      $region24: #{capsnet_forward.3} parent=5 // pred_fallthru
        _
      %p1516 = scmp.le.s32.totalorder 1, %s9
      %p1517 = scmp.lt.s32.totalorder %s9, 3
      %p1518 = pnand %p1516, %p1517
      %p1519 = pneg %p1518
      // Predicated region
      $region66: #{capsnet_forward.3} parent=5 // pred_check
        _
      $region67: #{capsnet_forward.3} parent=5 // pred_check_branch
        %1521 = sbr.rel (%p1518) target = $region69
      $region68: #{capsnet_forward.3} parent=5 // pred_region
        %s1522 = ssub.s32 %s9, 1
        %s1523 = sand.u32 %s43, 1
        %s1524 = sand.u32 %s43, 1
        %s1525 = smul.addr %s1524, 1344
        %s1526 = scalar_lea.vmem [#allocation2], %s1525
        // Predicated region
        $region70: #{capsnet_forward.3} parent=68 // pred_check
          %p1527 = pneg %p56
        $region71: #{capsnet_forward.3} parent=68 // pred_check_branch
          %1529 = sbr.rel (%p1527) target = $region73
        $region72: #{capsnet_forward.3} parent=68 // pred_region
          _
        $region73: #{capsnet_forward.3} parent=68 // pred_fallthru
          _
        %p1530 = pneg %p30
        %p1531 = pneg %p27
        %s1532 = sand.u32 %s43, 1
        %s1533 = sand.u32 %s43, 1
        %s1534 = smul.addr %s1533, 1344
        %s1535 = scalar_lea.vmem [#allocation2], %s1534
        %p1536 = pneg %p56
        %p1537 = pneg %p53
        %p1538 = pneg %p77
        %p1539 = pneg %p74
        %p1540 = pneg %p103
        %p1541 = pneg %p100
        %s1542 = sand.u32 %s90, 1
        %s1543 = sand.u32 %s90, 1
        %s1544 = smul.addr %s1543, 32
        %s1545 = scalar_lea.vmem [#allocation3], %s1544
        %v1547 = vld [vmem:[%s0] sm:$0xff]
        %v1548 = vld [vmem:[%s0 + $0x8] sm:$0xff]
        %v1549 = vld [vmem:[%s0 + $0x10] sm:$0xff]
        %v1550 = vld [vmem:[%s0 + $0x18] sm:$0xff]
        %v1551 = vld [vmem:[%s0 + $0x20] sm:$0xff]
        %v1552 = vld [vmem:[%s0 + $0x28] sm:$0xff]
        %v1553 = vld [vmem:[%s0 + $0x30] sm:$0xff]
        %v1554 = vld [vmem:[%s0 + $0x38] sm:$0xff]
        %v1555 = vld [vmem:[%s0 + $0x40] sm:$0xff]
        %v1556 = vld [vmem:[%s0 + $0x48] sm:$0xff]
        %v1557 = vld [vmem:[%s0 + $0x50] sm:$0xf]
        %v1558 = vld [vmem:[%s0 + $0x54] sm:$0xff]
        %v1559 = vld [vmem:[%s0 + $0x5c] sm:$0xff]
        %v1560 = vld [vmem:[%s0 + $0x64] sm:$0xff]
        %v1561 = vld [vmem:[%s0 + $0x6c] sm:$0xff]
        %v1562 = vld [vmem:[%s0 + $0x74] sm:$0xff]
        %v1563 = vld [vmem:[%s0 + $0x7c] sm:$0xff]
        %v1564 = vld [vmem:[%s0 + $0x84] sm:$0xff]
        %v1565 = vld [vmem:[%s0 + $0x8c] sm:$0xff]
        %v1566 = vld [vmem:[%s0 + $0x94] sm:$0xff]
        %v1567 = vld [vmem:[%s0 + $0x9c] sm:$0xff]
        %v1568 = vld [vmem:[%s0 + $0xa4] sm:$0xf]
        %v1569 = vld [vmem:[%s0 + $0xa8] sm:$0xff]
        %v1570 = vld [vmem:[%s0 + $0xb0] sm:$0xff]
        %v1571 = vld [vmem:[%s0 + $0xb8] sm:$0xff]
        %v1572 = vld [vmem:[%s0 + $0xc0] sm:$0xff]
        %v1573 = vld [vmem:[%s0 + $0xc8] sm:$0xff]
        %v1574 = vld [vmem:[%s0 + $0xd0] sm:$0xff]
        %v1575 = vld [vmem:[%s0 + $0xd8] sm:$0xff]
        %v1576 = vld [vmem:[%s0 + $0xe0] sm:$0xff]
        %v1577 = vld [vmem:[%s0 + $0xe8] sm:$0xff]
        %v1578 = vld [vmem:[%s0 + $0xf0] sm:$0xff]
        %v1579 = vld [vmem:[%s0 + $0xf8] sm:$0xf]
        %v1580 = vld [vmem:[%s0 + $0xfc] sm:$0xff]
        %v1581 = vld [vmem:[%s0 + $0x104] sm:$0xff]
        %v1582 = vld [vmem:[%s0 + $0x10c] sm:$0xff]
        %v1583 = vld [vmem:[%s0 + $0x114] sm:$0xff]
        %v1584 = vld [vmem:[%s0 + $0x11c] sm:$0xff]
        %v1585 = vld [vmem:[%s0 + $0x124] sm:$0xff]
        %v1586 = vld [vmem:[%s0 + $0x12c] sm:$0xff]
        %v1587 = vld [vmem:[%s0 + $0x134] sm:$0xff]
        %v1588 = vld [vmem:[%s0 + $0x13c] sm:$0xff]
        %v1589 = vld [vmem:[%s0 + $0x144] sm:$0xff]
        %v1590 = vld [vmem:[%s0 + $0x14c] sm:$0xf]
        %v1591 = vld [vmem:[%s0 + $0x150] sm:$0xff]
        %v1592 = vld [vmem:[%s0 + $0x158] sm:$0xff]
        %v1593 = vld [vmem:[%s0 + $0x160] sm:$0xff]
        %v1594 = vld [vmem:[%s0 + $0x168] sm:$0xff]
        %v1595 = vld [vmem:[%s0 + $0x170] sm:$0xff]
        %v1596 = vld [vmem:[%s0 + $0x178] sm:$0xff]
        %v1597 = vld [vmem:[%s0 + $0x180] sm:$0xff]
        %v1598 = vld [vmem:[%s0 + $0x188] sm:$0xff]
        %v1599 = vld [vmem:[%s0 + $0x190] sm:$0xff]
        %v1600 = vld [vmem:[%s0 + $0x198] sm:$0xff]
        %v1601 = vld [vmem:[%s0 + $0x1a0] sm:$0xf]
        %v1602 = vld [vmem:[%s0 + $0x1a4] sm:$0xff]
        %v1603 = vld [vmem:[%s0 + $0x1ac] sm:$0xff]
        %v1604 = vld [vmem:[%s0 + $0x1b4] sm:$0xff]
        %v1605 = vld [vmem:[%s0 + $0x1bc] sm:$0xff]
        %v1606 = vld [vmem:[%s0 + $0x1c4] sm:$0xff]
        %v1607 = vld [vmem:[%s0 + $0x1cc] sm:$0xff]
        %v1608 = vld [vmem:[%s0 + $0x1d4] sm:$0xff]
        %v1609 = vld [vmem:[%s0 + $0x1dc] sm:$0xff]
        %v1610 = vld [vmem:[%s0 + $0x1e4] sm:$0xff]
        %v1611 = vld [vmem:[%s0 + $0x1ec] sm:$0xff]
        %v1612 = vld [vmem:[%s0 + $0x1f4] sm:$0xf]
        %v1613 = vld [vmem:[%s0 + $0x1f8] sm:$0xff]
        %v1614 = vld [vmem:[%s0 + $0x200] sm:$0xff]
        %v1615 = vld [vmem:[%s0 + $0x208] sm:$0xff]
        %v1616 = vld [vmem:[%s0 + $0x210] sm:$0xff]
        %v1617 = vld [vmem:[%s0 + $0x218] sm:$0xff]
        %v1618 = vld [vmem:[%s0 + $0x220] sm:$0xff]
        %v1619 = vld [vmem:[%s0 + $0x228] sm:$0xff]
        %v1620 = vld [vmem:[%s0 + $0x230] sm:$0xff]
        %v1621 = vld [vmem:[%s0 + $0x238] sm:$0xff]
        %v1622 = vld [vmem:[%s0 + $0x240] sm:$0xff]
        %v1623 = vld [vmem:[%s0 + $0x248] sm:$0xf]
        %v1624 = vld [vmem:[%s0 + $0x24c] sm:$0xff]
        %v1625 = vld [vmem:[%s0 + $0x254] sm:$0xff]
        %v1626 = vld [vmem:[%s0 + $0x25c] sm:$0xff]
        %v1627 = vld [vmem:[%s0 + $0x264] sm:$0xff]
        %v1628 = vld [vmem:[%s0 + $0x26c] sm:$0xff]
        %v1629 = vld [vmem:[%s0 + $0x274] sm:$0xff]
        %v1630 = vld [vmem:[%s0 + $0x27c] sm:$0xff]
        %v1631 = vld [vmem:[%s0 + $0x284] sm:$0xff]
        %v1632 = vld [vmem:[%s0 + $0x28c] sm:$0xff]
        %v1633 = vld [vmem:[%s0 + $0x294] sm:$0xff]
        %v1634 = vld [vmem:[%s0 + $0x29c] sm:$0xf]
        %v1635 = vld [vmem:[%s1526] sm:$0xf]
        %v1636 = vld [vmem:[%s1526 + $0x4] sm:$0xf]
        %v1637 = vld [vmem:[%s1526 + $0x8] sm:$0xf]
        %v1638 = vld [vmem:[%s1526 + $0xc] sm:$0xf]
        %v1639 = vld [vmem:[%s1526 + $0x10] sm:$0xf]
        %v1640 = vld [vmem:[%s1526 + $0x14] sm:$0xf]
        %v1641 = vld [vmem:[%s1526 + $0x18] sm:$0xf]
        %v1642 = vld [vmem:[%s1526 + $0x1c] sm:$0xf]
        %v1643 = vld [vmem:[%s1526 + $0x20] sm:$0xf]
        %v1644 = vld [vmem:[%s1526 + $0x24] sm:$0xf]
        %v1645 = vld [vmem:[%s1526 + $0x28] sm:$0xf]
        %v1646 = vld [vmem:[%s1526 + $0x2c] sm:$0xf]
        %v1647 = vld [vmem:[%s1526 + $0x30] sm:$0xf]
        %v1648 = vld [vmem:[%s1526 + $0x34] sm:$0xf]
        %v1649 = vld [vmem:[%s1526 + $0x38] sm:$0xf]
        %v1650 = vld [vmem:[%s1526 + $0x3c] sm:$0xf]
        %v1651 = vld [vmem:[%s1526 + $0x40] sm:$0xf]
        %v1652 = vld [vmem:[%s1526 + $0x44] sm:$0xf]
        %v1653 = vld [vmem:[%s1526 + $0x48] sm:$0xf]
        %v1654 = vld [vmem:[%s1526 + $0x4c] sm:$0xf]
        %v1655 = vld [vmem:[%s1526 + $0x50] sm:$0xf]
        %v1656 = vld [vmem:[%s1526 + $0x54] sm:$0xf]
        %v1657 = vld [vmem:[%s1526 + $0x58] sm:$0xf]
        %v1658 = vld [vmem:[%s1526 + $0x5c] sm:$0xf]
        %v1659 = vld [vmem:[%s1526 + $0x60] sm:$0xf]
        %v1660 = vld [vmem:[%s1526 + $0x64] sm:$0xf]
        %v1661 = vld [vmem:[%s1526 + $0x68] sm:$0xf]
        %v1662 = vld [vmem:[%s1526 + $0x6c] sm:$0xf]
        %v1663 = vld [vmem:[%s1526 + $0x70] sm:$0xf]
        %v1664 = vld [vmem:[%s1526 + $0x74] sm:$0xf]
        %v1665 = vld [vmem:[%s1526 + $0x78] sm:$0xf]
        %v1666 = vld [vmem:[%s1526 + $0x7c] sm:$0xf]
        %v1667 = vld [vmem:[%s1526 + $0x80] sm:$0xf]
        %v1668 = vld [vmem:[%s1526 + $0x84] sm:$0xf]
        %v1669 = vld [vmem:[%s1526 + $0x88] sm:$0xf]
        %v1670 = vld [vmem:[%s1526 + $0x8c] sm:$0xf]
        %v1671 = vld [vmem:[%s1526 + $0x90] sm:$0xf]
        %v1672 = vld [vmem:[%s1526 + $0x94] sm:$0xf]
        %v1673 = vld [vmem:[%s1526 + $0x98] sm:$0xf]
        %v1674 = vld [vmem:[%s1526 + $0x9c] sm:$0xf]
        %v1675 = vld [vmem:[%s1526 + $0xa0] sm:$0xf]
        %v1676 = vld [vmem:[%s1526 + $0xa4] sm:$0xf]
        %v1677 = vld [vmem:[%s1526 + $0xa8] sm:$0xf]
        %v1678 = vld [vmem:[%s1526 + $0xac] sm:$0xf]
        %v1679 = vld [vmem:[%s1526 + $0xb0] sm:$0xf]
        %v1680 = vld [vmem:[%s1526 + $0xb4] sm:$0xf]
        %v1681 = vld [vmem:[%s1526 + $0xb8] sm:$0xf]
        %v1682 = vld [vmem:[%s1526 + $0xbc] sm:$0xf]
        %v1683 = vld [vmem:[%s1526 + $0xc0] sm:$0xf]
        %v1684 = vld [vmem:[%s1526 + $0xc4] sm:$0xf]
        %v1685 = vld [vmem:[%s1526 + $0xc8] sm:$0xf]
        %v1686 = vld [vmem:[%s1526 + $0xcc] sm:$0xf]
        %v1687 = vld [vmem:[%s1526 + $0xd0] sm:$0xf]
        %v1688 = vld [vmem:[%s1526 + $0xd4] sm:$0xf]
        %v1689 = vld [vmem:[%s1526 + $0xd8] sm:$0xf]
        %v1690 = vld [vmem:[%s1526 + $0xdc] sm:$0xf]
        %v1691 = vld [vmem:[%s1526 + $0xe0] sm:$0xf]
        %v1692 = vld [vmem:[%s1526 + $0xe4] sm:$0xf]
        %v1693 = vld [vmem:[%s1526 + $0xe8] sm:$0xf]
        %v1694 = vld [vmem:[%s1526 + $0xec] sm:$0xf]
        %v1695 = vld [vmem:[%s1526 + $0xf0] sm:$0xf]
        %v1696 = vld [vmem:[%s1526 + $0xf4] sm:$0xf]
        %v1697 = vld [vmem:[%s1526 + $0xf8] sm:$0xf]
        %v1698 = vld [vmem:[%s1526 + $0xfc] sm:$0xf]
        %v1699 = vld [vmem:[%s1526 + $0x100] sm:$0xf]
        %v1700 = vld [vmem:[%s1526 + $0x104] sm:$0xf]
        %v1701 = vld [vmem:[%s1526 + $0x108] sm:$0xf]
        %v1702 = vld [vmem:[%s1526 + $0x10c] sm:$0xf]
        %v1703 = vld [vmem:[%s1526 + $0x110] sm:$0xf]
        %v1704 = vld [vmem:[%s1526 + $0x114] sm:$0xf]
        %v1705 = vld [vmem:[%s1526 + $0x118] sm:$0xf]
        %v1706 = vld [vmem:[%s1526 + $0x11c] sm:$0xf]
        %v1707 = vld [vmem:[%s1526 + $0x120] sm:$0xf]
        %v1708 = vld [vmem:[%s1526 + $0x124] sm:$0xf]
        %v1709 = vld [vmem:[%s1526 + $0x128] sm:$0xf]
        %v1710 = vld [vmem:[%s1526 + $0x12c] sm:$0xf]
        %v1711 = vld [vmem:[%s1526 + $0x130] sm:$0xf]
        %v1712 = vld [vmem:[%s1526 + $0x134] sm:$0xf]
        %v1713 = vld [vmem:[%s1526 + $0x138] sm:$0xf]
        %v1714 = vld [vmem:[%s1526 + $0x13c] sm:$0xf]
        %v1715 = vld [vmem:[%s1526 + $0x140] sm:$0xf]
        %v1716 = vld [vmem:[%s1526 + $0x144] sm:$0xf]
        %v1717 = vld [vmem:[%s1526 + $0x148] sm:$0xf]
        %v1718 = vld [vmem:[%s1526 + $0x14c] sm:$0xf]
        %v1719 = vld [vmem:[%s1526 + $0x150] sm:$0xf]
        %v1720 = vld [vmem:[%s1526 + $0x154] sm:$0xf]
        %v1721 = vld [vmem:[%s1526 + $0x158] sm:$0xf]
        %v1722 = vld [vmem:[%s1526 + $0x15c] sm:$0xf]
        %v1723 = vld [vmem:[%s1526 + $0x160] sm:$0xf]
        %v1724 = vld [vmem:[%s1526 + $0x164] sm:$0xf]
        %v1725 = vld [vmem:[%s1526 + $0x168] sm:$0xf]
        %v1726 = vld [vmem:[%s1526 + $0x16c] sm:$0xf]
        %v1727 = vld [vmem:[%s1526 + $0x170] sm:$0xf]
        %v1728 = vld [vmem:[%s1526 + $0x174] sm:$0xf]
        %v1729 = vld [vmem:[%s1526 + $0x178] sm:$0xf]
        %v1730 = vld [vmem:[%s1526 + $0x17c] sm:$0xf]
        %v1731 = vld [vmem:[%s1526 + $0x180] sm:$0xf]
        %v1732 = vld [vmem:[%s1526 + $0x184] sm:$0xf]
        %v1733 = vld [vmem:[%s1526 + $0x188] sm:$0xf]
        %v1734 = vld [vmem:[%s1526 + $0x18c] sm:$0xf]
        %v1735 = vld [vmem:[%s1526 + $0x190] sm:$0xf]
        %v1736 = vld [vmem:[%s1526 + $0x194] sm:$0xf]
        %v1737 = vld [vmem:[%s1526 + $0x198] sm:$0xf]
        %v1738 = vld [vmem:[%s1526 + $0x19c] sm:$0xf]
        %v1739 = vld [vmem:[%s1526 + $0x1a0] sm:$0xf]
        %v1740 = vld [vmem:[%s1526 + $0x1a4] sm:$0xf]
        %v1741 = vld [vmem:[%s1526 + $0x1a8] sm:$0xf]
        %v1742 = vld [vmem:[%s1526 + $0x1ac] sm:$0xf]
        %v1743 = vld [vmem:[%s1526 + $0x1b0] sm:$0xf]
        %v1744 = vld [vmem:[%s1526 + $0x1b4] sm:$0xf]
        %v1745 = vld [vmem:[%s1526 + $0x1b8] sm:$0xf]
        %v1746 = vld [vmem:[%s1526 + $0x1bc] sm:$0xf]
        %v1747 = vld [vmem:[%s1526 + $0x1c0] sm:$0xf]
        %v1748 = vld [vmem:[%s1526 + $0x1c4] sm:$0xf]
        %v1749 = vld [vmem:[%s1526 + $0x1c8] sm:$0xf]
        %v1750 = vld [vmem:[%s1526 + $0x1cc] sm:$0xf]
        %v1751 = vld [vmem:[%s1526 + $0x1d0] sm:$0xf]
        %v1752 = vld [vmem:[%s1526 + $0x1d4] sm:$0xf]
        %v1753 = vld [vmem:[%s1526 + $0x1d8] sm:$0xf]
        %v1754 = vld [vmem:[%s1526 + $0x1dc] sm:$0xf]
        %v1755 = vld [vmem:[%s1526 + $0x1e0] sm:$0xf]
        %v1756 = vld [vmem:[%s1526 + $0x1e4] sm:$0xf]
        %v1757 = vld [vmem:[%s1526 + $0x1e8] sm:$0xf]
        %v1758 = vld [vmem:[%s1526 + $0x1ec] sm:$0xf]
        %v1759 = vld [vmem:[%s1526 + $0x1f0] sm:$0xf]
        %v1760 = vld [vmem:[%s1526 + $0x1f4] sm:$0xf]
        %v1761 = vld [vmem:[%s1526 + $0x1f8] sm:$0xf]
        %v1762 = vld [vmem:[%s1526 + $0x1fc] sm:$0xf]
        %v1763 = vld [vmem:[%s1526 + $0x200] sm:$0xf]
        %v1764 = vld [vmem:[%s1526 + $0x204] sm:$0xf]
        %v1765 = vld [vmem:[%s1526 + $0x208] sm:$0xf]
        %v1766 = vld [vmem:[%s1526 + $0x20c] sm:$0xf]
        %v1767 = vld [vmem:[%s1526 + $0x210] sm:$0xf]
        %v1768 = vld [vmem:[%s1526 + $0x214] sm:$0xf]
        %v1769 = vld [vmem:[%s1526 + $0x218] sm:$0xf]
        %v1770 = vld [vmem:[%s1526 + $0x21c] sm:$0xf]
        %v1771 = vld [vmem:[%s1526 + $0x220] sm:$0xf]
        %v1772 = vld [vmem:[%s1526 + $0x224] sm:$0xf]
        %v1773 = vld [vmem:[%s1526 + $0x228] sm:$0xf]
        %v1774 = vld [vmem:[%s1526 + $0x22c] sm:$0xf]
        %v1775 = vld [vmem:[%s1526 + $0x230] sm:$0xf]
        %v1776 = vld [vmem:[%s1526 + $0x234] sm:$0xf]
        %v1777 = vld [vmem:[%s1526 + $0x238] sm:$0xf]
        %v1778 = vld [vmem:[%s1526 + $0x23c] sm:$0xf]
        %v1779 = vld [vmem:[%s1526 + $0x240] sm:$0xf]
        %v1780 = vld [vmem:[%s1526 + $0x244] sm:$0xf]
        %v1781 = vld [vmem:[%s1526 + $0x248] sm:$0xf]
        %v1782 = vld [vmem:[%s1526 + $0x24c] sm:$0xf]
        %v1783 = vld [vmem:[%s1526 + $0x250] sm:$0xf]
        %v1784 = vld [vmem:[%s1526 + $0x254] sm:$0xf]
        %v1785 = vld [vmem:[%s1526 + $0x258] sm:$0xf]
        %v1786 = vld [vmem:[%s1526 + $0x25c] sm:$0xf]
        %v1787 = vld [vmem:[%s1526 + $0x260] sm:$0xf]
        %v1788 = vld [vmem:[%s1526 + $0x264] sm:$0xf]
        %v1789 = vld [vmem:[%s1526 + $0x268] sm:$0xf]
        %v1790 = vld [vmem:[%s1526 + $0x26c] sm:$0xf]
        %v1791 = vld [vmem:[%s1526 + $0x270] sm:$0xf]
        %v1792 = vld [vmem:[%s1526 + $0x274] sm:$0xf]
        %v1793 = vld [vmem:[%s1526 + $0x278] sm:$0xf]
        %v1794 = vld [vmem:[%s1526 + $0x27c] sm:$0xf]
        %v1795 = vld [vmem:[%s1526 + $0x280] sm:$0xf]
        %v1796 = vld [vmem:[%s1526 + $0x284] sm:$0xf]
        %v1797 = vld [vmem:[%s1526 + $0x288] sm:$0xf]
        %v1798 = vld [vmem:[%s1526 + $0x28c] sm:$0xf]
        %v1799 = vld [vmem:[%s1526 + $0x290] sm:$0xf]
        %v1800 = vld [vmem:[%s1526 + $0x294] sm:$0xf]
        %v1801 = vld [vmem:[%s1526 + $0x298] sm:$0xf]
        %v1802 = vld [vmem:[%s1526 + $0x29c] sm:$0xf]
        %v1803 = vld [vmem:[%s1526 + $0x2a0] sm:$0xf]
        %v1804 = vld [vmem:[%s1526 + $0x2a4] sm:$0xf]
        %v1805 = vld [vmem:[%s1526 + $0x2a8] sm:$0xf]
        %v1806 = vld [vmem:[%s1526 + $0x2ac] sm:$0xf]
        %v1807 = vld [vmem:[%s1526 + $0x2b0] sm:$0xf]
        %v1808 = vld [vmem:[%s1526 + $0x2b4] sm:$0xf]
        %v1809 = vld [vmem:[%s1526 + $0x2b8] sm:$0xf]
        %v1810 = vld [vmem:[%s1526 + $0x2bc] sm:$0xf]
        %v1811 = vld [vmem:[%s1526 + $0x2c0] sm:$0xf]
        %v1812 = vld [vmem:[%s1526 + $0x2c4] sm:$0xf]
        %v1813 = vld [vmem:[%s1526 + $0x2c8] sm:$0xf]
        %v1814 = vld [vmem:[%s1526 + $0x2cc] sm:$0xf]
        %v1815 = vld [vmem:[%s1526 + $0x2d0] sm:$0xf]
        %v1816 = vld [vmem:[%s1526 + $0x2d4] sm:$0xf]
        %v1817 = vld [vmem:[%s1526 + $0x2d8] sm:$0xf]
        %v1818 = vld [vmem:[%s1526 + $0x2dc] sm:$0xf]
        %v1819 = vld [vmem:[%s1526 + $0x2e0] sm:$0xf]
        %v1820 = vld [vmem:[%s1526 + $0x2e4] sm:$0xf]
        %v1821 = vld [vmem:[%s1526 + $0x2e8] sm:$0xf]
        %v1822 = vld [vmem:[%s1526 + $0x2ec] sm:$0xf]
        %v1823 = vld [vmem:[%s1526 + $0x2f0] sm:$0xf]
        %v1824 = vld [vmem:[%s1526 + $0x2f4] sm:$0xf]
        %v1825 = vld [vmem:[%s1526 + $0x2f8] sm:$0xf]
        %v1826 = vld [vmem:[%s1526 + $0x2fc] sm:$0xf]
        %v1827 = vld [vmem:[%s1526 + $0x300] sm:$0xf]
        %v1828 = vld [vmem:[%s1526 + $0x304] sm:$0xf]
        %v1829 = vld [vmem:[%s1526 + $0x308] sm:$0xf]
        %v1830 = vld [vmem:[%s1526 + $0x30c] sm:$0xf]
        %v1831 = vld [vmem:[%s1526 + $0x310] sm:$0xf]
        %v1832 = vld [vmem:[%s1526 + $0x314] sm:$0xf]
        %v1833 = vld [vmem:[%s1526 + $0x318] sm:$0xf]
        %v1834 = vld [vmem:[%s1526 + $0x31c] sm:$0xf]
        %v1835 = vld [vmem:[%s1526 + $0x320] sm:$0xf]
        %v1836 = vld [vmem:[%s1526 + $0x324] sm:$0xf]
        %v1837 = vld [vmem:[%s1526 + $0x328] sm:$0xf]
        %v1838 = vld [vmem:[%s1526 + $0x32c] sm:$0xf]
        %v1839 = vld [vmem:[%s1526 + $0x330] sm:$0xf]
        %v1840 = vld [vmem:[%s1526 + $0x334] sm:$0xf]
        %v1841 = vld [vmem:[%s1526 + $0x338] sm:$0xf]
        %v1842 = vld [vmem:[%s1526 + $0x33c] sm:$0xf]
        %v1843 = vld [vmem:[%s1526 + $0x340] sm:$0xf]
        %v1844 = vld [vmem:[%s1526 + $0x344] sm:$0xf]
        %v1845 = vld [vmem:[%s1526 + $0x348] sm:$0xf]
        %v1846 = vld [vmem:[%s1526 + $0x34c] sm:$0xf]
        %v1847 = vld [vmem:[%s1526 + $0x350] sm:$0xf]
        %v1848 = vld [vmem:[%s1526 + $0x354] sm:$0xf]
        %v1849 = vld [vmem:[%s1526 + $0x358] sm:$0xf]
        %v1850 = vld [vmem:[%s1526 + $0x35c] sm:$0xf]
        %v1851 = vld [vmem:[%s1526 + $0x360] sm:$0xf]
        %v1852 = vld [vmem:[%s1526 + $0x364] sm:$0xf]
        %v1853 = vld [vmem:[%s1526 + $0x368] sm:$0xf]
        %v1854 = vld [vmem:[%s1526 + $0x36c] sm:$0xf]
        %v1855 = vld [vmem:[%s1526 + $0x370] sm:$0xf]
        %v1856 = vld [vmem:[%s1526 + $0x374] sm:$0xf]
        %v1857 = vld [vmem:[%s1526 + $0x378] sm:$0xf]
        %v1858 = vld [vmem:[%s1526 + $0x37c] sm:$0xf]
        %v1859 = vld [vmem:[%s1526 + $0x380] sm:$0xf]
        %v1860 = vld [vmem:[%s1526 + $0x384] sm:$0xf]
        %v1861 = vld [vmem:[%s1526 + $0x388] sm:$0xf]
        %v1862 = vld [vmem:[%s1526 + $0x38c] sm:$0xf]
        %v1863 = vld [vmem:[%s1526 + $0x390] sm:$0xf]
        %v1864 = vld [vmem:[%s1526 + $0x394] sm:$0xf]
        %v1865 = vld [vmem:[%s1526 + $0x398] sm:$0xf]
        %v1866 = vld [vmem:[%s1526 + $0x39c] sm:$0xf]
        %v1867 = vld [vmem:[%s1526 + $0x3a0] sm:$0xf]
        %v1868 = vld [vmem:[%s1526 + $0x3a4] sm:$0xf]
        %v1869 = vld [vmem:[%s1526 + $0x3a8] sm:$0xf]
        %v1870 = vld [vmem:[%s1526 + $0x3ac] sm:$0xf]
        %v1871 = vld [vmem:[%s1526 + $0x3b0] sm:$0xf]
        %v1872 = vld [vmem:[%s1526 + $0x3b4] sm:$0xf]
        %v1873 = vld [vmem:[%s1526 + $0x3b8] sm:$0xf]
        %v1874 = vld [vmem:[%s1526 + $0x3bc] sm:$0xf]
        %v1875 = vld [vmem:[%s1526 + $0x3c0] sm:$0xf]
        %v1876 = vld [vmem:[%s1526 + $0x3c4] sm:$0xf]
        %v1877 = vld [vmem:[%s1526 + $0x3c8] sm:$0xf]
        %v1878 = vld [vmem:[%s1526 + $0x3cc] sm:$0xf]
        %v1879 = vld [vmem:[%s1526 + $0x3d0] sm:$0xf]
        %v1880 = vld [vmem:[%s1526 + $0x3d4] sm:$0xf]
        %v1881 = vld [vmem:[%s1526 + $0x3d8] sm:$0xf]
        %v1882 = vld [vmem:[%s1526 + $0x3dc] sm:$0xf]
        %v1883 = vld [vmem:[%s1526 + $0x3e0] sm:$0xf]
        %v1884 = vld [vmem:[%s1526 + $0x3e4] sm:$0xf]
        %v1885 = vld [vmem:[%s1526 + $0x3e8] sm:$0xf]
        %v1886 = vld [vmem:[%s1526 + $0x3ec] sm:$0xf]
        %v1887 = vld [vmem:[%s1526 + $0x3f0] sm:$0xf]
        %v1888 = vld [vmem:[%s1526 + $0x3f4] sm:$0xf]
        %v1889 = vld [vmem:[%s1526 + $0x3f8] sm:$0xf]
        %v1890 = vld [vmem:[%s1526 + $0x3fc] sm:$0xf]
        %v1891 = vld [vmem:[%s1526 + $0x400] sm:$0xf]
        %v1892 = vld [vmem:[%s1526 + $0x404] sm:$0xf]
        %v1893 = vld [vmem:[%s1526 + $0x408] sm:$0xf]
        %v1894 = vld [vmem:[%s1526 + $0x40c] sm:$0xf]
        %v1895 = vld [vmem:[%s1526 + $0x410] sm:$0xf]
        %v1896 = vld [vmem:[%s1526 + $0x414] sm:$0xf]
        %v1897 = vld [vmem:[%s1526 + $0x418] sm:$0xf]
        %v1898 = vld [vmem:[%s1526 + $0x41c] sm:$0xf]
        %v1899 = vld [vmem:[%s1526 + $0x420] sm:$0xf]
        %v1900 = vld [vmem:[%s1526 + $0x424] sm:$0xf]
        %v1901 = vld [vmem:[%s1526 + $0x428] sm:$0xf]
        %v1902 = vld [vmem:[%s1526 + $0x42c] sm:$0xf]
        %v1903 = vld [vmem:[%s1526 + $0x430] sm:$0xf]
        %v1904 = vld [vmem:[%s1526 + $0x434] sm:$0xf]
        %v1905 = vld [vmem:[%s1526 + $0x438] sm:$0xf]
        %v1906 = vld [vmem:[%s1526 + $0x43c] sm:$0xf]
        %v1907 = vld [vmem:[%s1526 + $0x440] sm:$0xf]
        %v1908 = vld [vmem:[%s1526 + $0x444] sm:$0xf]
        %v1909 = vld [vmem:[%s1526 + $0x448] sm:$0xf]
        %v1910 = vld [vmem:[%s1526 + $0x44c] sm:$0xf]
        %v1911 = vld [vmem:[%s1526 + $0x450] sm:$0xf]
        %v1912 = vld [vmem:[%s1526 + $0x454] sm:$0xf]
        %v1913 = vld [vmem:[%s1526 + $0x458] sm:$0xf]
        %v1914 = vld [vmem:[%s1526 + $0x45c] sm:$0xf]
        %v1915 = vld [vmem:[%s1526 + $0x460] sm:$0xf]
        %v1916 = vld [vmem:[%s1526 + $0x464] sm:$0xf]
        %v1917 = vld [vmem:[%s1526 + $0x468] sm:$0xf]
        %v1918 = vld [vmem:[%s1526 + $0x46c] sm:$0xf]
        %v1919 = vld [vmem:[%s1526 + $0x470] sm:$0xf]
        %v1920 = vld [vmem:[%s1526 + $0x474] sm:$0xf]
        %v1921 = vld [vmem:[%s1526 + $0x478] sm:$0xf]
        %v1922 = vld [vmem:[%s1526 + $0x47c] sm:$0xf]
        %v1923 = vld [vmem:[%s1526 + $0x480] sm:$0xf]
        %v1924 = vld [vmem:[%s1526 + $0x484] sm:$0xf]
        %v1925 = vld [vmem:[%s1526 + $0x488] sm:$0xf]
        %v1926 = vld [vmem:[%s1526 + $0x48c] sm:$0xf]
        %v1927 = vld [vmem:[%s1526 + $0x490] sm:$0xf]
        %v1928 = vld [vmem:[%s1526 + $0x494] sm:$0xf]
        %v1929 = vld [vmem:[%s1526 + $0x498] sm:$0xf]
        %v1930 = vld [vmem:[%s1526 + $0x49c] sm:$0xf]
        %v1931 = vld [vmem:[%s1526 + $0x4a0] sm:$0xf]
        %v1932 = vld [vmem:[%s1526 + $0x4a4] sm:$0xf]
        %v1933 = vld [vmem:[%s1526 + $0x4a8] sm:$0xf]
        %v1934 = vld [vmem:[%s1526 + $0x4ac] sm:$0xf]
        %v1935 = vld [vmem:[%s1526 + $0x4b0] sm:$0xf]
        %v1936 = vld [vmem:[%s1526 + $0x4b4] sm:$0xf]
        %v1937 = vld [vmem:[%s1526 + $0x4b8] sm:$0xf]
        %v1938 = vld [vmem:[%s1526 + $0x4bc] sm:$0xf]
        %v1939 = vld [vmem:[%s1526 + $0x4c0] sm:$0xf]
        %v1940 = vld [vmem:[%s1526 + $0x4c4] sm:$0xf]
        %v1941 = vld [vmem:[%s1526 + $0x4c8] sm:$0xf]
        %v1942 = vld [vmem:[%s1526 + $0x4cc] sm:$0xf]
        %v1943 = vld [vmem:[%s1526 + $0x4d0] sm:$0xf]
        %v1944 = vld [vmem:[%s1526 + $0x4d4] sm:$0xf]
        %v1945 = vld [vmem:[%s1526 + $0x4d8] sm:$0xf]
        %v1946 = vld [vmem:[%s1526 + $0x4dc] sm:$0xf]
        %v1947 = vld [vmem:[%s1526 + $0x4e0] sm:$0xf]
        %v1948 = vld [vmem:[%s1526 + $0x4e4] sm:$0xf]
        %v1949 = vld [vmem:[%s1526 + $0x4e8] sm:$0xf]
        %v1950 = vld [vmem:[%s1526 + $0x4ec] sm:$0xf]
        %v1951 = vld [vmem:[%s1526 + $0x4f0] sm:$0xf]
        %v1952 = vld [vmem:[%s1526 + $0x4f4] sm:$0xf]
        %v1953 = vld [vmem:[%s1526 + $0x4f8] sm:$0xf]
        %v1954 = vld [vmem:[%s1526 + $0x4fc] sm:$0xf]
        %v1955 = vld [vmem:[%s1526 + $0x500] sm:$0xf]
        %v1956 = vld [vmem:[%s1526 + $0x504] sm:$0xf]
        %v1957 = vld [vmem:[%s1526 + $0x508] sm:$0xf]
        %v1958 = vld [vmem:[%s1526 + $0x50c] sm:$0xf]
        %v1959 = vld [vmem:[%s1526 + $0x510] sm:$0xf]
        %v1960 = vld [vmem:[%s1526 + $0x514] sm:$0xf]
        %v1961 = vld [vmem:[%s1526 + $0x518] sm:$0xf]
        %v1962 = vld [vmem:[%s1526 + $0x51c] sm:$0xf]
        %v1963 = vld [vmem:[%s1526 + $0x520] sm:$0xf]
        %v1964 = vld [vmem:[%s1526 + $0x524] sm:$0xf]
        %v1965 = vld [vmem:[%s1526 + $0x528] sm:$0xf]
        %v1966 = vld [vmem:[%s1526 + $0x52c] sm:$0xf]
        %v1967 = vld [vmem:[%s1526 + $0x530] sm:$0xf]
        %v1968 = vld [vmem:[%s1526 + $0x534] sm:$0xf]
        %v1969 = vld [vmem:[%s1526 + $0x538] sm:$0xf]
        %v1970 = vld [vmem:[%s1526 + $0x53c] sm:$0xf]
        %v1971 = vld [vmem:[%s2] sm:$0xff]
        %v1972 = vld [vmem:[%s2 + $0x8] sm:$0xff]
        %v1973 = vld [vmem:[%s2 + $0x10] sm:$0xff]
        %v1974 = vld [vmem:[%s2 + $0x18] sm:$0xff]
        %v1975 = vld [vmem:[%s2 + $0x20] sm:$0xff]
        %v1976 = vld [vmem:[%s2 + $0x28] sm:$0xff]
        %v1977 = vld [vmem:[%s2 + $0x30] sm:$0xff]
        %v1978 = vld [vmem:[%s2 + $0x38] sm:$0xff]
        %1980 = vset.pattern.permute.xlu0 0
        %1981 = vperm.xlu0 %1980, %v1971
        %v1982 = vpop.permute.xlu0 %1981
        %1985 = vset.pattern.permute.xlu0 0
        %1986 = vperm.xlu0 %1985, %v1972
        %v1987 = vpop.permute.xlu0 %1986
        %1990 = vset.pattern.permute.xlu0 0
        %1991 = vperm.xlu0 %1990, %v1973
        %v1992 = vpop.permute.xlu0 %1991
        %1995 = vset.pattern.permute.xlu0 0
        %1996 = vperm.xlu0 %1995, %v1974
        %v1997 = vpop.permute.xlu0 %1996
        %2000 = vset.pattern.permute.xlu0 0
        %2001 = vperm.xlu0 %2000, %v1975
        %v2002 = vpop.permute.xlu0 %2001
        %2005 = vset.pattern.permute.xlu0 0
        %2006 = vperm.xlu0 %2005, %v1976
        %v2007 = vpop.permute.xlu0 %2006
        %2010 = vset.pattern.permute.xlu0 0
        %2011 = vperm.xlu0 %2010, %v1977
        %v2012 = vpop.permute.xlu0 %2011
        %2015 = vset.pattern.permute.xlu0 0
        %2016 = vperm.xlu0 %2015, %v1978
        %v2017 = vpop.permute.xlu0 %2016
        %v2107 = vunpack.c.l.b16 %v1547
        %v2108 = vunpack.c.h.b16 %v1547
        %v2109 = vunpack.c.l.b16 %v1548
        %v2110 = vunpack.c.h.b16 %v1548
        %v2111 = vunpack.c.l.b16 %v1549
        %v2112 = vunpack.c.h.b16 %v1549
        %v2113 = vunpack.c.l.b16 %v1550
        %v2114 = vunpack.c.h.b16 %v1550
        %v2115 = vunpack.c.l.b16 %v1551
        %v2116 = vunpack.c.h.b16 %v1551
        %v2117 = vunpack.c.l.b16 %v1552
        %v2118 = vunpack.c.h.b16 %v1552
        %v2119 = vunpack.c.l.b16 %v1553
        %v2120 = vunpack.c.h.b16 %v1553
        %v2121 = vunpack.c.l.b16 %v1554
        %v2122 = vunpack.c.h.b16 %v1554
        %v2123 = vunpack.c.l.b16 %v1555
        %v2124 = vunpack.c.h.b16 %v1555
        %v2125 = vunpack.c.l.b16 %v1556
        %v2126 = vunpack.c.h.b16 %v1556
        %v2127 = vunpack.c.l.b16 %v1557
        %v2128 = vunpack.c.l.b16 %v1558
        %v2129 = vunpack.c.h.b16 %v1558
        %v2130 = vunpack.c.l.b16 %v1559
        %v2131 = vunpack.c.h.b16 %v1559
        %v2132 = vunpack.c.l.b16 %v1560
        %v2133 = vunpack.c.h.b16 %v1560
        %v2134 = vunpack.c.l.b16 %v1561
        %v2135 = vunpack.c.h.b16 %v1561
        %v2136 = vunpack.c.l.b16 %v1562
        %v2137 = vunpack.c.h.b16 %v1562
        %v2138 = vunpack.c.l.b16 %v1563
        %v2139 = vunpack.c.h.b16 %v1563
        %v2140 = vunpack.c.l.b16 %v1564
        %v2141 = vunpack.c.h.b16 %v1564
        %v2142 = vunpack.c.l.b16 %v1565
        %v2143 = vunpack.c.h.b16 %v1565
        %v2144 = vunpack.c.l.b16 %v1566
        %v2145 = vunpack.c.h.b16 %v1566
        %v2146 = vunpack.c.l.b16 %v1567
        %v2147 = vunpack.c.h.b16 %v1567
        %v2148 = vunpack.c.l.b16 %v1568
        %v2149 = vunpack.c.l.b16 %v1569
        %v2150 = vunpack.c.h.b16 %v1569
        %v2151 = vunpack.c.l.b16 %v1570
        %v2152 = vunpack.c.h.b16 %v1570
        %v2153 = vunpack.c.l.b16 %v1571
        %v2154 = vunpack.c.h.b16 %v1571
        %v2155 = vunpack.c.l.b16 %v1572
        %v2156 = vunpack.c.h.b16 %v1572
        %v2157 = vunpack.c.l.b16 %v1573
        %v2158 = vunpack.c.h.b16 %v1573
        %v2159 = vunpack.c.l.b16 %v1574
        %v2160 = vunpack.c.h.b16 %v1574
        %v2161 = vunpack.c.l.b16 %v1575
        %v2162 = vunpack.c.h.b16 %v1575
        %v2163 = vunpack.c.l.b16 %v1576
        %v2164 = vunpack.c.h.b16 %v1576
        %v2165 = vunpack.c.l.b16 %v1577
        %v2166 = vunpack.c.h.b16 %v1577
        %v2167 = vunpack.c.l.b16 %v1578
        %v2168 = vunpack.c.h.b16 %v1578
        %v2169 = vunpack.c.l.b16 %v1579
        %v2170 = vunpack.c.l.b16 %v1580
        %v2171 = vunpack.c.h.b16 %v1580
        %v2172 = vunpack.c.l.b16 %v1581
        %v2173 = vunpack.c.h.b16 %v1581
        %v2174 = vunpack.c.l.b16 %v1582
        %v2175 = vunpack.c.h.b16 %v1582
        %v2176 = vunpack.c.l.b16 %v1583
        %v2177 = vunpack.c.h.b16 %v1583
        %v2178 = vunpack.c.l.b16 %v1584
        %v2179 = vunpack.c.h.b16 %v1584
        %v2180 = vunpack.c.l.b16 %v1585
        %v2181 = vunpack.c.h.b16 %v1585
        %v2182 = vunpack.c.l.b16 %v1586
        %v2183 = vunpack.c.h.b16 %v1586
        %v2184 = vunpack.c.l.b16 %v1587
        %v2185 = vunpack.c.h.b16 %v1587
        %v2186 = vunpack.c.l.b16 %v1588
        %v2187 = vunpack.c.h.b16 %v1588
        %v2188 = vunpack.c.l.b16 %v1589
        %v2189 = vunpack.c.h.b16 %v1589
        %v2190 = vunpack.c.l.b16 %v1590
        %v2191 = vunpack.c.l.b16 %v1591
        %v2192 = vunpack.c.h.b16 %v1591
        %v2193 = vunpack.c.l.b16 %v1592
        %v2194 = vunpack.c.h.b16 %v1592
        %v2195 = vunpack.c.l.b16 %v1593
        %v2196 = vunpack.c.h.b16 %v1593
        %v2197 = vunpack.c.l.b16 %v1594
        %v2198 = vunpack.c.h.b16 %v1594
        %v2199 = vunpack.c.l.b16 %v1595
        %v2200 = vunpack.c.h.b16 %v1595
        %v2201 = vunpack.c.l.b16 %v1596
        %v2202 = vunpack.c.h.b16 %v1596
        %v2203 = vunpack.c.l.b16 %v1597
        %v2204 = vunpack.c.h.b16 %v1597
        %v2205 = vunpack.c.l.b16 %v1598
        %v2206 = vunpack.c.h.b16 %v1598
        %v2207 = vunpack.c.l.b16 %v1599
        %v2208 = vunpack.c.h.b16 %v1599
        %v2209 = vunpack.c.l.b16 %v1600
        %v2210 = vunpack.c.h.b16 %v1600
        %v2211 = vunpack.c.l.b16 %v1601
        %v2212 = vunpack.c.l.b16 %v1602
        %v2213 = vunpack.c.h.b16 %v1602
        %v2214 = vunpack.c.l.b16 %v1603
        %v2215 = vunpack.c.h.b16 %v1603
        %v2216 = vunpack.c.l.b16 %v1604
        %v2217 = vunpack.c.h.b16 %v1604
        %v2218 = vunpack.c.l.b16 %v1605
        %v2219 = vunpack.c.h.b16 %v1605
        %v2220 = vunpack.c.l.b16 %v1606
        %v2221 = vunpack.c.h.b16 %v1606
        %v2222 = vunpack.c.l.b16 %v1607
        %v2223 = vunpack.c.h.b16 %v1607
        %v2224 = vunpack.c.l.b16 %v1608
        %v2225 = vunpack.c.h.b16 %v1608
        %v2226 = vunpack.c.l.b16 %v1609
        %v2227 = vunpack.c.h.b16 %v1609
        %v2228 = vunpack.c.l.b16 %v1610
        %v2229 = vunpack.c.h.b16 %v1610
        %v2230 = vunpack.c.l.b16 %v1611
        %v2231 = vunpack.c.h.b16 %v1611
        %v2232 = vunpack.c.l.b16 %v1612
        %v2233 = vunpack.c.l.b16 %v1613
        %v2234 = vunpack.c.h.b16 %v1613
        %v2235 = vunpack.c.l.b16 %v1614
        %v2236 = vunpack.c.h.b16 %v1614
        %v2237 = vunpack.c.l.b16 %v1615
        %v2238 = vunpack.c.h.b16 %v1615
        %v2239 = vunpack.c.l.b16 %v1616
        %v2240 = vunpack.c.h.b16 %v1616
        %v2241 = vunpack.c.l.b16 %v1617
        %v2242 = vunpack.c.h.b16 %v1617
        %v2243 = vunpack.c.l.b16 %v1618
        %v2244 = vunpack.c.h.b16 %v1618
        %v2245 = vunpack.c.l.b16 %v1619
        %v2246 = vunpack.c.h.b16 %v1619
        %v2247 = vunpack.c.l.b16 %v1620
        %v2248 = vunpack.c.h.b16 %v1620
        %v2249 = vunpack.c.l.b16 %v1621
        %v2250 = vunpack.c.h.b16 %v1621
        %v2251 = vunpack.c.l.b16 %v1622
        %v2252 = vunpack.c.h.b16 %v1622
        %v2253 = vunpack.c.l.b16 %v1623
        %v2254 = vunpack.c.l.b16 %v1624
        %v2255 = vunpack.c.h.b16 %v1624
        %v2256 = vunpack.c.l.b16 %v1625
        %v2257 = vunpack.c.h.b16 %v1625
        %v2258 = vunpack.c.l.b16 %v1626
        %v2259 = vunpack.c.h.b16 %v1626
        %v2260 = vunpack.c.l.b16 %v1627
        %v2261 = vunpack.c.h.b16 %v1627
        %v2262 = vunpack.c.l.b16 %v1628
        %v2263 = vunpack.c.h.b16 %v1628
        %v2264 = vunpack.c.l.b16 %v1629
        %v2265 = vunpack.c.h.b16 %v1629
        %v2266 = vunpack.c.l.b16 %v1630
        %v2267 = vunpack.c.h.b16 %v1630
        %v2268 = vunpack.c.l.b16 %v1631
        %v2269 = vunpack.c.h.b16 %v1631
        %v2270 = vunpack.c.l.b16 %v1632
        %v2271 = vunpack.c.h.b16 %v1632
        %v2272 = vunpack.c.l.b16 %v1633
        %v2273 = vunpack.c.h.b16 %v1633
        %v2274 = vunpack.c.l.b16 %v1634
        %v2275 = vpack.c.b16 %v2128, %v2107
        %v2276 = vpack.c.b16 %v2129, %v2108
        %v2277 = vpack.c.b16 %v2130, %v2109
        %v2278 = vpack.c.b16 %v2131, %v2110
        %v2279 = vpack.c.b16 %v2132, %v2111
        %v2280 = vpack.c.b16 %v2133, %v2112
        %v2281 = vpack.c.b16 %v2134, %v2113
        %v2282 = vpack.c.b16 %v2135, %v2114
        %v2283 = vpack.c.b16 %v2136, %v2115
        %v2284 = vpack.c.b16 %v2137, %v2116
        %v2285 = vpack.c.b16 %v2138, %v2117
        %v2286 = vpack.c.b16 %v2139, %v2118
        %v2287 = vpack.c.b16 %v2140, %v2119
        %v2288 = vpack.c.b16 %v2141, %v2120
        %v2289 = vpack.c.b16 %v2142, %v2121
        %v2290 = vpack.c.b16 %v2143, %v2122
        %v2291 = vpack.c.b16 %v2144, %v2123
        %v2292 = vpack.c.b16 %v2145, %v2124
        %v2293 = vpack.c.b16 %v2146, %v2125
        %v2294 = vpack.c.b16 %v2147, %v2126
        %v2295 = vpack.c.b16 %v2148, %v2127
        %v2296 = vpack.c.b16 %v2170, %v2149
        %v2297 = vpack.c.b16 %v2171, %v2150
        %v2298 = vpack.c.b16 %v2172, %v2151
        %v2299 = vpack.c.b16 %v2173, %v2152
        %v2300 = vpack.c.b16 %v2174, %v2153
        %v2301 = vpack.c.b16 %v2175, %v2154
        %v2302 = vpack.c.b16 %v2176, %v2155
        %v2303 = vpack.c.b16 %v2177, %v2156
        %v2304 = vpack.c.b16 %v2178, %v2157
        %v2305 = vpack.c.b16 %v2179, %v2158
        %v2306 = vpack.c.b16 %v2180, %v2159
        %v2307 = vpack.c.b16 %v2181, %v2160
        %v2308 = vpack.c.b16 %v2182, %v2161
        %v2309 = vpack.c.b16 %v2183, %v2162
        %v2310 = vpack.c.b16 %v2184, %v2163
        %v2311 = vpack.c.b16 %v2185, %v2164
        %v2312 = vpack.c.b16 %v2186, %v2165
        %v2313 = vpack.c.b16 %v2187, %v2166
        %v2314 = vpack.c.b16 %v2188, %v2167
        %v2315 = vpack.c.b16 %v2189, %v2168
        %v2316 = vpack.c.b16 %v2190, %v2169
        %v2317 = vpack.c.b16 %v2212, %v2191
        %v2318 = vpack.c.b16 %v2213, %v2192
        %v2319 = vpack.c.b16 %v2214, %v2193
        %v2320 = vpack.c.b16 %v2215, %v2194
        %v2321 = vpack.c.b16 %v2216, %v2195
        %v2322 = vpack.c.b16 %v2217, %v2196
        %v2323 = vpack.c.b16 %v2218, %v2197
        %v2324 = vpack.c.b16 %v2219, %v2198
        %v2325 = vpack.c.b16 %v2220, %v2199
        %v2326 = vpack.c.b16 %v2221, %v2200
        %v2327 = vpack.c.b16 %v2222, %v2201
        %v2328 = vpack.c.b16 %v2223, %v2202
        %v2329 = vpack.c.b16 %v2224, %v2203
        %v2330 = vpack.c.b16 %v2225, %v2204
        %v2331 = vpack.c.b16 %v2226, %v2205
        %v2332 = vpack.c.b16 %v2227, %v2206
        %v2333 = vpack.c.b16 %v2228, %v2207
        %v2334 = vpack.c.b16 %v2229, %v2208
        %v2335 = vpack.c.b16 %v2230, %v2209
        %v2336 = vpack.c.b16 %v2231, %v2210
        %v2337 = vpack.c.b16 %v2232, %v2211
        %v2338 = vpack.c.b16 %v2254, %v2233
        %v2339 = vpack.c.b16 %v2255, %v2234
        %v2340 = vpack.c.b16 %v2256, %v2235
        %v2341 = vpack.c.b16 %v2257, %v2236
        %v2342 = vpack.c.b16 %v2258, %v2237
        %v2343 = vpack.c.b16 %v2259, %v2238
        %v2344 = vpack.c.b16 %v2260, %v2239
        %v2345 = vpack.c.b16 %v2261, %v2240
        %v2346 = vpack.c.b16 %v2262, %v2241
        %v2347 = vpack.c.b16 %v2263, %v2242
        %v2348 = vpack.c.b16 %v2264, %v2243
        %v2349 = vpack.c.b16 %v2265, %v2244
        %v2350 = vpack.c.b16 %v2266, %v2245
        %v2351 = vpack.c.b16 %v2267, %v2246
        %v2352 = vpack.c.b16 %v2268, %v2247
        %v2353 = vpack.c.b16 %v2269, %v2248
        %v2354 = vpack.c.b16 %v2270, %v2249
        %v2355 = vpack.c.b16 %v2271, %v2250
        %v2356 = vpack.c.b16 %v2272, %v2251
        %v2357 = vpack.c.b16 %v2273, %v2252
        %v2358 = vpack.c.b16 %v2274, %v2253
        %v2779 = vunpack.c.l.b16 %v1635
        %v2780 = vunpack.c.l.b16 %v1636
        %v2781 = vunpack.c.l.b16 %v1637
        %v2782 = vunpack.c.l.b16 %v1638
        %v2783 = vunpack.c.l.b16 %v1639
        %v2784 = vunpack.c.l.b16 %v1640
        %v2785 = vunpack.c.l.b16 %v1641
        %v2786 = vunpack.c.l.b16 %v1642
        %v2787 = vunpack.c.l.b16 %v1643
        %v2788 = vunpack.c.l.b16 %v1644
        %v2789 = vunpack.c.l.b16 %v1645
        %v2790 = vunpack.c.l.b16 %v1646
        %v2791 = vunpack.c.l.b16 %v1647
        %v2792 = vunpack.c.l.b16 %v1648
        %v2793 = vunpack.c.l.b16 %v1649
        %v2794 = vunpack.c.l.b16 %v1650
        %v2795 = vunpack.c.l.b16 %v1651
        %v2796 = vunpack.c.l.b16 %v1652
        %v2797 = vunpack.c.l.b16 %v1653
        %v2798 = vunpack.c.l.b16 %v1654
        %v2799 = vunpack.c.l.b16 %v1655
        %v2800 = vunpack.c.l.b16 %v1656
        %v2801 = vunpack.c.l.b16 %v1657
        %v2802 = vunpack.c.l.b16 %v1658
        %v2803 = vunpack.c.l.b16 %v1659
        %v2804 = vunpack.c.l.b16 %v1660
        %v2805 = vunpack.c.l.b16 %v1661
        %v2806 = vunpack.c.l.b16 %v1662
        %v2807 = vunpack.c.l.b16 %v1663
        %v2808 = vunpack.c.l.b16 %v1664
        %v2809 = vunpack.c.l.b16 %v1665
        %v2810 = vunpack.c.l.b16 %v1666
        %v2811 = vunpack.c.l.b16 %v1667
        %v2812 = vunpack.c.l.b16 %v1668
        %v2813 = vunpack.c.l.b16 %v1669
        %v2814 = vunpack.c.l.b16 %v1670
        %v2815 = vunpack.c.l.b16 %v1671
        %v2816 = vunpack.c.l.b16 %v1672
        %v2817 = vunpack.c.l.b16 %v1673
        %v2818 = vunpack.c.l.b16 %v1674
        %v2819 = vunpack.c.l.b16 %v1675
        %v2820 = vunpack.c.l.b16 %v1676
        %v2821 = vunpack.c.l.b16 %v1677
        %v2822 = vunpack.c.l.b16 %v1678
        %v2823 = vunpack.c.l.b16 %v1679
        %v2824 = vunpack.c.l.b16 %v1680
        %v2825 = vunpack.c.l.b16 %v1681
        %v2826 = vunpack.c.l.b16 %v1682
        %v2827 = vunpack.c.l.b16 %v1683
        %v2828 = vunpack.c.l.b16 %v1684
        %v2829 = vunpack.c.l.b16 %v1685
        %v2830 = vunpack.c.l.b16 %v1686
        %v2831 = vunpack.c.l.b16 %v1687
        %v2832 = vunpack.c.l.b16 %v1688
        %v2833 = vunpack.c.l.b16 %v1689
        %v2834 = vunpack.c.l.b16 %v1690
        %v2835 = vunpack.c.l.b16 %v1691
        %v2836 = vunpack.c.l.b16 %v1692
        %v2837 = vunpack.c.l.b16 %v1693
        %v2838 = vunpack.c.l.b16 %v1694
        %v2839 = vunpack.c.l.b16 %v1695
        %v2840 = vunpack.c.l.b16 %v1696
        %v2841 = vunpack.c.l.b16 %v1697
        %v2842 = vunpack.c.l.b16 %v1698
        %v2843 = vunpack.c.l.b16 %v1699
        %v2844 = vunpack.c.l.b16 %v1700
        %v2845 = vunpack.c.l.b16 %v1701
        %v2846 = vunpack.c.l.b16 %v1702
        %v2847 = vunpack.c.l.b16 %v1703
        %v2848 = vunpack.c.l.b16 %v1704
        %v2849 = vunpack.c.l.b16 %v1705
        %v2850 = vunpack.c.l.b16 %v1706
        %v2851 = vunpack.c.l.b16 %v1707
        %v2852 = vunpack.c.l.b16 %v1708
        %v2853 = vunpack.c.l.b16 %v1709
        %v2854 = vunpack.c.l.b16 %v1710
        %v2855 = vunpack.c.l.b16 %v1711
        %v2856 = vunpack.c.l.b16 %v1712
        %v2857 = vunpack.c.l.b16 %v1713
        %v2858 = vunpack.c.l.b16 %v1714
        %v2859 = vunpack.c.l.b16 %v1715
        %v2860 = vunpack.c.l.b16 %v1716
        %v2861 = vunpack.c.l.b16 %v1717
        %v2862 = vunpack.c.l.b16 %v1718
        %v2863 = vunpack.c.l.b16 %v1719
        %v2864 = vunpack.c.l.b16 %v1720
        %v2865 = vunpack.c.l.b16 %v1721
        %v2866 = vunpack.c.l.b16 %v1722
        %v2867 = vunpack.c.l.b16 %v1723
        %v2868 = vunpack.c.l.b16 %v1724
        %v2869 = vunpack.c.l.b16 %v1725
        %v2870 = vunpack.c.l.b16 %v1726
        %v2871 = vunpack.c.l.b16 %v1727
        %v2872 = vunpack.c.l.b16 %v1728
        %v2873 = vunpack.c.l.b16 %v1729
        %v2874 = vunpack.c.l.b16 %v1730
        %v2875 = vunpack.c.l.b16 %v1731
        %v2876 = vunpack.c.l.b16 %v1732
        %v2877 = vunpack.c.l.b16 %v1733
        %v2878 = vunpack.c.l.b16 %v1734
        %v2879 = vunpack.c.l.b16 %v1735
        %v2880 = vunpack.c.l.b16 %v1736
        %v2881 = vunpack.c.l.b16 %v1737
        %v2882 = vunpack.c.l.b16 %v1738
        %v2883 = vunpack.c.l.b16 %v1739
        %v2884 = vunpack.c.l.b16 %v1740
        %v2885 = vunpack.c.l.b16 %v1741
        %v2886 = vunpack.c.l.b16 %v1742
        %v2887 = vunpack.c.l.b16 %v1743
        %v2888 = vunpack.c.l.b16 %v1744
        %v2889 = vunpack.c.l.b16 %v1745
        %v2890 = vunpack.c.l.b16 %v1746
        %v2891 = vunpack.c.l.b16 %v1747
        %v2892 = vunpack.c.l.b16 %v1748
        %v2893 = vunpack.c.l.b16 %v1749
        %v2894 = vunpack.c.l.b16 %v1750
        %v2895 = vunpack.c.l.b16 %v1751
        %v2896 = vunpack.c.l.b16 %v1752
        %v2897 = vunpack.c.l.b16 %v1753
        %v2898 = vunpack.c.l.b16 %v1754
        %v2899 = vunpack.c.l.b16 %v1755
        %v2900 = vunpack.c.l.b16 %v1756
        %v2901 = vunpack.c.l.b16 %v1757
        %v2902 = vunpack.c.l.b16 %v1758
        %v2903 = vunpack.c.l.b16 %v1759
        %v2904 = vunpack.c.l.b16 %v1760
        %v2905 = vunpack.c.l.b16 %v1761
        %v2906 = vunpack.c.l.b16 %v1762
        %v2907 = vunpack.c.l.b16 %v1763
        %v2908 = vunpack.c.l.b16 %v1764
        %v2909 = vunpack.c.l.b16 %v1765
        %v2910 = vunpack.c.l.b16 %v1766
        %v2911 = vunpack.c.l.b16 %v1767
        %v2912 = vunpack.c.l.b16 %v1768
        %v2913 = vunpack.c.l.b16 %v1769
        %v2914 = vunpack.c.l.b16 %v1770
        %v2915 = vunpack.c.l.b16 %v1771
        %v2916 = vunpack.c.l.b16 %v1772
        %v2917 = vunpack.c.l.b16 %v1773
        %v2918 = vunpack.c.l.b16 %v1774
        %v2919 = vunpack.c.l.b16 %v1775
        %v2920 = vunpack.c.l.b16 %v1776
        %v2921 = vunpack.c.l.b16 %v1777
        %v2922 = vunpack.c.l.b16 %v1778
        %v2923 = vunpack.c.l.b16 %v1779
        %v2924 = vunpack.c.l.b16 %v1780
        %v2925 = vunpack.c.l.b16 %v1781
        %v2926 = vunpack.c.l.b16 %v1782
        %v2927 = vunpack.c.l.b16 %v1783
        %v2928 = vunpack.c.l.b16 %v1784
        %v2929 = vunpack.c.l.b16 %v1785
        %v2930 = vunpack.c.l.b16 %v1786
        %v2931 = vunpack.c.l.b16 %v1787
        %v2932 = vunpack.c.l.b16 %v1788
        %v2933 = vunpack.c.l.b16 %v1789
        %v2934 = vunpack.c.l.b16 %v1790
        %v2935 = vunpack.c.l.b16 %v1791
        %v2936 = vunpack.c.l.b16 %v1792
        %v2937 = vunpack.c.l.b16 %v1793
        %v2938 = vunpack.c.l.b16 %v1794
        %v2939 = vunpack.c.l.b16 %v1795
        %v2940 = vunpack.c.l.b16 %v1796
        %v2941 = vunpack.c.l.b16 %v1797
        %v2942 = vunpack.c.l.b16 %v1798
        %v2943 = vunpack.c.l.b16 %v1799
        %v2944 = vunpack.c.l.b16 %v1800
        %v2945 = vunpack.c.l.b16 %v1801
        %v2946 = vunpack.c.l.b16 %v1802
        %v2947 = vunpack.c.l.b16 %v1803
        %v2948 = vunpack.c.l.b16 %v1804
        %v2949 = vunpack.c.l.b16 %v1805
        %v2950 = vunpack.c.l.b16 %v1806
        %v2951 = vunpack.c.l.b16 %v1807
        %v2952 = vunpack.c.l.b16 %v1808
        %v2953 = vunpack.c.l.b16 %v1809
        %v2954 = vunpack.c.l.b16 %v1810
        %v2955 = vunpack.c.l.b16 %v1811
        %v2956 = vunpack.c.l.b16 %v1812
        %v2957 = vunpack.c.l.b16 %v1813
        %v2958 = vunpack.c.l.b16 %v1814
        %v2959 = vunpack.c.l.b16 %v1815
        %v2960 = vunpack.c.l.b16 %v1816
        %v2961 = vunpack.c.l.b16 %v1817
        %v2962 = vunpack.c.l.b16 %v1818
        %v2963 = vunpack.c.l.b16 %v1819
        %v2964 = vunpack.c.l.b16 %v1820
        %v2965 = vunpack.c.l.b16 %v1821
        %v2966 = vunpack.c.l.b16 %v1822
        %v2967 = vunpack.c.l.b16 %v1823
        %v2968 = vunpack.c.l.b16 %v1824
        %v2969 = vunpack.c.l.b16 %v1825
        %v2970 = vunpack.c.l.b16 %v1826
        %v2971 = vunpack.c.l.b16 %v1827
        %v2972 = vunpack.c.l.b16 %v1828
        %v2973 = vunpack.c.l.b16 %v1829
        %v2974 = vunpack.c.l.b16 %v1830
        %v2975 = vunpack.c.l.b16 %v1831
        %v2976 = vunpack.c.l.b16 %v1832
        %v2977 = vunpack.c.l.b16 %v1833
        %v2978 = vunpack.c.l.b16 %v1834
        %v2979 = vunpack.c.l.b16 %v1835
        %v2980 = vunpack.c.l.b16 %v1836
        %v2981 = vunpack.c.l.b16 %v1837
        %v2982 = vunpack.c.l.b16 %v1838
        %v2983 = vunpack.c.l.b16 %v1839
        %v2984 = vunpack.c.l.b16 %v1840
        %v2985 = vunpack.c.l.b16 %v1841
        %v2986 = vunpack.c.l.b16 %v1842
        %v2987 = vunpack.c.l.b16 %v1843
        %v2988 = vunpack.c.l.b16 %v1844
        %v2989 = vunpack.c.l.b16 %v1845
        %v2990 = vunpack.c.l.b16 %v1846
        %v2991 = vunpack.c.l.b16 %v1847
        %v2992 = vunpack.c.l.b16 %v1848
        %v2993 = vunpack.c.l.b16 %v1849
        %v2994 = vunpack.c.l.b16 %v1850
        %v2995 = vunpack.c.l.b16 %v1851
        %v2996 = vunpack.c.l.b16 %v1852
        %v2997 = vunpack.c.l.b16 %v1853
        %v2998 = vunpack.c.l.b16 %v1854
        %v2999 = vunpack.c.l.b16 %v1855
        %v3000 = vunpack.c.l.b16 %v1856
        %v3001 = vunpack.c.l.b16 %v1857
        %v3002 = vunpack.c.l.b16 %v1858
        %v3003 = vunpack.c.l.b16 %v1859
        %v3004 = vunpack.c.l.b16 %v1860
        %v3005 = vunpack.c.l.b16 %v1861
        %v3006 = vunpack.c.l.b16 %v1862
        %v3007 = vunpack.c.l.b16 %v1863
        %v3008 = vunpack.c.l.b16 %v1864
        %v3009 = vunpack.c.l.b16 %v1865
        %v3010 = vunpack.c.l.b16 %v1866
        %v3011 = vunpack.c.l.b16 %v1867
        %v3012 = vunpack.c.l.b16 %v1868
        %v3013 = vunpack.c.l.b16 %v1869
        %v3014 = vunpack.c.l.b16 %v1870
        %v3015 = vunpack.c.l.b16 %v1871
        %v3016 = vunpack.c.l.b16 %v1872
        %v3017 = vunpack.c.l.b16 %v1873
        %v3018 = vunpack.c.l.b16 %v1874
        %v3019 = vunpack.c.l.b16 %v1875
        %v3020 = vunpack.c.l.b16 %v1876
        %v3021 = vunpack.c.l.b16 %v1877
        %v3022 = vunpack.c.l.b16 %v1878
        %v3023 = vunpack.c.l.b16 %v1879
        %v3024 = vunpack.c.l.b16 %v1880
        %v3025 = vunpack.c.l.b16 %v1881
        %v3026 = vunpack.c.l.b16 %v1882
        %v3027 = vunpack.c.l.b16 %v1883
        %v3028 = vunpack.c.l.b16 %v1884
        %v3029 = vunpack.c.l.b16 %v1885
        %v3030 = vunpack.c.l.b16 %v1886
        %v3031 = vunpack.c.l.b16 %v1887
        %v3032 = vunpack.c.l.b16 %v1888
        %v3033 = vunpack.c.l.b16 %v1889
        %v3034 = vunpack.c.l.b16 %v1890
        %v3035 = vunpack.c.l.b16 %v1891
        %v3036 = vunpack.c.l.b16 %v1892
        %v3037 = vunpack.c.l.b16 %v1893
        %v3038 = vunpack.c.l.b16 %v1894
        %v3039 = vunpack.c.l.b16 %v1895
        %v3040 = vunpack.c.l.b16 %v1896
        %v3041 = vunpack.c.l.b16 %v1897
        %v3042 = vunpack.c.l.b16 %v1898
        %v3043 = vunpack.c.l.b16 %v1899
        %v3044 = vunpack.c.l.b16 %v1900
        %v3045 = vunpack.c.l.b16 %v1901
        %v3046 = vunpack.c.l.b16 %v1902
        %v3047 = vunpack.c.l.b16 %v1903
        %v3048 = vunpack.c.l.b16 %v1904
        %v3049 = vunpack.c.l.b16 %v1905
        %v3050 = vunpack.c.l.b16 %v1906
        %v3051 = vunpack.c.l.b16 %v1907
        %v3052 = vunpack.c.l.b16 %v1908
        %v3053 = vunpack.c.l.b16 %v1909
        %v3054 = vunpack.c.l.b16 %v1910
        %v3055 = vunpack.c.l.b16 %v1911
        %v3056 = vunpack.c.l.b16 %v1912
        %v3057 = vunpack.c.l.b16 %v1913
        %v3058 = vunpack.c.l.b16 %v1914
        %v3059 = vunpack.c.l.b16 %v1915
        %v3060 = vunpack.c.l.b16 %v1916
        %v3061 = vunpack.c.l.b16 %v1917
        %v3062 = vunpack.c.l.b16 %v1918
        %v3063 = vunpack.c.l.b16 %v1919
        %v3064 = vunpack.c.l.b16 %v1920
        %v3065 = vunpack.c.l.b16 %v1921
        %v3066 = vunpack.c.l.b16 %v1922
        %v3067 = vunpack.c.l.b16 %v1923
        %v3068 = vunpack.c.l.b16 %v1924
        %v3069 = vunpack.c.l.b16 %v1925
        %v3070 = vunpack.c.l.b16 %v1926
        %v3071 = vunpack.c.l.b16 %v1927
        %v3072 = vunpack.c.l.b16 %v1928
        %v3073 = vunpack.c.l.b16 %v1929
        %v3074 = vunpack.c.l.b16 %v1930
        %v3075 = vunpack.c.l.b16 %v1931
        %v3076 = vunpack.c.l.b16 %v1932
        %v3077 = vunpack.c.l.b16 %v1933
        %v3078 = vunpack.c.l.b16 %v1934
        %v3079 = vunpack.c.l.b16 %v1935
        %v3080 = vunpack.c.l.b16 %v1936
        %v3081 = vunpack.c.l.b16 %v1937
        %v3082 = vunpack.c.l.b16 %v1938
        %v3083 = vunpack.c.l.b16 %v1939
        %v3084 = vunpack.c.l.b16 %v1940
        %v3085 = vunpack.c.l.b16 %v1941
        %v3086 = vunpack.c.l.b16 %v1942
        %v3087 = vunpack.c.l.b16 %v1943
        %v3088 = vunpack.c.l.b16 %v1944
        %v3089 = vunpack.c.l.b16 %v1945
        %v3090 = vunpack.c.l.b16 %v1946
        %v3091 = vunpack.c.l.b16 %v1947
        %v3092 = vunpack.c.l.b16 %v1948
        %v3093 = vunpack.c.l.b16 %v1949
        %v3094 = vunpack.c.l.b16 %v1950
        %v3095 = vunpack.c.l.b16 %v1951
        %v3096 = vunpack.c.l.b16 %v1952
        %v3097 = vunpack.c.l.b16 %v1953
        %v3098 = vunpack.c.l.b16 %v1954
        %v3099 = vunpack.c.l.b16 %v1955
        %v3100 = vunpack.c.l.b16 %v1956
        %v3101 = vunpack.c.l.b16 %v1957
        %v3102 = vunpack.c.l.b16 %v1958
        %v3103 = vunpack.c.l.b16 %v1959
        %v3104 = vunpack.c.l.b16 %v1960
        %v3105 = vunpack.c.l.b16 %v1961
        %v3106 = vunpack.c.l.b16 %v1962
        %v3107 = vunpack.c.l.b16 %v1963
        %v3108 = vunpack.c.l.b16 %v1964
        %v3109 = vunpack.c.l.b16 %v1965
        %v3110 = vunpack.c.l.b16 %v1966
        %v3111 = vunpack.c.l.b16 %v1967
        %v3112 = vunpack.c.l.b16 %v1968
        %v3113 = vunpack.c.l.b16 %v1969
        %v3114 = vunpack.c.l.b16 %v1970
        %v3115 = vpack.c.b16 %v2780, %v2779
        %v3116 = vpack.c.b16 %v2782, %v2781
        %v3117 = vpack.c.b16 %v2784, %v2783
        %v3118 = vpack.c.b16 %v2786, %v2785
        %v3119 = vpack.c.b16 %v2788, %v2787
        %v3120 = vpack.c.b16 %v2790, %v2789
        %v3121 = vpack.c.b16 %v2792, %v2791
        %v3122 = vpack.c.b16 %v2794, %v2793
        %v3123 = vpack.c.b16 %v2796, %v2795
        %v3124 = vpack.c.b16 %v2798, %v2797
        %v3125 = vpack.c.b16 %v2800, %v2799
        %v3126 = vpack.c.b16 %v2802, %v2801
        %v3127 = vpack.c.b16 %v2804, %v2803
        %v3128 = vpack.c.b16 %v2806, %v2805
        %v3129 = vpack.c.b16 %v2808, %v2807
        %v3130 = vpack.c.b16 %v2810, %v2809
        %v3131 = vpack.c.b16 %v2812, %v2811
        %v3132 = vpack.c.b16 %v2814, %v2813
        %v3133 = vpack.c.b16 %v2816, %v2815
        %v3134 = vpack.c.b16 %v2818, %v2817
        %v3135 = vpack.c.b16 %v2820, %v2819
        %v3136 = vpack.c.b16 %v2822, %v2821
        %v3137 = vpack.c.b16 %v2824, %v2823
        %v3138 = vpack.c.b16 %v2826, %v2825
        %v3139 = vpack.c.b16 %v2828, %v2827
        %v3140 = vpack.c.b16 %v2830, %v2829
        %v3141 = vpack.c.b16 %v2832, %v2831
        %v3142 = vpack.c.b16 %v2834, %v2833
        %v3143 = vpack.c.b16 %v2836, %v2835
        %v3144 = vpack.c.b16 %v2838, %v2837
        %v3145 = vpack.c.b16 %v2840, %v2839
        %v3146 = vpack.c.b16 %v2842, %v2841
        %v3147 = vpack.c.b16 %v2844, %v2843
        %v3148 = vpack.c.b16 %v2846, %v2845
        %v3149 = vpack.c.b16 %v2848, %v2847
        %v3150 = vpack.c.b16 %v2850, %v2849
        %v3151 = vpack.c.b16 %v2852, %v2851
        %v3152 = vpack.c.b16 %v2854, %v2853
        %v3153 = vpack.c.b16 %v2856, %v2855
        %v3154 = vpack.c.b16 %v2858, %v2857
        %v3155 = vpack.c.b16 %v2860, %v2859
        %v3156 = vpack.c.b16 %v2862, %v2861
        %v3157 = vpack.c.b16 %v2864, %v2863
        %v3158 = vpack.c.b16 %v2866, %v2865
        %v3159 = vpack.c.b16 %v2868, %v2867
        %v3160 = vpack.c.b16 %v2870, %v2869
        %v3161 = vpack.c.b16 %v2872, %v2871
        %v3162 = vpack.c.b16 %v2874, %v2873
        %v3163 = vpack.c.b16 %v2876, %v2875
        %v3164 = vpack.c.b16 %v2878, %v2877
        %v3165 = vpack.c.b16 %v2880, %v2879
        %v3166 = vpack.c.b16 %v2882, %v2881
        %v3167 = vpack.c.b16 %v2884, %v2883
        %v3168 = vpack.c.b16 %v2886, %v2885
        %v3169 = vpack.c.b16 %v2888, %v2887
        %v3170 = vpack.c.b16 %v2890, %v2889
        %v3171 = vpack.c.b16 %v2892, %v2891
        %v3172 = vpack.c.b16 %v2894, %v2893
        %v3173 = vpack.c.b16 %v2896, %v2895
        %v3174 = vpack.c.b16 %v2898, %v2897
        %v3175 = vpack.c.b16 %v2900, %v2899
        %v3176 = vpack.c.b16 %v2902, %v2901
        %v3177 = vpack.c.b16 %v2904, %v2903
        %v3178 = vpack.c.b16 %v2906, %v2905
        %v3179 = vpack.c.b16 %v2908, %v2907
        %v3180 = vpack.c.b16 %v2910, %v2909
        %v3181 = vpack.c.b16 %v2912, %v2911
        %v3182 = vpack.c.b16 %v2914, %v2913
        %v3183 = vpack.c.b16 %v2916, %v2915
        %v3184 = vpack.c.b16 %v2918, %v2917
        %v3185 = vpack.c.b16 %v2920, %v2919
        %v3186 = vpack.c.b16 %v2922, %v2921
        %v3187 = vpack.c.b16 %v2924, %v2923
        %v3188 = vpack.c.b16 %v2926, %v2925
        %v3189 = vpack.c.b16 %v2928, %v2927
        %v3190 = vpack.c.b16 %v2930, %v2929
        %v3191 = vpack.c.b16 %v2932, %v2931
        %v3192 = vpack.c.b16 %v2934, %v2933
        %v3193 = vpack.c.b16 %v2936, %v2935
        %v3194 = vpack.c.b16 %v2938, %v2937
        %v3195 = vpack.c.b16 %v2940, %v2939
        %v3196 = vpack.c.b16 %v2942, %v2941
        %v3197 = vpack.c.b16 %v2944, %v2943
        %v3198 = vpack.c.b16 %v2946, %v2945
        %v3199 = vpack.c.b16 %v2948, %v2947
        %v3200 = vpack.c.b16 %v2950, %v2949
        %v3201 = vpack.c.b16 %v2952, %v2951
        %v3202 = vpack.c.b16 %v2954, %v2953
        %v3203 = vpack.c.b16 %v2956, %v2955
        %v3204 = vpack.c.b16 %v2958, %v2957
        %v3205 = vpack.c.b16 %v2960, %v2959
        %v3206 = vpack.c.b16 %v2962, %v2961
        %v3207 = vpack.c.b16 %v2964, %v2963
        %v3208 = vpack.c.b16 %v2966, %v2965
        %v3209 = vpack.c.b16 %v2968, %v2967
        %v3210 = vpack.c.b16 %v2970, %v2969
        %v3211 = vpack.c.b16 %v2972, %v2971
        %v3212 = vpack.c.b16 %v2974, %v2973
        %v3213 = vpack.c.b16 %v2976, %v2975
        %v3214 = vpack.c.b16 %v2978, %v2977
        %v3215 = vpack.c.b16 %v2980, %v2979
        %v3216 = vpack.c.b16 %v2982, %v2981
        %v3217 = vpack.c.b16 %v2984, %v2983
        %v3218 = vpack.c.b16 %v2986, %v2985
        %v3219 = vpack.c.b16 %v2988, %v2987
        %v3220 = vpack.c.b16 %v2990, %v2989
        %v3221 = vpack.c.b16 %v2992, %v2991
        %v3222 = vpack.c.b16 %v2994, %v2993
        %v3223 = vpack.c.b16 %v2996, %v2995
        %v3224 = vpack.c.b16 %v2998, %v2997
        %v3225 = vpack.c.b16 %v3000, %v2999
        %v3226 = vpack.c.b16 %v3002, %v3001
        %v3227 = vpack.c.b16 %v3004, %v3003
        %v3228 = vpack.c.b16 %v3006, %v3005
        %v3229 = vpack.c.b16 %v3008, %v3007
        %v3230 = vpack.c.b16 %v3010, %v3009
        %v3231 = vpack.c.b16 %v3012, %v3011
        %v3232 = vpack.c.b16 %v3014, %v3013
        %v3233 = vpack.c.b16 %v3016, %v3015
        %v3234 = vpack.c.b16 %v3018, %v3017
        %v3235 = vpack.c.b16 %v3020, %v3019
        %v3236 = vpack.c.b16 %v3022, %v3021
        %v3237 = vpack.c.b16 %v3024, %v3023
        %v3238 = vpack.c.b16 %v3026, %v3025
        %v3239 = vpack.c.b16 %v3028, %v3027
        %v3240 = vpack.c.b16 %v3030, %v3029
        %v3241 = vpack.c.b16 %v3032, %v3031
        %v3242 = vpack.c.b16 %v3034, %v3033
        %v3243 = vpack.c.b16 %v3036, %v3035
        %v3244 = vpack.c.b16 %v3038, %v3037
        %v3245 = vpack.c.b16 %v3040, %v3039
        %v3246 = vpack.c.b16 %v3042, %v3041
        %v3247 = vpack.c.b16 %v3044, %v3043
        %v3248 = vpack.c.b16 %v3046, %v3045
        %v3249 = vpack.c.b16 %v3048, %v3047
        %v3250 = vpack.c.b16 %v3050, %v3049
        %v3251 = vpack.c.b16 %v3052, %v3051
        %v3252 = vpack.c.b16 %v3054, %v3053
        %v3253 = vpack.c.b16 %v3056, %v3055
        %v3254 = vpack.c.b16 %v3058, %v3057
        %v3255 = vpack.c.b16 %v3060, %v3059
        %v3256 = vpack.c.b16 %v3062, %v3061
        %v3257 = vpack.c.b16 %v3064, %v3063
        %v3258 = vpack.c.b16 %v3066, %v3065
        %v3259 = vpack.c.b16 %v3068, %v3067
        %v3260 = vpack.c.b16 %v3070, %v3069
        %v3261 = vpack.c.b16 %v3072, %v3071
        %v3262 = vpack.c.b16 %v3074, %v3073
        %v3263 = vpack.c.b16 %v3076, %v3075
        %v3264 = vpack.c.b16 %v3078, %v3077
        %v3265 = vpack.c.b16 %v3080, %v3079
        %v3266 = vpack.c.b16 %v3082, %v3081
        %v3267 = vpack.c.b16 %v3084, %v3083
        %v3268 = vpack.c.b16 %v3086, %v3085
        %v3269 = vpack.c.b16 %v3088, %v3087
        %v3270 = vpack.c.b16 %v3090, %v3089
        %v3271 = vpack.c.b16 %v3092, %v3091
        %v3272 = vpack.c.b16 %v3094, %v3093
        %v3273 = vpack.c.b16 %v3096, %v3095
        %v3274 = vpack.c.b16 %v3098, %v3097
        %v3275 = vpack.c.b16 %v3100, %v3099
        %v3276 = vpack.c.b16 %v3102, %v3101
        %v3277 = vpack.c.b16 %v3104, %v3103
        %v3278 = vpack.c.b16 %v3106, %v3105
        %v3279 = vpack.c.b16 %v3108, %v3107
        %v3280 = vpack.c.b16 %v3110, %v3109
        %v3281 = vpack.c.b16 %v3112, %v3111
        %v3282 = vpack.c.b16 %v3114, %v3113
        %3451 = vmatprep.subr.bf16.mxu0 0
        %3452 = vmatpush1.bf16.msra.mxu0 %v3115
        %3453 = vmatprep.subr.bf16.mxu0 0
        %3454 = vmatpush1.bf16.msra.mxu0 %v3116
        %3455 = vmatprep.subr.bf16.mxu0 0
        %3456 = vmatpush1.bf16.msra.mxu0 %v3117
        %3457 = vmatprep.subr.bf16.mxu0 0
        %3458 = vmatpush1.bf16.msra.mxu0 %v3118
        %3459 = vmatprep.subr.bf16.mxu0 0
        %3460 = vmatpush1.bf16.msra.mxu0 %v3119
        %3461 = vmatprep.subr.bf16.mxu0 0
        %3462 = vmatpush1.bf16.msra.mxu0 %v3120
        %3463 = vmatprep.subr.bf16.mxu0 0
        %3464 = vmatpush1.bf16.msra.mxu0 %v3121
        %3465 = vmatprep.subr.bf16.mxu0 0
        %3466 = vmatpush1.bf16.msra.mxu0 %v3122
        %3467 = vmatprep.subr.bf16.mxu0 0
        %3468 = vmatpush1.bf16.msra.mxu0 %v3123
        %3469 = vmatprep.subr.bf16.mxu0 0
        %3470 = vmatpush1.bf16.msra.mxu0 %v3124
        %3471 = vmatprep.subr.bf16.mxu0 0
        %3472 = vmatpush1.bf16.msra.mxu0 %v3125
        %3473 = vmatprep.subr.bf16.mxu0 0
        %3474 = vmatpush1.bf16.msra.mxu0 %v3126
        %3475 = vmatprep.subr.bf16.mxu0 0
        %3476 = vmatpush1.bf16.msra.mxu0 %v3127
        %3477 = vmatprep.subr.bf16.mxu0 0
        %3478 = vmatpush1.bf16.msra.mxu0 %v3128
        %3479 = vmatprep.subr.bf16.mxu0 0
        %3480 = vmatpush1.bf16.msra.mxu0 %v3129
        %3481 = vmatprep.subr.bf16.mxu0 0
        %3482 = vmatpush1.bf16.msra.mxu0 %v3130
        %3483 = vmatprep.mubr.bf16.mxu0 %v2276
        %3484 = vmatmul.mubr.bf16.gmra.mrb[0].mxu0 %v2275
        %v3485 = vpop.f32.mrb[0].mxu0
        %v3486 = vadd.f32 %v1982, %v3485
        %v3487 = vpop.f32.mrb[0].mxu0
        %v3488 = vpop.f32.mrb[0].mxu0
        %v3489 = vadd.f32 %v1987, %v3488
        %v3490 = vpop.f32.mrb[0].mxu0
        %3491 = vmatprep.mubr.bf16.mxu0 %v2297
        %3492 = vmatmul.mubr.bf16.gmra.mrb[0].mxu0 %v2296
        %v3493 = vpop.f32.mrb[0].mxu0
        %v3494 = vadd.f32 %v1992, %v3493
        %v3495 = vpop.f32.mrb[0].mxu0
        %v3496 = vpop.f32.mrb[0].mxu0
        %v3497 = vadd.f32 %v1997, %v3496
        %v3498 = vpop.f32.mrb[0].mxu0
        %3499 = vmatprep.mubr.bf16.mxu0 %v2318
        %3500 = vmatmul.mubr.bf16.gmra.mrb[0].mxu0 %v2317
        %v3501 = vpop.f32.mrb[0].mxu0
        %v3502 = vadd.f32 %v2002, %v3501
        %v3503 = vpop.f32.mrb[0].mxu0
        %v3504 = vpop.f32.mrb[0].mxu0
        %v3505 = vadd.f32 %v2007, %v3504
        %v3506 = vpop.f32.mrb[0].mxu0
        %3507 = vmatprep.mubr.bf16.mxu0 %v2339
        %3508 = vmatmul.mubr.bf16.gmra.mrb[0].mxu0 %v2338
        %v3509 = vpop.f32.mrb[0].mxu0
        %v3510 = vadd.f32 %v2012, %v3509
        %v3511 = vpop.f32.mrb[0].mxu0
        %v3512 = vpop.f32.mrb[0].mxu0
        %v3513 = vadd.f32 %v2017, %v3512
        %v3514 = vpop.f32.mrb[0].mxu0
        %3515 = vdwg.mxu0
        %3516 = vmatprep.subr.bf16.mxu0 0
        %3517 = vmatpush1.bf16.msra.mxu0 %v3131
        %3518 = vmatprep.subr.bf16.mxu0 0
        %3519 = vmatpush1.bf16.msra.mxu0 %v3132
        %3520 = vmatprep.subr.bf16.mxu0 0
        %3521 = vmatpush1.bf16.msra.mxu0 %v3133
        %3522 = vmatprep.subr.bf16.mxu0 0
        %3523 = vmatpush1.bf16.msra.mxu0 %v3134
        %3524 = vmatprep.subr.bf16.mxu0 0
        %3525 = vmatpush1.bf16.msra.mxu0 %v3135
        %3526 = vmatprep.subr.bf16.mxu0 0
        %3527 = vmatpush1.bf16.msra.mxu0 %v3136
        %3528 = vmatprep.subr.bf16.mxu0 0
        %3529 = vmatpush1.bf16.msra.mxu0 %v3137
        %3530 = vmatprep.subr.bf16.mxu0 0
        %3531 = vmatpush1.bf16.msra.mxu0 %v3138
        %3532 = vmatprep.subr.bf16.mxu0 0
        %3533 = vmatpush1.bf16.msra.mxu0 %v3139
        %3534 = vmatprep.subr.bf16.mxu0 0
        %3535 = vmatpush1.bf16.msra.mxu0 %v3140
        %3536 = vmatprep.subr.bf16.mxu0 0
        %3537 = vmatpush1.bf16.msra.mxu0 %v3141
        %3538 = vmatprep.subr.bf16.mxu0 0
        %3539 = vmatpush1.bf16.msra.mxu0 %v3142
        %3540 = vmatprep.subr.bf16.mxu0 0
        %3541 = vmatpush1.bf16.msra.mxu0 %v3143
        %3542 = vmatprep.subr.bf16.mxu0 0
        %3543 = vmatpush1.bf16.msra.mxu0 %v3144
        %3544 = vmatprep.subr.bf16.mxu0 0
        %3545 = vmatpush1.bf16.msra.mxu0 %v3145
        %3546 = vmatprep.subr.bf16.mxu0 0
        %3547 = vmatpush1.bf16.msra.mxu0 %v3146
        %3548 = vmatprep.mubr.bf16.mxu0 %v2278
        %3549 = vmatmul.mubr.bf16.gmra.mrb[0].mxu0 %v2277
        %v3550 = vpop.f32.mrb[0].mxu0
        %v3551 = vadd.f32 %v3486, %v3550
        %v3552 = vpop.f32.mrb[0].mxu0
        %v3553 = vpop.f32.mrb[0].mxu0
        %v3554 = vadd.f32 %v3489, %v3553
        %v3555 = vpop.f32.mrb[0].mxu0
        %3556 = vmatprep.mubr.bf16.mxu0 %v2299
        %3557 = vmatmul.mubr.bf16.gmra.mrb[0].mxu0 %v2298
        %v3558 = vpop.f32.mrb[0].mxu0
        %v3559 = vadd.f32 %v3494, %v3558
        %v3560 = vpop.f32.mrb[0].mxu0
        %v3561 = vpop.f32.mrb[0].mxu0
        %v3562 = vadd.f32 %v3497, %v3561
        %v3563 = vpop.f32.mrb[0].mxu0
        %3564 = vmatprep.mubr.bf16.mxu0 %v2320
        %3565 = vmatmul.mubr.bf16.gmra.mrb[0].mxu0 %v2319
        %v3566 = vpop.f32.mrb[0].mxu0
        %v3567 = vadd.f32 %v3502, %v3566
        %v3568 = vpop.f32.mrb[0].mxu0
        %v3569 = vpop.f32.mrb[0].mxu0
        %v3570 = vadd.f32 %v3505, %v3569
        %v3571 = vpop.f32.mrb[0].mxu0
        %3572 = vmatprep.mubr.bf16.mxu0 %v2341
        %3573 = vmatmul.mubr.bf16.gmra.mrb[0].mxu0 %v2340
        %v3574 = vpop.f32.mrb[0].mxu0
        %v3575 = vadd.f32 %v3510, %v3574
        %v3576 = vpop.f32.mrb[0].mxu0
        %v3577 = vpop.f32.mrb[0].mxu0
        %v3578 = vadd.f32 %v3513, %v3577
        %v3579 = vpop.f32.mrb[0].mxu0
        %3580 = vdwg.mxu0
        %3581 = vmatprep.subr.bf16.mxu0 0
        %3582 = vmatpush1.bf16.msra.mxu0 %v3147
        %3583 = vmatprep.subr.bf16.mxu0 0
        %3584 = vmatpush1.bf16.msra.mxu0 %v3148
        %3585 = vmatprep.subr.bf16.mxu0 0
        %3586 = vmatpush1.bf16.msra.mxu0 %v3149
        %3587 = vmatprep.subr.bf16.mxu0 0
        %3588 = vmatpush1.bf16.msra.mxu0 %v3150
        %3589 = vmatprep.subr.bf16.mxu0 0
        %3590 = vmatpush1.bf16.msra.mxu0 %v3151
        %3591 = vmatprep.subr.bf16.mxu0 0
        %3592 = vmatpush1.bf16.msra.mxu0 %v3152
        %3593 = vmatprep.subr.bf16.mxu0 0
        %3594 = vmatpush1.bf16.msra.mxu0 %v3153
        %3595 = vmatprep.subr.bf16.mxu0 0
        %3596 = vmatpush1.bf16.msra.mxu0 %v3154
        %3597 = vmatprep.subr.bf16.mxu0 0
        %3598 = vmatpush1.bf16.msra.mxu0 %v3155
        %3599 = vmatprep.subr.bf16.mxu0 0
        %3600 = vmatpush1.bf16.msra.mxu0 %v3156
        %3601 = vmatprep.subr.bf16.mxu0 0
        %3602 = vmatpush1.bf16.msra.mxu0 %v3157
        %3603 = vmatprep.subr.bf16.mxu0 0
        %3604 = vmatpush1.bf16.msra.mxu0 %v3158
        %3605 = vmatprep.subr.bf16.mxu0 0
        %3606 = vmatpush1.bf16.msra.mxu0 %v3159
        %3607 = vmatprep.subr.bf16.mxu0 0
        %3608 = vmatpush1.bf16.msra.mxu0 %v3160
        %3609 = vmatprep.subr.bf16.mxu0 0
        %3610 = vmatpush1.bf16.msra.mxu0 %v3161
        %3611 = vmatprep.subr.bf16.mxu0 0
        %3612 = vmatpush1.bf16.msra.mxu0 %v3162
        %3613 = vmatprep.mubr.bf16.mxu0 %v2280
        %3614 = vmatmul.mubr.bf16.gmra.mrb[0].mxu0 %v2279
        %v3615 = vpop.f32.mrb[0].mxu0
        %v3616 = vadd.f32 %v3551, %v3615
        %v3617 = vpop.f32.mrb[0].mxu0
        %v3618 = vpop.f32.mrb[0].mxu0
        %v3619 = vadd.f32 %v3554, %v3618
        %v3620 = vpop.f32.mrb[0].mxu0
        %3621 = vmatprep.mubr.bf16.mxu0 %v2301
        %3622 = vmatmul.mubr.bf16.gmra.mrb[0].mxu0 %v2300
        %v3623 = vpop.f32.mrb[0].mxu0
        %v3624 = vadd.f32 %v3559, %v3623
        %v3625 = vpop.f32.mrb[0].mxu0
        %v3626 = vpop.f32.mrb[0].mxu0
        %v3627 = vadd.f32 %v3562, %v3626
        %v3628 = vpop.f32.mrb[0].mxu0
        %3629 = vmatprep.mubr.bf16.mxu0 %v2322
        %3630 = vmatmul.mubr.bf16.gmra.mrb[0].mxu0 %v2321
        %v3631 = vpop.f32.mrb[0].mxu0
        %v3632 = vadd.f32 %v3567, %v3631
        %v3633 = vpop.f32.mrb[0].mxu0
        %v3634 = vpop.f32.mrb[0].mxu0
        %v3635 = vadd.f32 %v3570, %v3634
        %v3636 = vpop.f32.mrb[0].mxu0
        %3637 = vmatprep.mubr.bf16.mxu0 %v2343
        %3638 = vmatmul.mubr.bf16.gmra.mrb[0].mxu0 %v2342
        %v3639 = vpop.f32.mrb[0].mxu0
        %v3640 = vadd.f32 %v3575, %v3639
        %v3641 = vpop.f32.mrb[0].mxu0
        %v3642 = vpop.f32.mrb[0].mxu0
        %v3643 = vadd.f32 %v3578, %v3642
        %v3644 = vpop.f32.mrb[0].mxu0
        %3645 = vdwg.mxu0
        %3646 = vmatprep.subr.bf16.mxu0 0
        %3647 = vmatpush1.bf16.msra.mxu0 %v3163
        %3648 = vmatprep.subr.bf16.mxu0 0
        %3649 = vmatpush1.bf16.msra.mxu0 %v3164
        %3650 = vmatprep.subr.bf16.mxu0 0
        %3651 = vmatpush1.bf16.msra.mxu0 %v3165
        %3652 = vmatprep.subr.bf16.mxu0 0
        %3653 = vmatpush1.bf16.msra.mxu0 %v3166
        %3654 = vmatprep.subr.bf16.mxu0 0
        %3655 = vmatpush1.bf16.msra.mxu0 %v3167
        %3656 = vmatprep.subr.bf16.mxu0 0
        %3657 = vmatpush1.bf16.msra.mxu0 %v3168
        %3658 = vmatprep.subr.bf16.mxu0 0
        %3659 = vmatpush1.bf16.msra.mxu0 %v3169
        %3660 = vmatprep.subr.bf16.mxu0 0
        %3661 = vmatpush1.bf16.msra.mxu0 %v3170
        %3662 = vmatprep.subr.bf16.mxu0 0
        %3663 = vmatpush1.bf16.msra.mxu0 %v3171
        %3664 = vmatprep.subr.bf16.mxu0 0
        %3665 = vmatpush1.bf16.msra.mxu0 %v3172
        %3666 = vmatprep.subr.bf16.mxu0 0
        %3667 = vmatpush1.bf16.msra.mxu0 %v3173
        %3668 = vmatprep.subr.bf16.mxu0 0
        %3669 = vmatpush1.bf16.msra.mxu0 %v3174
        %3670 = vmatprep.subr.bf16.mxu0 0
        %3671 = vmatpush1.bf16.msra.mxu0 %v3175
        %3672 = vmatprep.subr.bf16.mxu0 0
        %3673 = vmatpush1.bf16.msra.mxu0 %v3176
        %3674 = vmatprep.subr.bf16.mxu0 0
        %3675 = vmatpush1.bf16.msra.mxu0 %v3177
        %3676 = vmatprep.subr.bf16.mxu0 0
        %3677 = vmatpush1.bf16.msra.mxu0 %v3178
        %3678 = vmatprep.mubr.bf16.mxu0 %v2282
        %3679 = vmatmul.mubr.bf16.gmra.mrb[0].mxu0 %v2281
        %v3680 = vpop.f32.mrb[0].mxu0
        %v3681 = vadd.f32 %v3616, %v3680
        %v3682 = vpop.f32.mrb[0].mxu0
        %v3683 = vpop.f32.mrb[0].mxu0
        %v3684 = vadd.f32 %v3619, %v3683
        %v3685 = vpop.f32.mrb[0].mxu0
        %3686 = vmatprep.mubr.bf16.mxu0 %v2303
        %3687 = vmatmul.mubr.bf16.gmra.mrb[0].mxu0 %v2302
        %v3688 = vpop.f32.mrb[0].mxu0
        %v3689 = vadd.f32 %v3624, %v3688
        %v3690 = vpop.f32.mrb[0].mxu0
        %v3691 = vpop.f32.mrb[0].mxu0
        %v3692 = vadd.f32 %v3627, %v3691
        %v3693 = vpop.f32.mrb[0].mxu0
        %3694 = vmatprep.mubr.bf16.mxu0 %v2324
        %3695 = vmatmul.mubr.bf16.gmra.mrb[0].mxu0 %v2323
        %v3696 = vpop.f32.mrb[0].mxu0
        %v3697 = vadd.f32 %v3632, %v3696
        %v3698 = vpop.f32.mrb[0].mxu0
        %v3699 = vpop.f32.mrb[0].mxu0
        %v3700 = vadd.f32 %v3635, %v3699
        %v3701 = vpop.f32.mrb[0].mxu0
        %3702 = vmatprep.mubr.bf16.mxu0 %v2345
        %3703 = vmatmul.mubr.bf16.gmra.mrb[0].mxu0 %v2344
        %v3704 = vpop.f32.mrb[0].mxu0
        %v3705 = vadd.f32 %v3640, %v3704
        %v3706 = vpop.f32.mrb[0].mxu0
        %v3707 = vpop.f32.mrb[0].mxu0
        %v3708 = vadd.f32 %v3643, %v3707
        %v3709 = vpop.f32.mrb[0].mxu0
        %3710 = vdwg.mxu0
        %3711 = vmatprep.subr.bf16.mxu0 0
        %3712 = vmatpush1.bf16.msra.mxu0 %v3179
        %3713 = vmatprep.subr.bf16.mxu0 0
        %3714 = vmatpush1.bf16.msra.mxu0 %v3180
        %3715 = vmatprep.subr.bf16.mxu0 0
        %3716 = vmatpush1.bf16.msra.mxu0 %v3181
        %3717 = vmatprep.subr.bf16.mxu0 0
        %3718 = vmatpush1.bf16.msra.mxu0 %v3182
        %3719 = vmatprep.subr.bf16.mxu0 0
        %3720 = vmatpush1.bf16.msra.mxu0 %v3183
        %3721 = vmatprep.subr.bf16.mxu0 0
        %3722 = vmatpush1.bf16.msra.mxu0 %v3184
        %3723 = vmatprep.subr.bf16.mxu0 0
        %3724 = vmatpush1.bf16.msra.mxu0 %v3185
        %3725 = vmatprep.subr.bf16.mxu0 0
        %3726 = vmatpush1.bf16.msra.mxu0 %v3186
        %3727 = vmatprep.subr.bf16.mxu0 0
        %3728 = vmatpush1.bf16.msra.mxu0 %v3187
        %3729 = vmatprep.subr.bf16.mxu0 0
        %3730 = vmatpush1.bf16.msra.mxu0 %v3188
        %3731 = vmatprep.subr.bf16.mxu0 0
        %3732 = vmatpush1.bf16.msra.mxu0 %v3189
        %3733 = vmatprep.subr.bf16.mxu0 0
        %3734 = vmatpush1.bf16.msra.mxu0 %v3190
        %3735 = vmatprep.subr.bf16.mxu0 0
        %3736 = vmatpush1.bf16.msra.mxu0 %v3191
        %3737 = vmatprep.subr.bf16.mxu0 0
        %3738 = vmatpush1.bf16.msra.mxu0 %v3192
        %3739 = vmatprep.subr.bf16.mxu0 0
        %3740 = vmatpush1.bf16.msra.mxu0 %v3193
        %3741 = vmatprep.subr.bf16.mxu0 0
        %3742 = vmatpush1.bf16.msra.mxu0 %v3194
        %3743 = vmatprep.mubr.bf16.mxu0 %v2284
        %3744 = vmatmul.mubr.bf16.gmra.mrb[0].mxu0 %v2283
        %v3745 = vpop.f32.mrb[0].mxu0
        %v3746 = vadd.f32 %v3681, %v3745
        %v3747 = vpop.f32.mrb[0].mxu0
        %v3748 = vpop.f32.mrb[0].mxu0
        %v3749 = vadd.f32 %v3684, %v3748
        %v3750 = vpop.f32.mrb[0].mxu0
        %3751 = vmatprep.mubr.bf16.mxu0 %v2305
        %3752 = vmatmul.mubr.bf16.gmra.mrb[0].mxu0 %v2304
        %v3753 = vpop.f32.mrb[0].mxu0
        %v3754 = vadd.f32 %v3689, %v3753
        %v3755 = vpop.f32.mrb[0].mxu0
        %v3756 = vpop.f32.mrb[0].mxu0
        %v3757 = vadd.f32 %v3692, %v3756
        %v3758 = vpop.f32.mrb[0].mxu0
        %3759 = vmatprep.mubr.bf16.mxu0 %v2326
        %3760 = vmatmul.mubr.bf16.gmra.mrb[0].mxu0 %v2325
        %v3761 = vpop.f32.mrb[0].mxu0
        %v3762 = vadd.f32 %v3697, %v3761
        %v3763 = vpop.f32.mrb[0].mxu0
        %v3764 = vpop.f32.mrb[0].mxu0
        %v3765 = vadd.f32 %v3700, %v3764
        %v3766 = vpop.f32.mrb[0].mxu0
        %3767 = vmatprep.mubr.bf16.mxu0 %v2347
        %3768 = vmatmul.mubr.bf16.gmra.mrb[0].mxu0 %v2346
        %v3769 = vpop.f32.mrb[0].mxu0
        %v3770 = vadd.f32 %v3705, %v3769
        %v3771 = vpop.f32.mrb[0].mxu0
        %v3772 = vpop.f32.mrb[0].mxu0
        %v3773 = vadd.f32 %v3708, %v3772
        %v3774 = vpop.f32.mrb[0].mxu0
        %3775 = vdwg.mxu0
        %3776 = vmatprep.subr.bf16.mxu0 0
        %3777 = vmatpush1.bf16.msra.mxu0 %v3195
        %3778 = vmatprep.subr.bf16.mxu0 0
        %3779 = vmatpush1.bf16.msra.mxu0 %v3196
        %3780 = vmatprep.subr.bf16.mxu0 0
        %3781 = vmatpush1.bf16.msra.mxu0 %v3197
        %3782 = vmatprep.subr.bf16.mxu0 0
        %3783 = vmatpush1.bf16.msra.mxu0 %v3198
        %3784 = vmatprep.subr.bf16.mxu0 0
        %3785 = vmatpush1.bf16.msra.mxu0 %v3199
        %3786 = vmatprep.subr.bf16.mxu0 0
        %3787 = vmatpush1.bf16.msra.mxu0 %v3200
        %3788 = vmatprep.subr.bf16.mxu0 0
        %3789 = vmatpush1.bf16.msra.mxu0 %v3201
        %3790 = vmatprep.subr.bf16.mxu0 0
        %3791 = vmatpush1.bf16.msra.mxu0 %v3202
        %3792 = vmatprep.subr.bf16.mxu0 0
        %3793 = vmatpush1.bf16.msra.mxu0 %v3203
        %3794 = vmatprep.subr.bf16.mxu0 0
        %3795 = vmatpush1.bf16.msra.mxu0 %v3204
        %3796 = vmatprep.subr.bf16.mxu0 0
        %3797 = vmatpush1.bf16.msra.mxu0 %v3205
        %3798 = vmatprep.subr.bf16.mxu0 0
        %3799 = vmatpush1.bf16.msra.mxu0 %v3206
        %3800 = vmatprep.subr.bf16.mxu0 0
        %3801 = vmatpush1.bf16.msra.mxu0 %v3207
        %3802 = vmatprep.subr.bf16.mxu0 0
        %3803 = vmatpush1.bf16.msra.mxu0 %v3208
        %3804 = vmatprep.subr.bf16.mxu0 0
        %3805 = vmatpush1.bf16.msra.mxu0 %v3209
        %3806 = vmatprep.subr.bf16.mxu0 0
        %3807 = vmatpush1.bf16.msra.mxu0 %v3210
        %3808 = vmatprep.mubr.bf16.mxu0 %v2286
        %3809 = vmatmul.mubr.bf16.gmra.mrb[0].mxu0 %v2285
        %v3810 = vpop.f32.mrb[0].mxu0
        %v3811 = vadd.f32 %v3746, %v3810
        %v3812 = vpop.f32.mrb[0].mxu0
        %v3813 = vpop.f32.mrb[0].mxu0
        %v3814 = vadd.f32 %v3749, %v3813
        %v3815 = vpop.f32.mrb[0].mxu0
        %3816 = vmatprep.mubr.bf16.mxu0 %v2307
        %3817 = vmatmul.mubr.bf16.gmra.mrb[0].mxu0 %v2306
        %v3818 = vpop.f32.mrb[0].mxu0
        %v3819 = vadd.f32 %v3754, %v3818
        %v3820 = vpop.f32.mrb[0].mxu0
        %v3821 = vpop.f32.mrb[0].mxu0
        %v3822 = vadd.f32 %v3757, %v3821
        %v3823 = vpop.f32.mrb[0].mxu0
        %3824 = vmatprep.mubr.bf16.mxu0 %v2328
        %3825 = vmatmul.mubr.bf16.gmra.mrb[0].mxu0 %v2327
        %v3826 = vpop.f32.mrb[0].mxu0
        %v3827 = vadd.f32 %v3762, %v3826
        %v3828 = vpop.f32.mrb[0].mxu0
        %v3829 = vpop.f32.mrb[0].mxu0
        %v3830 = vadd.f32 %v3765, %v3829
        %v3831 = vpop.f32.mrb[0].mxu0
        %3832 = vmatprep.mubr.bf16.mxu0 %v2349
        %3833 = vmatmul.mubr.bf16.gmra.mrb[0].mxu0 %v2348
        %v3834 = vpop.f32.mrb[0].mxu0
        %v3835 = vadd.f32 %v3770, %v3834
        %v3836 = vpop.f32.mrb[0].mxu0
        %v3837 = vpop.f32.mrb[0].mxu0
        %v3838 = vadd.f32 %v3773, %v3837
        %v3839 = vpop.f32.mrb[0].mxu0
        %3840 = vdwg.mxu0
        %3841 = vmatprep.subr.bf16.mxu0 0
        %3842 = vmatpush1.bf16.msra.mxu0 %v3211
        %3843 = vmatprep.subr.bf16.mxu0 0
        %3844 = vmatpush1.bf16.msra.mxu0 %v3212
        %3845 = vmatprep.subr.bf16.mxu0 0
        %3846 = vmatpush1.bf16.msra.mxu0 %v3213
        %3847 = vmatprep.subr.bf16.mxu0 0
        %3848 = vmatpush1.bf16.msra.mxu0 %v3214
        %3849 = vmatprep.subr.bf16.mxu0 0
        %3850 = vmatpush1.bf16.msra.mxu0 %v3215
        %3851 = vmatprep.subr.bf16.mxu0 0
        %3852 = vmatpush1.bf16.msra.mxu0 %v3216
        %3853 = vmatprep.subr.bf16.mxu0 0
        %3854 = vmatpush1.bf16.msra.mxu0 %v3217
        %3855 = vmatprep.subr.bf16.mxu0 0
        %3856 = vmatpush1.bf16.msra.mxu0 %v3218
        %3857 = vmatprep.subr.bf16.mxu0 0
        %3858 = vmatpush1.bf16.msra.mxu0 %v3219
        %3859 = vmatprep.subr.bf16.mxu0 0
        %3860 = vmatpush1.bf16.msra.mxu0 %v3220
        %3861 = vmatprep.subr.bf16.mxu0 0
        %3862 = vmatpush1.bf16.msra.mxu0 %v3221
        %3863 = vmatprep.subr.bf16.mxu0 0
        %3864 = vmatpush1.bf16.msra.mxu0 %v3222
        %3865 = vmatprep.subr.bf16.mxu0 0
        %3866 = vmatpush1.bf16.msra.mxu0 %v3223
        %3867 = vmatprep.subr.bf16.mxu0 0
        %3868 = vmatpush1.bf16.msra.mxu0 %v3224
        %3869 = vmatprep.subr.bf16.mxu0 0
        %3870 = vmatpush1.bf16.msra.mxu0 %v3225
        %3871 = vmatprep.subr.bf16.mxu0 0
        %3872 = vmatpush1.bf16.msra.mxu0 %v3226
        %3873 = vmatprep.mubr.bf16.mxu0 %v2288
        %3874 = vmatmul.mubr.bf16.gmra.mrb[0].mxu0 %v2287
        %v3875 = vpop.f32.mrb[0].mxu0
        %v3876 = vadd.f32 %v3811, %v3875
        %v3877 = vpop.f32.mrb[0].mxu0
        %v3878 = vpop.f32.mrb[0].mxu0
        %v3879 = vadd.f32 %v3814, %v3878
        %v3880 = vpop.f32.mrb[0].mxu0
        %3881 = vmatprep.mubr.bf16.mxu0 %v2309
        %3882 = vmatmul.mubr.bf16.gmra.mrb[0].mxu0 %v2308
        %v3883 = vpop.f32.mrb[0].mxu0
        %v3884 = vadd.f32 %v3819, %v3883
        %v3885 = vpop.f32.mrb[0].mxu0
        %v3886 = vpop.f32.mrb[0].mxu0
        %v3887 = vadd.f32 %v3822, %v3886
        %v3888 = vpop.f32.mrb[0].mxu0
        %3889 = vmatprep.mubr.bf16.mxu0 %v2330
        %3890 = vmatmul.mubr.bf16.gmra.mrb[0].mxu0 %v2329
        %v3891 = vpop.f32.mrb[0].mxu0
        %v3892 = vadd.f32 %v3827, %v3891
        %v3893 = vpop.f32.mrb[0].mxu0
        %v3894 = vpop.f32.mrb[0].mxu0
        %v3895 = vadd.f32 %v3830, %v3894
        %v3896 = vpop.f32.mrb[0].mxu0
        %3897 = vmatprep.mubr.bf16.mxu0 %v2351
        %3898 = vmatmul.mubr.bf16.gmra.mrb[0].mxu0 %v2350
        %v3899 = vpop.f32.mrb[0].mxu0
        %v3900 = vadd.f32 %v3835, %v3899
        %v3901 = vpop.f32.mrb[0].mxu0
        %v3902 = vpop.f32.mrb[0].mxu0
        %v3903 = vadd.f32 %v3838, %v3902
        %v3904 = vpop.f32.mrb[0].mxu0
        %3905 = vdwg.mxu0
        %3906 = vmatprep.subr.bf16.mxu0 0
        %3907 = vmatpush1.bf16.msra.mxu0 %v3227
        %3908 = vmatprep.subr.bf16.mxu0 0
        %3909 = vmatpush1.bf16.msra.mxu0 %v3228
        %3910 = vmatprep.subr.bf16.mxu0 0
        %3911 = vmatpush1.bf16.msra.mxu0 %v3229
        %3912 = vmatprep.subr.bf16.mxu0 0
        %3913 = vmatpush1.bf16.msra.mxu0 %v3230
        %3914 = vmatprep.subr.bf16.mxu0 0
        %3915 = vmatpush1.bf16.msra.mxu0 %v3231
        %3916 = vmatprep.subr.bf16.mxu0 0
        %3917 = vmatpush1.bf16.msra.mxu0 %v3232
        %3918 = vmatprep.subr.bf16.mxu0 0
        %3919 = vmatpush1.bf16.msra.mxu0 %v3233
        %3920 = vmatprep.subr.bf16.mxu0 0
        %3921 = vmatpush1.bf16.msra.mxu0 %v3234
        %3922 = vmatprep.subr.bf16.mxu0 0
        %3923 = vmatpush1.bf16.msra.mxu0 %v3235
        %3924 = vmatprep.subr.bf16.mxu0 0
        %3925 = vmatpush1.bf16.msra.mxu0 %v3236
        %3926 = vmatprep.subr.bf16.mxu0 0
        %3927 = vmatpush1.bf16.msra.mxu0 %v3237
        %3928 = vmatprep.subr.bf16.mxu0 0
        %3929 = vmatpush1.bf16.msra.mxu0 %v3238
        %3930 = vmatprep.subr.bf16.mxu0 0
        %3931 = vmatpush1.bf16.msra.mxu0 %v3239
        %3932 = vmatprep.subr.bf16.mxu0 0
        %3933 = vmatpush1.bf16.msra.mxu0 %v3240
        %3934 = vmatprep.subr.bf16.mxu0 0
        %3935 = vmatpush1.bf16.msra.mxu0 %v3241
        %3936 = vmatprep.subr.bf16.mxu0 0
        %3937 = vmatpush1.bf16.msra.mxu0 %v3242
        %3938 = vmatprep.mubr.bf16.mxu0 %v2290
        %3939 = vmatmul.mubr.bf16.gmra.mrb[0].mxu0 %v2289
        %v3940 = vpop.f32.mrb[0].mxu0
        %v3941 = vadd.f32 %v3876, %v3940
        %v3942 = vpop.f32.mrb[0].mxu0
        %v3943 = vpop.f32.mrb[0].mxu0
        %v3944 = vadd.f32 %v3879, %v3943
        %v3945 = vpop.f32.mrb[0].mxu0
        %3946 = vmatprep.mubr.bf16.mxu0 %v2311
        %3947 = vmatmul.mubr.bf16.gmra.mrb[0].mxu0 %v2310
        %v3948 = vpop.f32.mrb[0].mxu0
        %v3949 = vadd.f32 %v3884, %v3948
        %v3950 = vpop.f32.mrb[0].mxu0
        %v3951 = vpop.f32.mrb[0].mxu0
        %v3952 = vadd.f32 %v3887, %v3951
        %v3953 = vpop.f32.mrb[0].mxu0
        %3954 = vmatprep.mubr.bf16.mxu0 %v2332
        %3955 = vmatmul.mubr.bf16.gmra.mrb[0].mxu0 %v2331
        %v3956 = vpop.f32.mrb[0].mxu0
        %v3957 = vadd.f32 %v3892, %v3956
        %v3958 = vpop.f32.mrb[0].mxu0
        %v3959 = vpop.f32.mrb[0].mxu0
        %v3960 = vadd.f32 %v3895, %v3959
        %v3961 = vpop.f32.mrb[0].mxu0
        %3962 = vmatprep.mubr.bf16.mxu0 %v2353
        %3963 = vmatmul.mubr.bf16.gmra.mrb[0].mxu0 %v2352
        %v3964 = vpop.f32.mrb[0].mxu0
        %v3965 = vadd.f32 %v3900, %v3964
        %v3966 = vpop.f32.mrb[0].mxu0
        %v3967 = vpop.f32.mrb[0].mxu0
        %v3968 = vadd.f32 %v3903, %v3967
        %v3969 = vpop.f32.mrb[0].mxu0
        %3970 = vdwg.mxu0
        %3971 = vmatprep.subr.bf16.mxu0 0
        %3972 = vmatpush1.bf16.msra.mxu0 %v3243
        %3973 = vmatprep.subr.bf16.mxu0 0
        %3974 = vmatpush1.bf16.msra.mxu0 %v3244
        %3975 = vmatprep.subr.bf16.mxu0 0
        %3976 = vmatpush1.bf16.msra.mxu0 %v3245
        %3977 = vmatprep.subr.bf16.mxu0 0
        %3978 = vmatpush1.bf16.msra.mxu0 %v3246
        %3979 = vmatprep.subr.bf16.mxu0 0
        %3980 = vmatpush1.bf16.msra.mxu0 %v3247
        %3981 = vmatprep.subr.bf16.mxu0 0
        %3982 = vmatpush1.bf16.msra.mxu0 %v3248
        %3983 = vmatprep.subr.bf16.mxu0 0
        %3984 = vmatpush1.bf16.msra.mxu0 %v3249
        %3985 = vmatprep.subr.bf16.mxu0 0
        %3986 = vmatpush1.bf16.msra.mxu0 %v3250
        %3987 = vmatprep.subr.bf16.mxu0 0
        %3988 = vmatpush1.bf16.msra.mxu0 %v3251
        %3989 = vmatprep.subr.bf16.mxu0 0
        %3990 = vmatpush1.bf16.msra.mxu0 %v3252
        %3991 = vmatprep.subr.bf16.mxu0 0
        %3992 = vmatpush1.bf16.msra.mxu0 %v3253
        %3993 = vmatprep.subr.bf16.mxu0 0
        %3994 = vmatpush1.bf16.msra.mxu0 %v3254
        %3995 = vmatprep.subr.bf16.mxu0 0
        %3996 = vmatpush1.bf16.msra.mxu0 %v3255
        %3997 = vmatprep.subr.bf16.mxu0 0
        %3998 = vmatpush1.bf16.msra.mxu0 %v3256
        %3999 = vmatprep.subr.bf16.mxu0 0
        %4000 = vmatpush1.bf16.msra.mxu0 %v3257
        %4001 = vmatprep.subr.bf16.mxu0 0
        %4002 = vmatpush1.bf16.msra.mxu0 %v3258
        %4003 = vmatprep.mubr.bf16.mxu0 %v2292
        %4004 = vmatmul.mubr.bf16.gmra.mrb[0].mxu0 %v2291
        %v4005 = vpop.f32.mrb[0].mxu0
        %v4006 = vadd.f32 %v3941, %v4005
        %v4007 = vpop.f32.mrb[0].mxu0
        %v4008 = vpop.f32.mrb[0].mxu0
        %v4009 = vadd.f32 %v3944, %v4008
        %v4010 = vpop.f32.mrb[0].mxu0
        %4011 = vmatprep.mubr.bf16.mxu0 %v2313
        %4012 = vmatmul.mubr.bf16.gmra.mrb[0].mxu0 %v2312
        %v4013 = vpop.f32.mrb[0].mxu0
        %v4014 = vadd.f32 %v3949, %v4013
        %v4015 = vpop.f32.mrb[0].mxu0
        %v4016 = vpop.f32.mrb[0].mxu0
        %v4017 = vadd.f32 %v3952, %v4016
        %v4018 = vpop.f32.mrb[0].mxu0
        %4019 = vmatprep.mubr.bf16.mxu0 %v2334
        %4020 = vmatmul.mubr.bf16.gmra.mrb[0].mxu0 %v2333
        %v4021 = vpop.f32.mrb[0].mxu0
        %v4022 = vadd.f32 %v3957, %v4021
        %v4023 = vpop.f32.mrb[0].mxu0
        %v4024 = vpop.f32.mrb[0].mxu0
        %v4025 = vadd.f32 %v3960, %v4024
        %v4026 = vpop.f32.mrb[0].mxu0
        %4027 = vmatprep.mubr.bf16.mxu0 %v2355
        %4028 = vmatmul.mubr.bf16.gmra.mrb[0].mxu0 %v2354
        %v4029 = vpop.f32.mrb[0].mxu0
        %v4030 = vadd.f32 %v3965, %v4029
        %v4031 = vpop.f32.mrb[0].mxu0
        %v4032 = vpop.f32.mrb[0].mxu0
        %v4033 = vadd.f32 %v3968, %v4032
        %v4034 = vpop.f32.mrb[0].mxu0
        %4035 = vdwg.mxu0
        %4036 = vmatprep.subr.bf16.mxu0 0
        %4037 = vmatpush1.bf16.msra.mxu0 %v3259
        %4038 = vmatprep.subr.bf16.mxu0 0
        %4039 = vmatpush1.bf16.msra.mxu0 %v3260
        %4040 = vmatprep.subr.bf16.mxu0 0
        %4041 = vmatpush1.bf16.msra.mxu0 %v3261
        %4042 = vmatprep.subr.bf16.mxu0 0
        %4043 = vmatpush1.bf16.msra.mxu0 %v3262
        %4044 = vmatprep.subr.bf16.mxu0 0
        %4045 = vmatpush1.bf16.msra.mxu0 %v3263
        %4046 = vmatprep.subr.bf16.mxu0 0
        %4047 = vmatpush1.bf16.msra.mxu0 %v3264
        %4048 = vmatprep.subr.bf16.mxu0 0
        %4049 = vmatpush1.bf16.msra.mxu0 %v3265
        %4050 = vmatprep.subr.bf16.mxu0 0
        %4051 = vmatpush1.bf16.msra.mxu0 %v3266
        %4052 = vmatprep.subr.bf16.mxu0 0
        %4053 = vmatpush1.bf16.msra.mxu0 %v3267
        %4054 = vmatprep.subr.bf16.mxu0 0
        %4055 = vmatpush1.bf16.msra.mxu0 %v3268
        %4056 = vmatprep.subr.bf16.mxu0 0
        %4057 = vmatpush1.bf16.msra.mxu0 %v3269
        %4058 = vmatprep.subr.bf16.mxu0 0
        %4059 = vmatpush1.bf16.msra.mxu0 %v3270
        %4060 = vmatprep.subr.bf16.mxu0 0
        %4061 = vmatpush1.bf16.msra.mxu0 %v3271
        %4062 = vmatprep.subr.bf16.mxu0 0
        %4063 = vmatpush1.bf16.msra.mxu0 %v3272
        %4064 = vmatprep.subr.bf16.mxu0 0
        %4065 = vmatpush1.bf16.msra.mxu0 %v3273
        %4066 = vmatprep.subr.bf16.mxu0 0
        %4067 = vmatpush1.bf16.msra.mxu0 %v3274
        %4068 = vmatprep.mubr.bf16.mxu0 %v2294
        %4069 = vmatmul.mubr.bf16.gmra.mrb[0].mxu0 %v2293
        %v4070 = vpop.f32.mrb[0].mxu0
        %v4071 = vadd.f32 %v4006, %v4070
        %v4072 = vpop.f32.mrb[0].mxu0
        %v4073 = vpop.f32.mrb[0].mxu0
        %v4074 = vadd.f32 %v4009, %v4073
        %v4075 = vpop.f32.mrb[0].mxu0
        %4076 = vmatprep.mubr.bf16.mxu0 %v2315
        %4077 = vmatmul.mubr.bf16.gmra.mrb[0].mxu0 %v2314
        %v4078 = vpop.f32.mrb[0].mxu0
        %v4079 = vadd.f32 %v4014, %v4078
        %v4080 = vpop.f32.mrb[0].mxu0
        %v4081 = vpop.f32.mrb[0].mxu0
        %v4082 = vadd.f32 %v4017, %v4081
        %v4083 = vpop.f32.mrb[0].mxu0
        %4084 = vmatprep.mubr.bf16.mxu0 %v2336
        %4085 = vmatmul.mubr.bf16.gmra.mrb[0].mxu0 %v2335
        %v4086 = vpop.f32.mrb[0].mxu0
        %v4087 = vadd.f32 %v4022, %v4086
        %v4088 = vpop.f32.mrb[0].mxu0
        %v4089 = vpop.f32.mrb[0].mxu0
        %v4090 = vadd.f32 %v4025, %v4089
        %v4091 = vpop.f32.mrb[0].mxu0
        %4092 = vmatprep.mubr.bf16.mxu0 %v2357
        %4093 = vmatmul.mubr.bf16.gmra.mrb[0].mxu0 %v2356
        %v4094 = vpop.f32.mrb[0].mxu0
        %v4095 = vadd.f32 %v4030, %v4094
        %v4096 = vpop.f32.mrb[0].mxu0
        %v4097 = vpop.f32.mrb[0].mxu0
        %v4098 = vadd.f32 %v4033, %v4097
        %v4099 = vpop.f32.mrb[0].mxu0
        %4100 = vdwg.mxu0
        %4101 = vmatprep.subr.bf16.mxu0 0
        %4102 = vmatpush1.bf16.msra.mxu0 %v3275
        %4103 = vmatprep.subr.bf16.mxu0 0
        %4104 = vmatpush1.bf16.msra.mxu0 %v3276
        %4105 = vmatprep.subr.bf16.mxu0 0
        %4106 = vmatpush1.bf16.msra.mxu0 %v3277
        %4107 = vmatprep.subr.bf16.mxu0 0
        %4108 = vmatpush1.bf16.msra.mxu0 %v3278
        %4109 = vmatprep.subr.bf16.mxu0 0
        %4110 = vmatpush1.bf16.msra.mxu0 %v3279
        %4111 = vmatprep.subr.bf16.mxu0 0
        %4112 = vmatpush1.bf16.msra.mxu0 %v3280
        %4113 = vmatprep.subr.bf16.mxu0 0
        %4114 = vmatpush1.bf16.msra.mxu0 %v3281
        %4115 = vmatprep.subr.bf16.mxu0 0
        %4116 = vmatpush1.bf16.msra.mxu0 %v3282
        %4117 = vmatprep.subr.bf16.mxu0 0
        %4118 = vmatpush1.bf16.msra.mxu0 0
        %4119 = vmatprep.subr.bf16.mxu0 0
        %4120 = vmatpush1.bf16.msra.mxu0 0
        %4121 = vmatprep.subr.bf16.mxu0 0
        %4122 = vmatpush1.bf16.msra.mxu0 0
        %4123 = vmatprep.subr.bf16.mxu0 0
        %4124 = vmatpush1.bf16.msra.mxu0 0
        %4125 = vmatprep.subr.bf16.mxu0 0
        %4126 = vmatpush1.bf16.msra.mxu0 0
        %4127 = vmatprep.subr.bf16.mxu0 0
        %4128 = vmatpush1.bf16.msra.mxu0 0
        %4129 = vmatprep.subr.bf16.mxu0 0
        %4130 = vmatpush1.bf16.msra.mxu0 0
        %4131 = vmatprep.subr.bf16.mxu0 0
        %4132 = vmatpush1.bf16.msra.mxu0 0
        %4133 = vmatprep.mubr.bf16.mxu0 0
        %4134 = vmatmul.mubr.bf16.gmra.mrb[0].mxu0 %v2295
        %v4135 = vpop.f32.mrb[0].mxu0
        %v4136 = vadd.f32 %v4071, %v4135
        %v4137 = vpop.f32.mrb[0].mxu0
        %v4138 = vpop.f32.mrb[0].mxu0
        %v4139 = vadd.f32 %v4074, %v4138
        %v4140 = vpop.f32.mrb[0].mxu0
        %4141 = vmatprep.mubr.bf16.mxu0 0
        %4142 = vmatmul.mubr.bf16.gmra.mrb[0].mxu0 %v2316
        %v4143 = vpop.f32.mrb[0].mxu0
        %v4144 = vadd.f32 %v4079, %v4143
        %v4145 = vpop.f32.mrb[0].mxu0
        %v4146 = vpop.f32.mrb[0].mxu0
        %v4147 = vadd.f32 %v4082, %v4146
        %v4148 = vpop.f32.mrb[0].mxu0
        %4149 = vmatprep.mubr.bf16.mxu0 0
        %4150 = vmatmul.mubr.bf16.gmra.mrb[0].mxu0 %v2337
        %v4151 = vpop.f32.mrb[0].mxu0
        %v4152 = vadd.f32 %v4087, %v4151
        %v4153 = vpop.f32.mrb[0].mxu0
        %v4154 = vpop.f32.mrb[0].mxu0
        %v4155 = vadd.f32 %v4090, %v4154
        %v4156 = vpop.f32.mrb[0].mxu0
        %4157 = vmatprep.mubr.bf16.mxu0 0
        %4158 = vmatmul.mubr.bf16.gmra.mrb[0].mxu0 %v2358
        %v4159 = vpop.f32.mrb[0].mxu0
        %v4160 = vadd.f32 %v4095, %v4159
        %v4161 = vpop.f32.mrb[0].mxu0
        %v4162 = vpop.f32.mrb[0].mxu0
        %v4163 = vadd.f32 %v4098, %v4162
        %v4164 = vpop.f32.mrb[0].mxu0
        %4165 = vdwg.mxu0
        %v4166 = vpack.c.bf16 %v4139, %v4136
        %v4167 = vpack.c.bf16 %v4147, %v4144
        %v4168 = vpack.c.bf16 %v4155, %v4152
        %v4169 = vpack.c.bf16 %v4163, %v4160
        %v4174 = vunpack.c.l.b16 %v4166
        %v4175 = vunpack.c.h.b16 %v4166
        %v4176 = vunpack.c.l.b16 %v4167
        %v4177 = vunpack.c.h.b16 %v4167
        %v4178 = vunpack.c.l.b16 %v4168
        %v4179 = vunpack.c.h.b16 %v4168
        %v4180 = vunpack.c.l.b16 %v4169
        %v4181 = vunpack.c.h.b16 %v4169
        %v4182 = vpack.c.b16 %v4174, %v4174
        %v4183 = vpack.c.b16 %v4175, %v4175
        %v4184 = vpack.c.b16 %v4176, %v4176
        %v4185 = vpack.c.b16 %v4177, %v4177
        %v4186 = vpack.c.b16 %v4178, %v4178
        %v4187 = vpack.c.b16 %v4179, %v4179
        %v4188 = vpack.c.b16 %v4180, %v4180
        %v4189 = vpack.c.b16 %v4181, %v4181
        %4198 = vst [vmem:[%s1545] sm:$0xf] %v4182
        %4199 = vst [vmem:[%s1545 + $0x4] sm:$0xf] %v4183
        %4200 = vst [vmem:[%s1545 + $0x8] sm:$0xf] %v4184
        %4201 = vst [vmem:[%s1545 + $0xc] sm:$0xf] %v4185
        %4202 = vst [vmem:[%s1545 + $0x10] sm:$0xf] %v4186
        %4203 = vst [vmem:[%s1545 + $0x14] sm:$0xf] %v4187
        %4204 = vst [vmem:[%s1545 + $0x18] sm:$0xf] %v4188
        %4205 = vst [vmem:[%s1545 + $0x1c] sm:$0xf] %v4189
        %s4206 = sand.u32 %s90, 1
        %s4207 = sand.u32 %s90, 1
        %s4208 = smul.addr %s4207, 32
        %s4209 = scalar_lea.vmem [#allocation3], %s4208
        // Predicated region
        $region74: #{capsnet_forward.3} parent=68 // pred_check
          %p4210 = pneg %p100
        $region75: #{capsnet_forward.3} parent=68 // pred_check_branch
          %4212 = sbr.rel (%p4210) target = $region77
        $region76: #{capsnet_forward.3} parent=68 // pred_region
          %s4213 = smul.addr %s14, 4
          %s4214 = scalar_lea.vmem %s3, %s4213
          // Predicated region
          $region78: #{capsnet_forward.3} parent=76 // pred_check
            _
          $region79: #{capsnet_forward.3} parent=76 // pred_check_branch
            %4216 = sbr.rel (0) target = $region81
          $region80: #{capsnet_forward.3} parent=76 // pred_region
            // Predicated region
            $region82: #{capsnet_forward.3} parent=80 // pred_check
              _
            $region83: #{capsnet_forward.3} parent=80 // pred_check_branch
              %4218 = sbr.rel target = $region85
            $region84: #{capsnet_forward.3} parent=80 // pred_region
              // Predicated region
              $region97: #{capsnet_forward.3} parent=84 // pred_check
                _
              $region98: #{capsnet_forward.3} parent=84 // pred_check_branch
                %4247 = sbr.rel (0) target = $region100
              $region99: #{capsnet_forward.3} parent=84 // pred_region
                loop: start=0, step=1, limit=1
                $region101: #{capsnet_forward.3} parent=99 // loop_pre_header
                  _
                $region102: #{capsnet_forward.3} parent=99 // loop_header
                  %s4249 = sphi 0, %s4253
                  %p4250 = scmp.ge.s32.totalorder %s4249, 1
                  %s4254 = sphi %s4209, %s4209
                  %s4255 = sphi %s4214, %s4214
                $region103: #{capsnet_forward.3} parent=99 // loop_header_branch
                  %4252 = sbr.rel (%p4250) target = $region107
                $region104: #{capsnet_forward.3} parent=99 // loop_body
                  _
                $region105: #{capsnet_forward.3} parent=99 // loop_footer
                  %s4253 = sadd.s32 1, %s4249
                $region106: #{capsnet_forward.3} parent=99 // loop_footer_branch
                  %4248 = sbr.rel target = $region102
                $region107: #{capsnet_forward.3} parent=99 // loop_exit
                  _
                loop: start=0, step=1, limit=1
                $region108: #{capsnet_forward.3} parent=99 // loop_pre_header
                  _
                $region109: #{capsnet_forward.3} parent=99 // loop_header
                  %s4258 = sphi 0, %s4262
                  %p4259 = scmp.ge.s32.totalorder %s4258, 1
                  %s4263 = sphi %s4209, %s4209
                  %s4264 = sphi %s4214, %s4214
                $region110: #{capsnet_forward.3} parent=99 // loop_header_branch
                  %4261 = sbr.rel (%p4259) target = $region114
                $region111: #{capsnet_forward.3} parent=99 // loop_body
                  %v4265 = vld [vmem:[%s4263] sm:$0xf]
                  %4266 = vst [vmem:[%s4264] sm:$0xf] %v4265
                  %v4267 = vld [vmem:[%s4263 + $0x4] sm:$0xf]
                  %4268 = vst [vmem:[%s4264 + $0x8] sm:$0xf] %v4267
                  %v4269 = vld [vmem:[%s4263 + $0x8] sm:$0xf]
                  %4270 = vst [vmem:[%s4264 + $0x10] sm:$0xf] %v4269
                  %v4271 = vld [vmem:[%s4263 + $0xc] sm:$0xf]
                  %4272 = vst [vmem:[%s4264 + $0x18] sm:$0xf] %v4271
                  %v4273 = vld [vmem:[%s4263 + $0x10] sm:$0xf]
                  %4274 = vst [vmem:[%s4264 + $0x20] sm:$0xf] %v4273
                  %v4275 = vld [vmem:[%s4263 + $0x14] sm:$0xf]
                  %4276 = vst [vmem:[%s4264 + $0x28] sm:$0xf] %v4275
                  %v4277 = vld [vmem:[%s4263 + $0x18] sm:$0xf]
                  %4278 = vst [vmem:[%s4264 + $0x30] sm:$0xf] %v4277
                  %v4279 = vld [vmem:[%s4263 + $0x1c] sm:$0xf]
                  %4280 = vst [vmem:[%s4264 + $0x38] sm:$0xf] %v4279
                $region112: #{capsnet_forward.3} parent=99 // loop_footer
                  %s4262 = sadd.s32 1, %s4258
                $region113: #{capsnet_forward.3} parent=99 // loop_footer_branch
                  %4257 = sbr.rel target = $region109
                $region114: #{capsnet_forward.3} parent=99 // loop_exit
                  _
              $region100: #{capsnet_forward.3} parent=84 // pred_fallthru
                _
            $region85: #{capsnet_forward.3} parent=80 // pred_fallthru
              _
            // Predicated region
            $region86: #{capsnet_forward.3} parent=80 // pred_check
              _
            $region87: #{capsnet_forward.3} parent=80 // pred_check_branch
              %4220 = sbr.rel (0) target = $region89
            $region88: #{capsnet_forward.3} parent=80 // pred_region
              loop: start=0, step=1, limit=1
              $region90: #{capsnet_forward.3} parent=88 // loop_pre_header
                _
              $region91: #{capsnet_forward.3} parent=88 // loop_header
                %s4223 = sphi 0, %s4227
                %p4224 = scmp.ge.s32.totalorder %s4223, 1
                %s4228 = sphi %s4209, %s4209
                %s4229 = sphi %s4214, %s4214
              $region92: #{capsnet_forward.3} parent=88 // loop_header_branch
                %4226 = sbr.rel (%p4224) target = $region96
              $region93: #{capsnet_forward.3} parent=88 // loop_body
                %v4230 = vld [vmem:[%s4228] sm:$0xf]
                %4231 = vst [vmem:[%s4229] sm:$0xf] %v4230
                %v4232 = vld [vmem:[%s4228 + $0x4] sm:$0xf]
                %4233 = vst [vmem:[%s4229 + $0x8] sm:$0xf] %v4232
                %v4234 = vld [vmem:[%s4228 + $0x8] sm:$0xf]
                %4235 = vst [vmem:[%s4229 + $0x10] sm:$0xf] %v4234
                %v4236 = vld [vmem:[%s4228 + $0xc] sm:$0xf]
                %4237 = vst [vmem:[%s4229 + $0x18] sm:$0xf] %v4236
                %v4238 = vld [vmem:[%s4228 + $0x10] sm:$0xf]
                %4239 = vst [vmem:[%s4229 + $0x20] sm:$0xf] %v4238
                %v4240 = vld [vmem:[%s4228 + $0x14] sm:$0xf]
                %4241 = vst [vmem:[%s4229 + $0x28] sm:$0xf] %v4240
                %v4242 = vld [vmem:[%s4228 + $0x18] sm:$0xf]
                %4243 = vst [vmem:[%s4229 + $0x30] sm:$0xf] %v4242
                %v4244 = vld [vmem:[%s4228 + $0x1c] sm:$0xf]
                %4245 = vst [vmem:[%s4229 + $0x38] sm:$0xf] %v4244
              $region94: #{capsnet_forward.3} parent=88 // loop_footer
                %s4227 = sadd.s32 1, %s4223
              $region95: #{capsnet_forward.3} parent=88 // loop_footer_branch
                %4222 = sbr.rel target = $region91
              $region96: #{capsnet_forward.3} parent=88 // loop_exit
                _
            $region89: #{capsnet_forward.3} parent=80 // pred_fallthru
              _
          $region81: #{capsnet_forward.3} parent=76 // pred_fallthru
            _
          %4281 = vnop
        $region77: #{capsnet_forward.3} parent=68 // pred_fallthru
          _
      $region69: #{capsnet_forward.3} parent=5 // pred_fallthru
        _
      %p4282 = scmp.le.s32.totalorder 2, %s9
      // Predicated region
      $region115: #{capsnet_forward.3} parent=5 // pred_check
        %p4283 = pneg %p4282
      $region116: #{capsnet_forward.3} parent=5 // pred_check_branch
        %4285 = sbr.rel (%p4283) target = $region118
      $region117: #{capsnet_forward.3} parent=5 // pred_region
        %s4286 = ssub.s32 %s9, 2
        // Predicated region
        $region119: #{capsnet_forward.3} parent=117 // pred_check
          %p4287 = pneg %p106
        $region120: #{capsnet_forward.3} parent=117 // pred_check_branch
          %4289 = sbr.rel (%p4287) target = $region122
        $region121: #{capsnet_forward.3} parent=117 // pred_region
          %s4290 = sand.u32 %s91, 1
          %s4291 = sand.u32 %s91, 1
          %s4292 = smul.addr %s4291, 32
          %s4293 = scalar_lea.vmem [#allocation3], %s4292
        $region122: #{capsnet_forward.3} parent=117 // pred_fallthru
          _
      $region118: #{capsnet_forward.3} parent=5 // pred_fallthru
        _
    $region6: #{capsnet_forward.3} parent=1 // loop_footer
      %s13 = sadd.s32 1, %s9
    $region7: #{capsnet_forward.3} parent=1 // loop_footer_branch
      %8 = sbr.rel target = $region3
    $region8: #{capsnet_forward.3} parent=1 // loop_exit
      _

</llo_original>
